<compile_context>
chip_gen: v7x
topology: tpu7x:2x2x1
jax: 0.10.0
libtpu: 0.0.40
codegen_flags: <defaults>
</compile_context>

<pallas_src>
import functools

import jax
import jax.numpy as jnp
from jax.experimental import pallas as pl
from jax.experimental.pallas import tpu as pltpu

C_IN = 1024
C_OUT = 640
K1 = 0.044715
K2 = 0.7978845608028654


def _conv1x1_gelu_chain_kernel(x_ref, w_ref, b_ref, o_ref, *, ew_dtype):
    # x_ref: (C_IN, THW) f32      w_ref: (C_OUT, C_IN) bf16  [grid-invariant]
    # b_ref: (C_OUT, 1) f32       o_ref: (C_OUT, THW) f32
    x_bf = x_ref[...].astype(jnp.bfloat16)
    v2 = jnp.dot(w_ref[...], x_bf,
                 preferred_element_type=jnp.float32) + b_ref[...]
    # Doubled-GELU chain, algebraically identical to the torch graph
    # (t2 == v2; the 2x from t1 folded into the constants):
    #   t7  = K2 * (2*v2 + 8*K1*v2^3)
    #   t10 = v2 * (tanh(t7) + 1)
    #   t14 = v2 * (tanh(K2*t10) + 1)
    v = v2.astype(ew_dtype)          # bf16 on v6e/v7x, f32 on v5e & older
    inner = K2 * (2.0 * v + (8.0 * K1) * (v * v * v))
    t10 = v * (jnp.tanh(inner) + 1.0)
    g2 = jnp.tanh(K2 * t10) + 1.0
    o_ref[...] = (g2.astype(jnp.float32) * v2).astype(o_ref.dtype)


def _device_kind():
    try:
        return jax.devices()[0].device_kind.lower()
    except Exception:  # pragma: no cover - defensive
        return ""


def _pointwise_conv_gelu(x3, w2d, b2d):
    # x3: (N, C_IN, HW) f32, w2d: (C_OUT, C_IN) bf16, b2d: (C_OUT, 1) f32
    n, k, hw = x3.shape
    assert k == C_IN and w2d.shape == (C_OUT, C_IN)

    kind = _device_kind()
    # v7x: 2 TCs sharing HBM, 64 MiB VMEM/TC, 3.2 TB/s -> tiles <= 512 suffice.
    # v5e/v6e: bigger tiles amortize ~0.35 us/step overhead (85%+ roofline).
    max_thw = 512 if "v7" in kind else 1024
    # bf16 VPU/EUP only on v6e/v7x; keep the epilogue in f32 elsewhere.
    ew_dtype = jnp.bfloat16 if ("v6" in kind or "v7" in kind) else jnp.float32

    # Pad HW to a multiple of 128 -> lane-dense, unmasked output stores.
    hw_pad = ((hw + 127) // 128) * 128
    if hw_pad != hw:
        x3 = jnp.pad(x3, ((0, 0), (0, 0), (0, hw_pad - hw)))

    thw = 128
    for cand in (1024, 512, 256, 128):
        if cand <= max_thw and hw_pad % cand == 0:
            thw = cand
            break
    # Guarantee >= 2 grid blocks so both TensorCores get work on megacore parts.
    if n * (hw_pad // thw) < 2 and thw >= 256:
        thw //= 2

    grid = (n, hw_pad // thw)

    cost = pl.CostEstimate(
        flops=2 * n * hw_pad * C_IN * C_OUT,
        transcendentals=2 * n * hw_pad * C_OUT,
        bytes_accessed=(n * C_IN * hw_pad * 4       # activations, read once
                        + C_OUT * C_IN * 2          # weight, resident, read once
                        + C_OUT * 4                 # bias
                        + n * C_OUT * hw_pad * 4),  # output
    )

    out = pl.pallas_call(
        functools.partial(_conv1x1_gelu_chain_kernel, ew_dtype=ew_dtype),
        out_shape=jax.ShapeDtypeStruct((n, C_OUT, hw_pad), jnp.float32),
        grid=grid,
        in_specs=[
            # activation tile walks (batch, HW)
            pl.BlockSpec((None, C_IN, thw), lambda b, h: (b, 0, h)),
            # full weight / bias: constant block index -> DMA'd once, stays
            # resident in VMEM across the whole grid (no per-step re-fetch)
            pl.BlockSpec((C_OUT, C_IN), lambda b, h: (0, 0)),
            pl.BlockSpec((C_OUT, 1), lambda b, h: (0, 0)),
        ],
        out_specs=pl.BlockSpec((None, C_OUT, thw), lambda b, h: (b, 0, h)),
        compiler_params=pltpu.CompilerParams(
            dimension_semantics=("parallel", "parallel"),
            vmem_limit_bytes=48 * 1024 * 1024),
        cost_estimate=cost,
    )(x3, w2d, b2d)

    if hw_pad != hw:
        out = out[..., :hw]
    return out


def prepare_params(conv_w, conv_b):
    """One-time parameter prep (outside the per-call path): bf16 weight matrix
    in (C_out, C_in) layout (pure reshape, no transpose) + (C_out, 1) bias."""
    w2d = conv_w.reshape(C_OUT, C_IN).astype(jnp.bfloat16)
    b2d = conv_b.reshape(C_OUT, 1).astype(jnp.float32)
    return w2d, b2d


def model_forward(inp, input_6, input_5, input_8, input_4, *, w2d, b2d):
    """Mirrors Model.forward(input, input_6, input_5, input_8, input_4).

    Only `input_4` feeds the returned tensor; the other args are accepted for
    signature fidelity but are dead w.r.t. the output (see header comment).
    Takes / returns NCHW; only metadata reshapes are used (no transposes).
    """
    n, c, h, w = input_4.shape
    assert c == C_IN
    x3 = input_4.reshape(n, c, h * w)
    out3 = _pointwise_conv_gelu(x3, w2d, b2d)
    return out3.reshape(n, C_OUT, h, w)


def _reference(input_4, conv_w, conv_b):
    # Faithful (unsimplified) torch graph on the live path.  Matmul operands
    # are cast to bf16 (like the kernel) with f32 accumulation so the
    # comparison isolates kernel correctness, not bf16 MXU quantization.
    n, c, h, w = input_4.shape
    x = input_4.reshape(n, c, h * w).astype(jnp.bfloat16)
    wm = conv_w.reshape(C_OUT, C_IN).astype(jnp.bfloat16)
    v2 = jnp.einsum("oc,nck->nok", wm, x,
                    preferred_element_type=jnp.float32)
    v2 = v2 + conv_b.reshape(1, C_OUT, 1)
    t1 = v2 + v2
    t2 = t1 * 0.5
    t3 = t1 * t1
    t4 = t3 * t1
    t5 = t4 * K1
    t6 = t1 + t5
    t7 = t6 * K2
    t8 = jnp.tanh(t7)
    t9 = t8 + 1.0
    t10 = t2 * t9
    t11 = t10 * K2
    t12 = jnp.tanh(t11)
    t13 = t12 + 1.0
    t14 = t13 * t2
    return t14.reshape(n, C_OUT, h, w)


if __name__ == "__main__":
    key = jax.random.PRNGKey(0)
    k_x, k_w, k_b, k5, k6, k8, ki = jax.random.split(key, 7)

    # Live input to conv (1024 in-channels required by the module).
    # H*W = 128 -> lane-dense output tiles, grid = (2, 1).
    input_4 = jax.random.normal(k_x, (2, C_IN, 8, 16), dtype=jnp.float32)
    # Dead-code inputs (accepted for signature fidelity only).
    inp = jax.random.normal(ki, (1, 2, 9, 3), dtype=jnp.float32)
    input_5 = jax.random.normal(k5, (1, 21, 32, 32), dtype=jnp.float32)
    input_6 = jax.random.normal(k6, (1, 384, 16, 16), dtype=jnp.float32)
    input_8 = jax.random.normal(k8, (1, 18, 30, 26), dtype=jnp.float32)

    # Deterministic Conv2d(1024, 640, 1) parameters.
    fan_in = C_IN
    bound = 1.0 / (fan_in ** 0.5)
    conv_w = jax.random.uniform(k_w, (C_OUT, C_IN, 1, 1),
                                minval=-bound, maxval=bound, dtype=jnp.float32)
    conv_b = jax.random.uniform(k_b, (C_OUT,),
                                minval=-bound, maxval=bound, dtype=jnp.float32)

    w2d, b2d = prepare_params(conv_w, conv_b)   # one-time prep, not per-call

    fwd = jax.jit(model_forward)
    out = fwd(inp, input_6, input_5, input_8, input_4, w2d=w2d, b2d=b2d)
    out = jax.block_until_ready(out)

    ref = _reference(input_4, conv_w, conv_b)
    assert out.shape == (2, C_OUT, 8, 16), out.shape
    assert jnp.allclose(out, ref, rtol=1e-2, atol=1e-2), float(
        jnp.max(jnp.abs(out - ref)))

    print("KERNEL_OK")
</pallas_src>

<mosaic_0001>
module attributes {stable_mosaic.version = 11 : i64} {
  func.func @_conv1x1_gelu_chain_kernel(%arg0: i32, %arg1: i32, %arg2: memref<1x1024x128xf32, #tpu.memory_space<vmem>>, %arg3: memref<640x1024xbf16, #tpu.memory_space<vmem>>, %arg4: memref<640x1xf32, #tpu.memory_space<vmem>>, %arg5: memref<1x640x128xf32, #tpu.memory_space<vmem>>) attributes {dimension_semantics = [#tpu.dimension_semantics<parallel>, #tpu.dimension_semantics<parallel>], iteration_bounds = array<i64: 2, 1>, scalar_prefetch = 0 : i64, scratch_operands = 0 : i64, tpu.core_type = #tpu.core_type<tc>, window_params = [{transform_indices = @transform_0, window_bounds = array<i64: 1, 1024, 128>}, {pipeline_mode = #tpu.pipeline_mode<synchronous>, transform_indices = @transform_1, window_bounds = array<i64: 640, 1024>}, {pipeline_mode = #tpu.pipeline_mode<synchronous>, transform_indices = @transform_2, window_bounds = array<i64: 640, 1>}, {transform_indices = @transform_3, window_bounds = array<i64: 1, 640, 128>}]} {
    %c0 = arith.constant 0 : index
    %c0_0 = arith.constant 0 : index
    %c0_1 = arith.constant 0 : index
    %0 = vector.load %arg2[%c0, %c0_0, %c0_1] : memref<1x1024x128xf32, #tpu.memory_space<vmem>>, vector<1x1024x128xf32>
    %1 = vector.shape_cast %0 : vector<1x1024x128xf32> to vector<1024x128xf32>
    %2 = arith.truncf %1 : vector<1024x128xf32> to vector<1024x128xbf16>
    %c0_2 = arith.constant 0 : index
    %c0_3 = arith.constant 0 : index
    %3 = vector.load %arg3[%c0_2, %c0_3] : memref<640x1024xbf16, #tpu.memory_space<vmem>>, vector<640x1024xbf16>
    %cst = arith.constant dense<0.000000e+00> : vector<640x128xf32>
    %4 = tpu.matmul %3, %2, %cst {dimension_numbers = #tpu.dot_dimension_numbers<[1], [0], [0], [1], [0, 0, 1, 1], [], []>} : vector<640x1024xbf16>, vector<1024x128xbf16>, vector<640x128xf32> -> vector<640x128xf32>
    %c0_4 = arith.constant 0 : index
    %c0_5 = arith.constant 0 : index
    %5 = vector.load %arg4[%c0_4, %c0_5] : memref<640x1xf32, #tpu.memory_space<vmem>>, vector<640x1xf32>
    %6 = vector.broadcast %5 : vector<640x1xf32> to vector<640x128xf32>
    %7 = arith.addf %4, %6 : vector<640x128xf32>
    %cst_6 = arith.constant 2.000000e+00 : f32
    %8 = vector.broadcast %cst_6 : f32 to vector<640x128xf32>
    %9 = arith.mulf %8, %7 : vector<640x128xf32>
    %10 = arith.mulf %7, %7 : vector<640x128xf32>
    %11 = arith.mulf %10, %7 : vector<640x128xf32>
    %cst_7 = arith.constant 3.577200e-01 : f32
    %12 = vector.broadcast %cst_7 : f32 to vector<640x128xf32>
    %13 = arith.mulf %12, %11 : vector<640x128xf32>
    %14 = arith.addf %9, %13 : vector<640x128xf32>
    %cst_8 = arith.constant 0.797884583 : f32
    %15 = vector.broadcast %cst_8 : f32 to vector<640x128xf32>
    %16 = arith.mulf %15, %14 : vector<640x128xf32>
    %17 = math.tanh %16 : vector<640x128xf32>
    %cst_9 = arith.constant 1.000000e+00 : f32
    %18 = vector.broadcast %cst_9 : f32 to vector<640x128xf32>
    %19 = arith.addf %17, %18 : vector<640x128xf32>
    %20 = arith.mulf %7, %19 : vector<640x128xf32>
    %cst_10 = arith.constant 0.797884583 : f32
    %21 = vector.broadcast %cst_10 : f32 to vector<640x128xf32>
    %22 = arith.mulf %21, %20 : vector<640x128xf32>
    %23 = math.tanh %22 : vector<640x128xf32>
    %cst_11 = arith.constant 1.000000e+00 : f32
    %24 = vector.broadcast %cst_11 : f32 to vector<640x128xf32>
    %25 = arith.addf %23, %24 : vector<640x128xf32>
    %26 = arith.mulf %25, %7 : vector<640x128xf32>
    %c0_12 = arith.constant 0 : index
    %c0_13 = arith.constant 0 : index
    %c0_14 = arith.constant 0 : index
    %27 = vector.load %arg5[%c0_12, %c0_13, %c0_14] : memref<1x640x128xf32, #tpu.memory_space<vmem>>, vector<1x640x128xf32>
    %28 = vector.shape_cast %27 : vector<1x640x128xf32> to vector<640x128xf32>
    %29 = vector.shape_cast %26 : vector<640x128xf32> to vector<1x640x128xf32>
    tpu.vector_store %arg5[%c0_12, %c0_13, %c0_14], %29 {strides = array<i32>} : memref<1x640x128xf32, #tpu.memory_space<vmem>>, vector<1x640x128xf32>,
    return
  }
  func.func @transform_0(%arg0: i32, %arg1: i32) -> (i32, i32, i32) {
    %c0_i32 = arith.constant 0 : i32
    %c0_i32_0 = arith.constant 0 : i32
    return %arg0, %c0_i32, %arg1 : i32, i32, i32
  }
  func.func @transform_1(%arg0: i32, %arg1: i32) -> (i32, i32) {
    %c0_i32 = arith.constant 0 : i32
    %c0_i32_0 = arith.constant 0 : i32
    %c0_i32_1 = arith.constant 0 : i32
    return %c0_i32, %c0_i32_0 : i32, i32
  }
  func.func @transform_2(%arg0: i32, %arg1: i32) -> (i32, i32) {
    %c0_i32 = arith.constant 0 : i32
    %c0_i32_0 = arith.constant 0 : i32
    %c0_i32_1 = arith.constant 0 : i32
    return %c0_i32, %c0_i32_0 : i32, i32
  }
  func.func @transform_3(%arg0: i32, %arg1: i32) -> (i32, i32, i32) {
    %c0_i32 = arith.constant 0 : i32
    %c0_i32_0 = arith.constant 0 : i32
    return %arg0, %c0_i32, %arg1 : i32, i32, i32
  }
}

</mosaic_0001>

<llo_original>
// kernel: model_forward.1
$region0: #{model_forward.1}
  #allocation0 [shape = 'u32[]', space=smem, size = 0x4, offset = 0x4, fixed_abs, tag = 'smem constant byte address 0x4 - core index']
  #allocation1 [shape = 'u32[144,128]{1,0:T(1,128)}', space=vmem, size = 0x12000, scoped, tag = 'internal scratch']
  %s0 = inlined_call_operand.vmem [shape: f32[2,1024,128], index: 0, kind: input, shape index: {}]
  %s1 = inlined_call_operand.vmem [shape: bf16[640,1024], index: 1, kind: input, shape index: {}]
  %s2 = inlined_call_operand.vmem [shape: f32[640,1], index: 2, kind: input, shape index: {}]
  %s3 = inlined_call_operand.vmem [shape: f32[2,640,128], index: 3, kind: output, shape index: {}]
  %s4 = sld [smem:[#allocation0]]
  $region45: #{model_forward.1} parent=0
    _
  %s6 = ssub.s32 1, %s4
  %s7 = scalar_select 0, %s6, %s4
  loop: start=0, step=1, limit=4
  $region2: #{model_forward.1} parent=0 // loop_pre_header
    _
  $region3: #{model_forward.1} parent=0 // loop_header
    %s9 = sphi 0, %s13
    %p10 = scmp.ge.s32.totalorder %s9, 4
    %s16 = sphi 0, %s28
    %s17 = sphi 0, %s24
    %s18 = sphi 0, %s16
    %s19 = sphi 0, %s17
    %s20 = sphi 0, %s18
    %s21 = sphi 0, %s19
    %s33 = sphi 0, %s35
    %s36 = sphi 0, %s33
    %s37 = sphi 0, %s36
    %s53 = sphi 0, %s37
    %s57 = sphi 0, %s57
    %s59 = sphi 0, %s57
    %s60 = sphi 0, %s59
    %s74 = sphi 0, %s60
    %s78 = sphi 0, %s78
    %s80 = sphi 0, %s78
    %s81 = sphi 0, %s80
    %s95 = sphi 0, %s81
    %s103 = sphi 0, %s105
    %s106 = sphi 0, %s103
    %s107 = sphi 0, %s106
    %s123 = sphi 0, %s107
  $region4: #{model_forward.1} parent=0 // loop_header_branch
    %12 = sbr.rel (%p10) target = $region8
  $region5: #{model_forward.1} parent=0 // loop_body
    %s14 = ssub.s32 %s9, 1
    %s15 = ssub.s32 %s9, 2
    %s22 = sadd.s32 1, %s17
    %p23 = scmp.ge.s32.totalorder %s22, 1
    %s24 = scalar_select %p23, 0, %s22
    %s25 = sadd.s32 1, %s16
    %s26 = scalar_select %p23, %s25, %s16
    %p27 = scmp.ge.s32.totalorder %s26, 2
    %s28 = scalar_select %p27, 0, %s26
    %s29 = ssub.s32 %s16, %s28
    %s30 = ssub.s32 %s17, %s24
    %s31 = sor.u32 %s29, %s30
    %p32 = scmp.eq.s32.totalorder %s31, 0
    %s34 = sadd.s32 %s33, 1
    %s35 = scalar_select %p32, %s33, %s34
    %p38 = pneg %p32
    %p39 = scmp.eq.s32.totalorder %s9, 1
    %p40 = por %p38, %p39
    %p41 = scmp.ne.s32.totalorder %s33, %s36
    %p42 = scmp.eq.s32.totalorder %s9, 0
    %p43 = por %p41, %p42
    %p44 = scmp.ne.s32.totalorder %s33, %s36
    %p45 = scmp.eq.s32.totalorder %s14, 1
    %p46 = por %p44, %p45
    %p47 = scmp.ne.s32.totalorder %s36, %s37
    %p48 = scmp.eq.s32.totalorder %s14, 0
    %p49 = por %p47, %p48
    %p50 = scmp.ne.s32.totalorder %s36, %s37
    %p51 = scmp.eq.s32.totalorder %s15, 1
    %p52 = por %p50, %p51
    %p54 = scmp.ne.s32.totalorder %s37, %s53
    %p55 = scmp.eq.s32.totalorder %s15, 0
    %p56 = por %p54, %p55
    %s58 = sadd.s32 %s57, 1
    %p61 = scmp.eq.s32.totalorder %s9, 1
    %p62 = scmp.ne.s32.totalorder %s57, %s59
    %p63 = scmp.eq.s32.totalorder %s9, 0
    %p64 = por %p62, %p63
    %p65 = scmp.ne.s32.totalorder %s57, %s59
    %p66 = scmp.eq.s32.totalorder %s14, 1
    %p67 = por %p65, %p66
    %p68 = scmp.ne.s32.totalorder %s59, %s60
    %p69 = scmp.eq.s32.totalorder %s14, 0
    %p70 = por %p68, %p69
    %p71 = scmp.ne.s32.totalorder %s59, %s60
    %p72 = scmp.eq.s32.totalorder %s15, 1
    %p73 = por %p71, %p72
    %p75 = scmp.ne.s32.totalorder %s60, %s74
    %p76 = scmp.eq.s32.totalorder %s15, 0
    %p77 = por %p75, %p76
    %s79 = sadd.s32 %s78, 1
    %p82 = scmp.eq.s32.totalorder %s9, 1
    %p83 = scmp.ne.s32.totalorder %s78, %s80
    %p84 = scmp.eq.s32.totalorder %s9, 0
    %p85 = por %p83, %p84
    %p86 = scmp.ne.s32.totalorder %s78, %s80
    %p87 = scmp.eq.s32.totalorder %s14, 1
    %p88 = por %p86, %p87
    %p89 = scmp.ne.s32.totalorder %s80, %s81
    %p90 = scmp.eq.s32.totalorder %s14, 0
    %p91 = por %p89, %p90
    %p92 = scmp.ne.s32.totalorder %s80, %s81
    %p93 = scmp.eq.s32.totalorder %s15, 1
    %p94 = por %p92, %p93
    %p96 = scmp.ne.s32.totalorder %s81, %s95
    %p97 = scmp.eq.s32.totalorder %s15, 0
    %p98 = por %p96, %p97
    %s99 = ssub.s32 %s16, %s28
    %s100 = ssub.s32 %s17, %s24
    %s101 = sor.u32 %s99, %s100
    %p102 = scmp.eq.s32.totalorder %s101, 0
    %s104 = sadd.s32 %s103, 1
    %s105 = scalar_select %p102, %s103, %s104
    %p108 = pneg %p102
    %p109 = scmp.eq.s32.totalorder %s9, 1
    %p110 = por %p108, %p109
    %p111 = scmp.ne.s32.totalorder %s103, %s106
    %p112 = scmp.eq.s32.totalorder %s9, 0
    %p113 = por %p111, %p112
    %p114 = scmp.ne.s32.totalorder %s103, %s106
    %p115 = scmp.eq.s32.totalorder %s14, 1
    %p116 = por %p114, %p115
    %p117 = scmp.ne.s32.totalorder %s106, %s107
    %p118 = scmp.eq.s32.totalorder %s14, 0
    %p119 = por %p117, %p118
    %p120 = scmp.ne.s32.totalorder %s106, %s107
    %p121 = scmp.eq.s32.totalorder %s15, 1
    %p122 = por %p120, %p121
    %p124 = scmp.ne.s32.totalorder %s107, %s123
    %p125 = scmp.eq.s32.totalorder %s15, 0
    %p126 = por %p124, %p125
    %p127 = scmp.le.s32.totalorder 1, %s9
    %p128 = scmp.lt.s32.totalorder %s9, 3
    %p129 = pnand %p127, %p128
    %p130 = pneg %p129
    // Predicated region
    $region9: #{model_forward.1} parent=5 // pred_check
      _
    $region10: #{model_forward.1} parent=5 // pred_check_branch
      %132 = sbr.rel (%p129) target = $region12
    $region11: #{model_forward.1} parent=5 // pred_region
      %s133 = ssub.s32 %s9, 1
      // Predicated region
      $region13: #{model_forward.1} parent=11 // pred_check
        %p134 = pneg %p70
      $region14: #{model_forward.1} parent=11 // pred_check_branch
        %136 = sbr.rel (%p134) target = $region16
      $region15: #{model_forward.1} parent=11 // pred_region
        _
      $region16: #{model_forward.1} parent=11 // pred_fallthru
        _
      // Predicated region
      $region17: #{model_forward.1} parent=11 // pred_check
        %p137 = pneg %p91
      $region18: #{model_forward.1} parent=11 // pred_check_branch
        %139 = sbr.rel (%p137) target = $region20
      $region19: #{model_forward.1} parent=11 // pred_region
        _
      $region20: #{model_forward.1} parent=11 // pred_fallthru
        _
    $region12: #{model_forward.1} parent=5 // pred_fallthru
      _
    %p140 = scmp.lt.s32.totalorder %s9, 2
    // Predicated region
    $region21: #{model_forward.1} parent=5 // pred_check
      %p141 = pneg %p140
    $region22: #{model_forward.1} parent=5 // pred_check_branch
      %143 = sbr.rel (%p141) target = $region24
    $region23: #{model_forward.1} parent=5 // pred_region
      // Predicated region
      $region25: #{model_forward.1} parent=23 // pred_check
        %p144 = pneg %p43
      $region26: #{model_forward.1} parent=23 // pred_check_branch
        %146 = sbr.rel (%p144) target = $region28
      $region27: #{model_forward.1} parent=23 // pred_region
        %p147 = scmp.lt.s32.totalorder %s16, 1
        %s148 = scalar_select %p147, %s16, 1
        %p149 = scmp.lt.s32.totalorder %s17, 0
        %s150 = scalar_select %p149, %s17, 0
        %s151 = smul.addr %s148, 128
        %s152 = sadd.s32 %s150, %s151
        %s153 = smul.addr %s152, 8
        %s154 = scalar_lea.vmem %s0, %s153
      $region28: #{model_forward.1} parent=23 // pred_fallthru
        _
    $region24: #{model_forward.1} parent=5 // pred_fallthru
      _
    %p155 = scmp.le.s32.totalorder 1, %s9
    %p156 = scmp.lt.s32.totalorder %s9, 3
    %p157 = pnand %p155, %p156
    %p158 = pneg %p157
    // Predicated region
    $region29: #{model_forward.1} parent=5 // pred_check
      _
    $region30: #{model_forward.1} parent=5 // pred_check_branch
      %160 = sbr.rel (%p157) target = $region32
    $region31: #{model_forward.1} parent=5 // pred_region
      %s161 = ssub.s32 %s9, 1
      %p162 = scmp.lt.s32.totalorder %s18, 1
      %s163 = scalar_select %p162, %s18, 1
      %p164 = scmp.lt.s32.totalorder %s19, 0
      %s165 = scalar_select %p164, %s19, 0
      %s166 = smul.addr %s163, 128
      %s167 = sadd.s32 %s165, %s166
      %s168 = smul.addr %s167, 8
      %s169 = scalar_lea.vmem %s0, %s168
      %p170 = pneg %p49
      %p171 = pneg %p46
      %p172 = pneg %p70
      %p173 = pneg %p67
      %p174 = pneg %p91
      %p175 = pneg %p88
      %p176 = pneg %p119
      %p177 = pneg %p116
      %p178 = scmp.lt.s32.totalorder %s18, 1
      %s179 = scalar_select %p178, %s18, 1
      %p180 = scmp.lt.s32.totalorder %s19, 0
      %s181 = scalar_select %p180, %s19, 0
      %s182 = smul.addr %s179, 80
      %s183 = sadd.s32 %s181, %s182
      %s184 = smul.addr %s183, 8
      %s185 = scalar_lea.vmem %s3, %s184
      %p186 = scmp.lt.s32.totalorder %s18, 1
      %s187 = scalar_select %p186, %s18, 1
      %p188 = scmp.lt.s32.totalorder %s19, 0
      %s189 = scalar_select %p188, %s19, 0
      %s190 = smul.addr %s187, 128
      %s191 = sadd.s32 %s189, %s190
      %s192 = smul.addr %s191, 8
      %s193 = scalar_lea.vmem %s0, %s192
      %p194 = scmp.lt.s32.totalorder %s18, 1
      %s195 = scalar_select %p194, %s18, 1
      %p196 = scmp.lt.s32.totalorder %s19, 0
      %s197 = scalar_select %p196, %s19, 0
      %s198 = smul.addr %s195, 80
      %s199 = sadd.s32 %s197, %s198
      %s200 = smul.addr %s199, 8
      %s201 = scalar_lea.vmem %s3, %s200
      %v203 = vld [vmem:[%s193] sm:$0xff]
      %v204 = vld [vmem:[%s193 + $0x8] sm:$0xff]
      %v205 = vld [vmem:[%s193 + $0x10] sm:$0xff]
      %v206 = vld [vmem:[%s193 + $0x18] sm:$0xff]
      %v207 = vld [vmem:[%s193 + $0x20] sm:$0xff]
      %v208 = vld [vmem:[%s193 + $0x28] sm:$0xff]
      %v209 = vld [vmem:[%s193 + $0x30] sm:$0xff]
      %v210 = vld [vmem:[%s193 + $0x38] sm:$0xff]
      %v211 = vld [vmem:[%s193 + $0x40] sm:$0xff]
      %v212 = vld [vmem:[%s193 + $0x48] sm:$0xff]
      %v213 = vld [vmem:[%s193 + $0x50] sm:$0xff]
      %v214 = vld [vmem:[%s193 + $0x58] sm:$0xff]
      %v215 = vld [vmem:[%s193 + $0x60] sm:$0xff]
      %v216 = vld [vmem:[%s193 + $0x68] sm:$0xff]
      %v217 = vld [vmem:[%s193 + $0x70] sm:$0xff]
      %v218 = vld [vmem:[%s193 + $0x78] sm:$0xff]
      %v219 = vld [vmem:[%s193 + $0x80] sm:$0xff]
      %v220 = vld [vmem:[%s193 + $0x88] sm:$0xff]
      %v221 = vld [vmem:[%s193 + $0x90] sm:$0xff]
      %v222 = vld [vmem:[%s193 + $0x98] sm:$0xff]
      %v223 = vld [vmem:[%s193 + $0xa0] sm:$0xff]
      %v224 = vld [vmem:[%s193 + $0xa8] sm:$0xff]
      %v225 = vld [vmem:[%s193 + $0xb0] sm:$0xff]
      %v226 = vld [vmem:[%s193 + $0xb8] sm:$0xff]
      %v227 = vld [vmem:[%s193 + $0xc0] sm:$0xff]
      %v228 = vld [vmem:[%s193 + $0xc8] sm:$0xff]
      %v229 = vld [vmem:[%s193 + $0xd0] sm:$0xff]
      %v230 = vld [vmem:[%s193 + $0xd8] sm:$0xff]
      %v231 = vld [vmem:[%s193 + $0xe0] sm:$0xff]
      %v232 = vld [vmem:[%s193 + $0xe8] sm:$0xff]
      %v233 = vld [vmem:[%s193 + $0xf0] sm:$0xff]
      %v234 = vld [vmem:[%s193 + $0xf8] sm:$0xff]
      %v235 = vld [vmem:[%s193 + $0x100] sm:$0xff]
      %v236 = vld [vmem:[%s193 + $0x108] sm:$0xff]
      %v237 = vld [vmem:[%s193 + $0x110] sm:$0xff]
      %v238 = vld [vmem:[%s193 + $0x118] sm:$0xff]
      %v239 = vld [vmem:[%s193 + $0x120] sm:$0xff]
      %v240 = vld [vmem:[%s193 + $0x128] sm:$0xff]
      %v241 = vld [vmem:[%s193 + $0x130] sm:$0xff]
      %v242 = vld [vmem:[%s193 + $0x138] sm:$0xff]
      %v243 = vld [vmem:[%s193 + $0x140] sm:$0xff]
      %v244 = vld [vmem:[%s193 + $0x148] sm:$0xff]
      %v245 = vld [vmem:[%s193 + $0x150] sm:$0xff]
      %v246 = vld [vmem:[%s193 + $0x158] sm:$0xff]
      %v247 = vld [vmem:[%s193 + $0x160] sm:$0xff]
      %v248 = vld [vmem:[%s193 + $0x168] sm:$0xff]
      %v249 = vld [vmem:[%s193 + $0x170] sm:$0xff]
      %v250 = vld [vmem:[%s193 + $0x178] sm:$0xff]
      %v251 = vld [vmem:[%s193 + $0x180] sm:$0xff]
      %v252 = vld [vmem:[%s193 + $0x188] sm:$0xff]
      %v253 = vld [vmem:[%s193 + $0x190] sm:$0xff]
      %v254 = vld [vmem:[%s193 + $0x198] sm:$0xff]
      %v255 = vld [vmem:[%s193 + $0x1a0] sm:$0xff]
      %v256 = vld [vmem:[%s193 + $0x1a8] sm:$0xff]
      %v257 = vld [vmem:[%s193 + $0x1b0] sm:$0xff]
      %v258 = vld [vmem:[%s193 + $0x1b8] sm:$0xff]
      %v259 = vld [vmem:[%s193 + $0x1c0] sm:$0xff]
      %v260 = vld [vmem:[%s193 + $0x1c8] sm:$0xff]
      %v261 = vld [vmem:[%s193 + $0x1d0] sm:$0xff]
      %v262 = vld [vmem:[%s193 + $0x1d8] sm:$0xff]
      %v263 = vld [vmem:[%s193 + $0x1e0] sm:$0xff]
      %v264 = vld [vmem:[%s193 + $0x1e8] sm:$0xff]
      %v265 = vld [vmem:[%s193 + $0x1f0] sm:$0xff]
      %v266 = vld [vmem:[%s193 + $0x1f8] sm:$0xff]
      %v267 = vld [vmem:[%s193 + $0x200] sm:$0xff]
      %v268 = vld [vmem:[%s193 + $0x208] sm:$0xff]
      %v269 = vld [vmem:[%s193 + $0x210] sm:$0xff]
      %v270 = vld [vmem:[%s193 + $0x218] sm:$0xff]
      %v271 = vld [vmem:[%s193 + $0x220] sm:$0xff]
      %v272 = vld [vmem:[%s193 + $0x228] sm:$0xff]
      %v273 = vld [vmem:[%s193 + $0x230] sm:$0xff]
      %v274 = vld [vmem:[%s193 + $0x238] sm:$0xff]
      %v275 = vld [vmem:[%s193 + $0x240] sm:$0xff]
      %v276 = vld [vmem:[%s193 + $0x248] sm:$0xff]
      %v277 = vld [vmem:[%s193 + $0x250] sm:$0xff]
      %v278 = vld [vmem:[%s193 + $0x258] sm:$0xff]
      %v279 = vld [vmem:[%s193 + $0x260] sm:$0xff]
      %v280 = vld [vmem:[%s193 + $0x268] sm:$0xff]
      %v281 = vld [vmem:[%s193 + $0x270] sm:$0xff]
      %v282 = vld [vmem:[%s193 + $0x278] sm:$0xff]
      %v283 = vld [vmem:[%s193 + $0x280] sm:$0xff]
      %v284 = vld [vmem:[%s193 + $0x288] sm:$0xff]
      %v285 = vld [vmem:[%s193 + $0x290] sm:$0xff]
      %v286 = vld [vmem:[%s193 + $0x298] sm:$0xff]
      %v287 = vld [vmem:[%s193 + $0x2a0] sm:$0xff]
      %v288 = vld [vmem:[%s193 + $0x2a8] sm:$0xff]
      %v289 = vld [vmem:[%s193 + $0x2b0] sm:$0xff]
      %v290 = vld [vmem:[%s193 + $0x2b8] sm:$0xff]
      %v291 = vld [vmem:[%s193 + $0x2c0] sm:$0xff]
      %v292 = vld [vmem:[%s193 + $0x2c8] sm:$0xff]
      %v293 = vld [vmem:[%s193 + $0x2d0] sm:$0xff]
      %v294 = vld [vmem:[%s193 + $0x2d8] sm:$0xff]
      %v295 = vld [vmem:[%s193 + $0x2e0] sm:$0xff]
      %v296 = vld [vmem:[%s193 + $0x2e8] sm:$0xff]
      %v297 = vld [vmem:[%s193 + $0x2f0] sm:$0xff]
      %v298 = vld [vmem:[%s193 + $0x2f8] sm:$0xff]
      %v299 = vld [vmem:[%s193 + $0x300] sm:$0xff]
      %v300 = vld [vmem:[%s193 + $0x308] sm:$0xff]
      %v301 = vld [vmem:[%s193 + $0x310] sm:$0xff]
      %v302 = vld [vmem:[%s193 + $0x318] sm:$0xff]
      %v303 = vld [vmem:[%s193 + $0x320] sm:$0xff]
      %v304 = vld [vmem:[%s193 + $0x328] sm:$0xff]
      %v305 = vld [vmem:[%s193 + $0x330] sm:$0xff]
      %v306 = vld [vmem:[%s193 + $0x338] sm:$0xff]
      %v307 = vld [vmem:[%s193 + $0x340] sm:$0xff]
      %v308 = vld [vmem:[%s193 + $0x348] sm:$0xff]
      %v309 = vld [vmem:[%s193 + $0x350] sm:$0xff]
      %v310 = vld [vmem:[%s193 + $0x358] sm:$0xff]
      %v311 = vld [vmem:[%s193 + $0x360] sm:$0xff]
      %v312 = vld [vmem:[%s193 + $0x368] sm:$0xff]
      %v313 = vld [vmem:[%s193 + $0x370] sm:$0xff]
      %v314 = vld [vmem:[%s193 + $0x378] sm:$0xff]
      %v315 = vld [vmem:[%s193 + $0x380] sm:$0xff]
      %v316 = vld [vmem:[%s193 + $0x388] sm:$0xff]
      %v317 = vld [vmem:[%s193 + $0x390] sm:$0xff]
      %v318 = vld [vmem:[%s193 + $0x398] sm:$0xff]
      %v319 = vld [vmem:[%s193 + $0x3a0] sm:$0xff]
      %v320 = vld [vmem:[%s193 + $0x3a8] sm:$0xff]
      %v321 = vld [vmem:[%s193 + $0x3b0] sm:$0xff]
      %v322 = vld [vmem:[%s193 + $0x3b8] sm:$0xff]
      %v323 = vld [vmem:[%s193 + $0x3c0] sm:$0xff]
      %v324 = vld [vmem:[%s193 + $0x3c8] sm:$0xff]
      %v325 = vld [vmem:[%s193 + $0x3d0] sm:$0xff]
      %v326 = vld [vmem:[%s193 + $0x3d8] sm:$0xff]
      %v327 = vld [vmem:[%s193 + $0x3e0] sm:$0xff]
      %v328 = vld [vmem:[%s193 + $0x3e8] sm:$0xff]
      %v329 = vld [vmem:[%s193 + $0x3f0] sm:$0xff]
      %v330 = vld [vmem:[%s193 + $0x3f8] sm:$0xff]
      %v331 = vpack.c.bf16 %v204, %v203
      %v332 = vpack.c.bf16 %v206, %v205
      %v333 = vpack.c.bf16 %v208, %v207
      %v334 = vpack.c.bf16 %v210, %v209
      %v335 = vpack.c.bf16 %v212, %v211
      %v336 = vpack.c.bf16 %v214, %v213
      %v337 = vpack.c.bf16 %v216, %v215
      %v338 = vpack.c.bf16 %v218, %v217
      %v339 = vpack.c.bf16 %v220, %v219
      %v340 = vpack.c.bf16 %v222, %v221
      %v341 = vpack.c.bf16 %v224, %v223
      %v342 = vpack.c.bf16 %v226, %v225
      %v343 = vpack.c.bf16 %v228, %v227
      %v344 = vpack.c.bf16 %v230, %v229
      %v345 = vpack.c.bf16 %v232, %v231
      %v346 = vpack.c.bf16 %v234, %v233
      %v347 = vpack.c.bf16 %v236, %v235
      %v348 = vpack.c.bf16 %v238, %v237
      %v349 = vpack.c.bf16 %v240, %v239
      %v350 = vpack.c.bf16 %v242, %v241
      %v351 = vpack.c.bf16 %v244, %v243
      %v352 = vpack.c.bf16 %v246, %v245
      %v353 = vpack.c.bf16 %v248, %v247
      %v354 = vpack.c.bf16 %v250, %v249
      %v355 = vpack.c.bf16 %v252, %v251
      %v356 = vpack.c.bf16 %v254, %v253
      %v357 = vpack.c.bf16 %v256, %v255
      %v358 = vpack.c.bf16 %v258, %v257
      %v359 = vpack.c.bf16 %v260, %v259
      %v360 = vpack.c.bf16 %v262, %v261
      %v361 = vpack.c.bf16 %v264, %v263
      %v362 = vpack.c.bf16 %v266, %v265
      %v363 = vpack.c.bf16 %v268, %v267
      %v364 = vpack.c.bf16 %v270, %v269
      %v365 = vpack.c.bf16 %v272, %v271
      %v366 = vpack.c.bf16 %v274, %v273
      %v367 = vpack.c.bf16 %v276, %v275
      %v368 = vpack.c.bf16 %v278, %v277
      %v369 = vpack.c.bf16 %v280, %v279
      %v370 = vpack.c.bf16 %v282, %v281
      %v371 = vpack.c.bf16 %v284, %v283
      %v372 = vpack.c.bf16 %v286, %v285
      %v373 = vpack.c.bf16 %v288, %v287
      %v374 = vpack.c.bf16 %v290, %v289
      %v375 = vpack.c.bf16 %v292, %v291
      %v376 = vpack.c.bf16 %v294, %v293
      %v377 = vpack.c.bf16 %v296, %v295
      %v378 = vpack.c.bf16 %v298, %v297
      %v379 = vpack.c.bf16 %v300, %v299
      %v380 = vpack.c.bf16 %v302, %v301
      %v381 = vpack.c.bf16 %v304, %v303
      %v382 = vpack.c.bf16 %v306, %v305
      %v383 = vpack.c.bf16 %v308, %v307
      %v384 = vpack.c.bf16 %v310, %v309
      %v385 = vpack.c.bf16 %v312, %v311
      %v386 = vpack.c.bf16 %v314, %v313
      %v387 = vpack.c.bf16 %v316, %v315
      %v388 = vpack.c.bf16 %v318, %v317
      %v389 = vpack.c.bf16 %v320, %v319
      %v390 = vpack.c.bf16 %v322, %v321
      %v391 = vpack.c.bf16 %v324, %v323
      %v392 = vpack.c.bf16 %v326, %v325
      %v393 = vpack.c.bf16 %v328, %v327
      %v394 = vpack.c.bf16 %v330, %v329
      %v395 = vld [vmem:[%s1] sm:$0xff]
      %v396 = vld [vmem:[%s1 + $0x8] sm:$0xff]
      %v397 = vld [vmem:[%s1 + $0x10] sm:$0xff]
      %v398 = vld [vmem:[%s1 + $0x18] sm:$0xff]
      %v399 = vld [vmem:[%s1 + $0x20] sm:$0xff]
      %v400 = vld [vmem:[%s1 + $0x28] sm:$0xff]
      %v401 = vld [vmem:[%s1 + $0x30] sm:$0xff]
      %v402 = vld [vmem:[%s1 + $0x38] sm:$0xff]
      %v403 = vld [vmem:[%s1 + $0x40] sm:$0xff]
      %v404 = vld [vmem:[%s1 + $0x48] sm:$0xff]
      %v405 = vld [vmem:[%s1 + $0x50] sm:$0xff]
      %v406 = vld [vmem:[%s1 + $0x58] sm:$0xff]
      %v407 = vld [vmem:[%s1 + $0x60] sm:$0xff]
      %v408 = vld [vmem:[%s1 + $0x68] sm:$0xff]
      %v409 = vld [vmem:[%s1 + $0x70] sm:$0xff]
      %v410 = vld [vmem:[%s1 + $0x78] sm:$0xff]
      %v411 = vld [vmem:[%s1 + $0x80] sm:$0xff]
      %v412 = vld [vmem:[%s1 + $0x88] sm:$0xff]
      %v413 = vld [vmem:[%s1 + $0x90] sm:$0xff]
      %v414 = vld [vmem:[%s1 + $0x98] sm:$0xff]
      %v415 = vld [vmem:[%s1 + $0xa0] sm:$0xff]
      %v416 = vld [vmem:[%s1 + $0xa8] sm:$0xff]
      %v417 = vld [vmem:[%s1 + $0xb0] sm:$0xff]
      %v418 = vld [vmem:[%s1 + $0xb8] sm:$0xff]
      %v419 = vld [vmem:[%s1 + $0xc0] sm:$0xff]
      %v420 = vld [vmem:[%s1 + $0xc8] sm:$0xff]
      %v421 = vld [vmem:[%s1 + $0xd0] sm:$0xff]
      %v422 = vld [vmem:[%s1 + $0xd8] sm:$0xff]
      %v423 = vld [vmem:[%s1 + $0xe0] sm:$0xff]
      %v424 = vld [vmem:[%s1 + $0xe8] sm:$0xff]
      %v425 = vld [vmem:[%s1 + $0xf0] sm:$0xff]
      %v426 = vld [vmem:[%s1 + $0xf8] sm:$0xff]
      %v427 = vld [vmem:[%s1 + $0x100] sm:$0xff]
      %v428 = vld [vmem:[%s1 + $0x108] sm:$0xff]
      %v429 = vld [vmem:[%s1 + $0x110] sm:$0xff]
      %v430 = vld [vmem:[%s1 + $0x118] sm:$0xff]
      %v431 = vld [vmem:[%s1 + $0x120] sm:$0xff]
      %v432 = vld [vmem:[%s1 + $0x128] sm:$0xff]
      %v433 = vld [vmem:[%s1 + $0x130] sm:$0xff]
      %v434 = vld [vmem:[%s1 + $0x138] sm:$0xff]
      %v435 = vld [vmem:[%s1 + $0x140] sm:$0xff]
      %v436 = vld [vmem:[%s1 + $0x148] sm:$0xff]
      %v437 = vld [vmem:[%s1 + $0x150] sm:$0xff]
      %v438 = vld [vmem:[%s1 + $0x158] sm:$0xff]
      %v439 = vld [vmem:[%s1 + $0x160] sm:$0xff]
      %v440 = vld [vmem:[%s1 + $0x168] sm:$0xff]
      %v441 = vld [vmem:[%s1 + $0x170] sm:$0xff]
      %v442 = vld [vmem:[%s1 + $0x178] sm:$0xff]
      %v443 = vld [vmem:[%s1 + $0x180] sm:$0xff]
      %v444 = vld [vmem:[%s1 + $0x188] sm:$0xff]
      %v445 = vld [vmem:[%s1 + $0x190] sm:$0xff]
      %v446 = vld [vmem:[%s1 + $0x198] sm:$0xff]
      %v447 = vld [vmem:[%s1 + $0x1a0] sm:$0xff]
      %v448 = vld [vmem:[%s1 + $0x1a8] sm:$0xff]
      %v449 = vld [vmem:[%s1 + $0x1b0] sm:$0xff]
      %v450 = vld [vmem:[%s1 + $0x1b8] sm:$0xff]
      %v451 = vld [vmem:[%s1 + $0x1c0] sm:$0xff]
      %v452 = vld [vmem:[%s1 + $0x1c8] sm:$0xff]
      %v453 = vld [vmem:[%s1 + $0x1d0] sm:$0xff]
      %v454 = vld [vmem:[%s1 + $0x1d8] sm:$0xff]
      %v455 = vld [vmem:[%s1 + $0x1e0] sm:$0xff]
      %v456 = vld [vmem:[%s1 + $0x1e8] sm:$0xff]
      %v457 = vld [vmem:[%s1 + $0x1f0] sm:$0xff]
      %v458 = vld [vmem:[%s1 + $0x1f8] sm:$0xff]
      %v459 = vld [vmem:[%s1 + $0x200] sm:$0xff]
      %v460 = vld [vmem:[%s1 + $0x208] sm:$0xff]
      %v461 = vld [vmem:[%s1 + $0x210] sm:$0xff]
      %v462 = vld [vmem:[%s1 + $0x218] sm:$0xff]
      %v463 = vld [vmem:[%s1 + $0x220] sm:$0xff]
      %v464 = vld [vmem:[%s1 + $0x228] sm:$0xff]
      %v465 = vld [vmem:[%s1 + $0x230] sm:$0xff]
      %v466 = vld [vmem:[%s1 + $0x238] sm:$0xff]
      %v467 = vld [vmem:[%s1 + $0x240] sm:$0xff]
      %v468 = vld [vmem:[%s1 + $0x248] sm:$0xff]
      %v469 = vld [vmem:[%s1 + $0x250] sm:$0xff]
      %v470 = vld [vmem:[%s1 + $0x258] sm:$0xff]
      %v471 = vld [vmem:[%s1 + $0x260] sm:$0xff]
      %v472 = vld [vmem:[%s1 + $0x268] sm:$0xff]
      %v473 = vld [vmem:[%s1 + $0x270] sm:$0xff]
      %v474 = vld [vmem:[%s1 + $0x278] sm:$0xff]
      %v475 = vld [vmem:[%s1 + $0x280] sm:$0xff]
      %v476 = vld [vmem:[%s1 + $0x288] sm:$0xff]
      %v477 = vld [vmem:[%s1 + $0x290] sm:$0xff]
      %v478 = vld [vmem:[%s1 + $0x298] sm:$0xff]
      %v479 = vld [vmem:[%s1 + $0x2a0] sm:$0xff]
      %v480 = vld [vmem:[%s1 + $0x2a8] sm:$0xff]
      %v481 = vld [vmem:[%s1 + $0x2b0] sm:$0xff]
      %v482 = vld [vmem:[%s1 + $0x2b8] sm:$0xff]
      %v483 = vld [vmem:[%s1 + $0x2c0] sm:$0xff]
      %v484 = vld [vmem:[%s1 + $0x2c8] sm:$0xff]
      %v485 = vld [vmem:[%s1 + $0x2d0] sm:$0xff]
      %v486 = vld [vmem:[%s1 + $0x2d8] sm:$0xff]
      %v487 = vld [vmem:[%s1 + $0x2e0] sm:$0xff]
      %v488 = vld [vmem:[%s1 + $0x2e8] sm:$0xff]
      %v489 = vld [vmem:[%s1 + $0x2f0] sm:$0xff]
      %v490 = vld [vmem:[%s1 + $0x2f8] sm:$0xff]
      %v491 = vld [vmem:[%s1 + $0x300] sm:$0xff]
      %v492 = vld [vmem:[%s1 + $0x308] sm:$0xff]
      %v493 = vld [vmem:[%s1 + $0x310] sm:$0xff]
      %v494 = vld [vmem:[%s1 + $0x318] sm:$0xff]
      %v495 = vld [vmem:[%s1 + $0x320] sm:$0xff]
      %v496 = vld [vmem:[%s1 + $0x328] sm:$0xff]
      %v497 = vld [vmem:[%s1 + $0x330] sm:$0xff]
      %v498 = vld [vmem:[%s1 + $0x338] sm:$0xff]
      %v499 = vld [vmem:[%s1 + $0x340] sm:$0xff]
      %v500 = vld [vmem:[%s1 + $0x348] sm:$0xff]
      %v501 = vld [vmem:[%s1 + $0x350] sm:$0xff]
      %v502 = vld [vmem:[%s1 + $0x358] sm:$0xff]
      %v503 = vld [vmem:[%s1 + $0x360] sm:$0xff]
      %v504 = vld [vmem:[%s1 + $0x368] sm:$0xff]
      %v505 = vld [vmem:[%s1 + $0x370] sm:$0xff]
      %v506 = vld [vmem:[%s1 + $0x378] sm:$0xff]
      %v507 = vld [vmem:[%s1 + $0x380] sm:$0xff]
      %v508 = vld [vmem:[%s1 + $0x388] sm:$0xff]
      %v509 = vld [vmem:[%s1 + $0x390] sm:$0xff]
      %v510 = vld [vmem:[%s1 + $0x398] sm:$0xff]
      %v511 = vld [vmem:[%s1 + $0x3a0] sm:$0xff]
      %v512 = vld [vmem:[%s1 + $0x3a8] sm:$0xff]
      %v513 = vld [vmem:[%s1 + $0x3b0] sm:$0xff]
      %v514 = vld [vmem:[%s1 + $0x3b8] sm:$0xff]
      %v515 = vld [vmem:[%s1 + $0x3c0] sm:$0xff]
      %v516 = vld [vmem:[%s1 + $0x3c8] sm:$0xff]
      %v517 = vld [vmem:[%s1 + $0x3d0] sm:$0xff]
      %v518 = vld [vmem:[%s1 + $0x3d8] sm:$0xff]
      %v519 = vld [vmem:[%s1 + $0x3e0] sm:$0xff]
      %v520 = vld [vmem:[%s1 + $0x3e8] sm:$0xff]
      %v521 = vld [vmem:[%s1 + $0x3f0] sm:$0xff]
      %v522 = vld [vmem:[%s1 + $0x3f8] sm:$0xff]
      %v523 = vld [vmem:[%s1 + $0x400] sm:$0xff]
      %v524 = vld [vmem:[%s1 + $0x408] sm:$0xff]
      %v525 = vld [vmem:[%s1 + $0x410] sm:$0xff]
      %v526 = vld [vmem:[%s1 + $0x418] sm:$0xff]
      %v527 = vld [vmem:[%s1 + $0x420] sm:$0xff]
      %v528 = vld [vmem:[%s1 + $0x428] sm:$0xff]
      %v529 = vld [vmem:[%s1 + $0x430] sm:$0xff]
      %v530 = vld [vmem:[%s1 + $0x438] sm:$0xff]
      %v531 = vld [vmem:[%s1 + $0x440] sm:$0xff]
      %v532 = vld [vmem:[%s1 + $0x448] sm:$0xff]
      %v533 = vld [vmem:[%s1 + $0x450] sm:$0xff]
      %v534 = vld [vmem:[%s1 + $0x458] sm:$0xff]
      %v535 = vld [vmem:[%s1 + $0x460] sm:$0xff]
      %v536 = vld [vmem:[%s1 + $0x468] sm:$0xff]
      %v537 = vld [vmem:[%s1 + $0x470] sm:$0xff]
      %v538 = vld [vmem:[%s1 + $0x478] sm:$0xff]
      %v539 = vld [vmem:[%s1 + $0x480] sm:$0xff]
      %v540 = vld [vmem:[%s1 + $0x488] sm:$0xff]
      %v541 = vld [vmem:[%s1 + $0x490] sm:$0xff]
      %v542 = vld [vmem:[%s1 + $0x498] sm:$0xff]
      %v543 = vld [vmem:[%s1 + $0x4a0] sm:$0xff]
      %v544 = vld [vmem:[%s1 + $0x4a8] sm:$0xff]
      %v545 = vld [vmem:[%s1 + $0x4b0] sm:$0xff]
      %v546 = vld [vmem:[%s1 + $0x4b8] sm:$0xff]
      %v547 = vld [vmem:[%s1 + $0x4c0] sm:$0xff]
      %v548 = vld [vmem:[%s1 + $0x4c8] sm:$0xff]
      %v549 = vld [vmem:[%s1 + $0x4d0] sm:$0xff]
      %v550 = vld [vmem:[%s1 + $0x4d8] sm:$0xff]
      %v551 = vld [vmem:[%s1 + $0x4e0] sm:$0xff]
      %v552 = vld [vmem:[%s1 + $0x4e8] sm:$0xff]
      %v553 = vld [vmem:[%s1 + $0x4f0] sm:$0xff]
      %v554 = vld [vmem:[%s1 + $0x4f8] sm:$0xff]
      %v555 = vld [vmem:[%s1 + $0x500] sm:$0xff]
      %v556 = vld [vmem:[%s1 + $0x508] sm:$0xff]
      %v557 = vld [vmem:[%s1 + $0x510] sm:$0xff]
      %v558 = vld [vmem:[%s1 + $0x518] sm:$0xff]
      %v559 = vld [vmem:[%s1 + $0x520] sm:$0xff]
      %v560 = vld [vmem:[%s1 + $0x528] sm:$0xff]
      %v561 = vld [vmem:[%s1 + $0x530] sm:$0xff]
      %v562 = vld [vmem:[%s1 + $0x538] sm:$0xff]
      %v563 = vld [vmem:[%s1 + $0x540] sm:$0xff]
      %v564 = vld [vmem:[%s1 + $0x548] sm:$0xff]
      %v565 = vld [vmem:[%s1 + $0x550] sm:$0xff]
      %v566 = vld [vmem:[%s1 + $0x558] sm:$0xff]
      %v567 = vld [vmem:[%s1 + $0x560] sm:$0xff]
      %v568 = vld [vmem:[%s1 + $0x568] sm:$0xff]
      %v569 = vld [vmem:[%s1 + $0x570] sm:$0xff]
      %v570 = vld [vmem:[%s1 + $0x578] sm:$0xff]
      %v571 = vld [vmem:[%s1 + $0x580] sm:$0xff]
      %v572 = vld [vmem:[%s1 + $0x588] sm:$0xff]
      %v573 = vld [vmem:[%s1 + $0x590] sm:$0xff]
      %v574 = vld [vmem:[%s1 + $0x598] sm:$0xff]
      %v575 = vld [vmem:[%s1 + $0x5a0] sm:$0xff]
      %v576 = vld [vmem:[%s1 + $0x5a8] sm:$0xff]
      %v577 = vld [vmem:[%s1 + $0x5b0] sm:$0xff]
      %v578 = vld [vmem:[%s1 + $0x5b8] sm:$0xff]
      %v579 = vld [vmem:[%s1 + $0x5c0] sm:$0xff]
      %v580 = vld [vmem:[%s1 + $0x5c8] sm:$0xff]
      %v581 = vld [vmem:[%s1 + $0x5d0] sm:$0xff]
      %v582 = vld [vmem:[%s1 + $0x5d8] sm:$0xff]
      %v583 = vld [vmem:[%s1 + $0x5e0] sm:$0xff]
      %v584 = vld [vmem:[%s1 + $0x5e8] sm:$0xff]
      %v585 = vld [vmem:[%s1 + $0x5f0] sm:$0xff]
      %v586 = vld [vmem:[%s1 + $0x5f8] sm:$0xff]
      %v587 = vld [vmem:[%s1 + $0x600] sm:$0xff]
      %v588 = vld [vmem:[%s1 + $0x608] sm:$0xff]
      %v589 = vld [vmem:[%s1 + $0x610] sm:$0xff]
      %v590 = vld [vmem:[%s1 + $0x618] sm:$0xff]
      %v591 = vld [vmem:[%s1 + $0x620] sm:$0xff]
      %v592 = vld [vmem:[%s1 + $0x628] sm:$0xff]
      %v593 = vld [vmem:[%s1 + $0x630] sm:$0xff]
      %v594 = vld [vmem:[%s1 + $0x638] sm:$0xff]
      %v595 = vld [vmem:[%s1 + $0x640] sm:$0xff]
      %v596 = vld [vmem:[%s1 + $0x648] sm:$0xff]
      %v597 = vld [vmem:[%s1 + $0x650] sm:$0xff]
      %v598 = vld [vmem:[%s1 + $0x658] sm:$0xff]
      %v599 = vld [vmem:[%s1 + $0x660] sm:$0xff]
      %v600 = vld [vmem:[%s1 + $0x668] sm:$0xff]
      %v601 = vld [vmem:[%s1 + $0x670] sm:$0xff]
      %v602 = vld [vmem:[%s1 + $0x678] sm:$0xff]
      %v603 = vld [vmem:[%s1 + $0x680] sm:$0xff]
      %v604 = vld [vmem:[%s1 + $0x688] sm:$0xff]
      %v605 = vld [vmem:[%s1 + $0x690] sm:$0xff]
      %v606 = vld [vmem:[%s1 + $0x698] sm:$0xff]
      %v607 = vld [vmem:[%s1 + $0x6a0] sm:$0xff]
      %v608 = vld [vmem:[%s1 + $0x6a8] sm:$0xff]
      %v609 = vld [vmem:[%s1 + $0x6b0] sm:$0xff]
      %v610 = vld [vmem:[%s1 + $0x6b8] sm:$0xff]
      %v611 = vld [vmem:[%s1 + $0x6c0] sm:$0xff]
      %v612 = vld [vmem:[%s1 + $0x6c8] sm:$0xff]
      %v613 = vld [vmem:[%s1 + $0x6d0] sm:$0xff]
      %v614 = vld [vmem:[%s1 + $0x6d8] sm:$0xff]
      %v615 = vld [vmem:[%s1 + $0x6e0] sm:$0xff]
      %v616 = vld [vmem:[%s1 + $0x6e8] sm:$0xff]
      %v617 = vld [vmem:[%s1 + $0x6f0] sm:$0xff]
      %v618 = vld [vmem:[%s1 + $0x6f8] sm:$0xff]
      %v619 = vld [vmem:[%s1 + $0x700] sm:$0xff]
      %v620 = vld [vmem:[%s1 + $0x708] sm:$0xff]
      %v621 = vld [vmem:[%s1 + $0x710] sm:$0xff]
      %v622 = vld [vmem:[%s1 + $0x718] sm:$0xff]
      %v623 = vld [vmem:[%s1 + $0x720] sm:$0xff]
      %v624 = vld [vmem:[%s1 + $0x728] sm:$0xff]
      %v625 = vld [vmem:[%s1 + $0x730] sm:$0xff]
      %v626 = vld [vmem:[%s1 + $0x738] sm:$0xff]
      %v627 = vld [vmem:[%s1 + $0x740] sm:$0xff]
      %v628 = vld [vmem:[%s1 + $0x748] sm:$0xff]
      %v629 = vld [vmem:[%s1 + $0x750] sm:$0xff]
      %v630 = vld [vmem:[%s1 + $0x758] sm:$0xff]
      %v631 = vld [vmem:[%s1 + $0x760] sm:$0xff]
      %v632 = vld [vmem:[%s1 + $0x768] sm:$0xff]
      %v633 = vld [vmem:[%s1 + $0x770] sm:$0xff]
      %v634 = vld [vmem:[%s1 + $0x778] sm:$0xff]
      %v635 = vld [vmem:[%s1 + $0x780] sm:$0xff]
      %v636 = vld [vmem:[%s1 + $0x788] sm:$0xff]
      %v637 = vld [vmem:[%s1 + $0x790] sm:$0xff]
      %v638 = vld [vmem:[%s1 + $0x798] sm:$0xff]
      %v639 = vld [vmem:[%s1 + $0x7a0] sm:$0xff]
      %v640 = vld [vmem:[%s1 + $0x7a8] sm:$0xff]
      %v641 = vld [vmem:[%s1 + $0x7b0] sm:$0xff]
      %v642 = vld [vmem:[%s1 + $0x7b8] sm:$0xff]
      %v643 = vld [vmem:[%s1 + $0x7c0] sm:$0xff]
      %v644 = vld [vmem:[%s1 + $0x7c8] sm:$0xff]
      %v645 = vld [vmem:[%s1 + $0x7d0] sm:$0xff]
      %v646 = vld [vmem:[%s1 + $0x7d8] sm:$0xff]
      %v647 = vld [vmem:[%s1 + $0x7e0] sm:$0xff]
      %v648 = vld [vmem:[%s1 + $0x7e8] sm:$0xff]
      %v649 = vld [vmem:[%s1 + $0x7f0] sm:$0xff]
      %v650 = vld [vmem:[%s1 + $0x7f8] sm:$0xff]
      %v651 = vld [vmem:[%s1 + $0x800] sm:$0xff]
      %v652 = vld [vmem:[%s1 + $0x808] sm:$0xff]
      %v653 = vld [vmem:[%s1 + $0x810] sm:$0xff]
      %v654 = vld [vmem:[%s1 + $0x818] sm:$0xff]
      %v655 = vld [vmem:[%s1 + $0x820] sm:$0xff]
      %v656 = vld [vmem:[%s1 + $0x828] sm:$0xff]
      %v657 = vld [vmem:[%s1 + $0x830] sm:$0xff]
      %v658 = vld [vmem:[%s1 + $0x838] sm:$0xff]
      %v659 = vld [vmem:[%s1 + $0x840] sm:$0xff]
      %v660 = vld [vmem:[%s1 + $0x848] sm:$0xff]
      %v661 = vld [vmem:[%s1 + $0x850] sm:$0xff]
      %v662 = vld [vmem:[%s1 + $0x858] sm:$0xff]
      %v663 = vld [vmem:[%s1 + $0x860] sm:$0xff]
      %v664 = vld [vmem:[%s1 + $0x868] sm:$0xff]
      %v665 = vld [vmem:[%s1 + $0x870] sm:$0xff]
      %v666 = vld [vmem:[%s1 + $0x878] sm:$0xff]
      %v667 = vld [vmem:[%s1 + $0x880] sm:$0xff]
      %v668 = vld [vmem:[%s1 + $0x888] sm:$0xff]
      %v669 = vld [vmem:[%s1 + $0x890] sm:$0xff]
      %v670 = vld [vmem:[%s1 + $0x898] sm:$0xff]
      %v671 = vld [vmem:[%s1 + $0x8a0] sm:$0xff]
      %v672 = vld [vmem:[%s1 + $0x8a8] sm:$0xff]
      %v673 = vld [vmem:[%s1 + $0x8b0] sm:$0xff]
      %v674 = vld [vmem:[%s1 + $0x8b8] sm:$0xff]
      %v675 = vld [vmem:[%s1 + $0x8c0] sm:$0xff]
      %v676 = vld [vmem:[%s1 + $0x8c8] sm:$0xff]
      %v677 = vld [vmem:[%s1 + $0x8d0] sm:$0xff]
      %v678 = vld [vmem:[%s1 + $0x8d8] sm:$0xff]
      %v679 = vld [vmem:[%s1 + $0x8e0] sm:$0xff]
      %v680 = vld [vmem:[%s1 + $0x8e8] sm:$0xff]
      %v681 = vld [vmem:[%s1 + $0x8f0] sm:$0xff]
      %v682 = vld [vmem:[%s1 + $0x8f8] sm:$0xff]
      %v683 = vld [vmem:[%s1 + $0x900] sm:$0xff]
      %v684 = vld [vmem:[%s1 + $0x908] sm:$0xff]
      %v685 = vld [vmem:[%s1 + $0x910] sm:$0xff]
      %v686 = vld [vmem:[%s1 + $0x918] sm:$0xff]
      %v687 = vld [vmem:[%s1 + $0x920] sm:$0xff]
      %v688 = vld [vmem:[%s1 + $0x928] sm:$0xff]
      %v689 = vld [vmem:[%s1 + $0x930] sm:$0xff]
      %v690 = vld [vmem:[%s1 + $0x938] sm:$0xff]
      %v691 = vld [vmem:[%s1 + $0x940] sm:$0xff]
      %v692 = vld [vmem:[%s1 + $0x948] sm:$0xff]
      %v693 = vld [vmem:[%s1 + $0x950] sm:$0xff]
      %v694 = vld [vmem:[%s1 + $0x958] sm:$0xff]
      %v695 = vld [vmem:[%s1 + $0x960] sm:$0xff]
      %v696 = vld [vmem:[%s1 + $0x968] sm:$0xff]
      %v697 = vld [vmem:[%s1 + $0x970] sm:$0xff]
      %v698 = vld [vmem:[%s1 + $0x978] sm:$0xff]
      %v699 = vld [vmem:[%s1 + $0x980] sm:$0xff]
      %v700 = vld [vmem:[%s1 + $0x988] sm:$0xff]
      %v701 = vld [vmem:[%s1 + $0x990] sm:$0xff]
      %v702 = vld [vmem:[%s1 + $0x998] sm:$0xff]
      %v703 = vld [vmem:[%s1 + $0x9a0] sm:$0xff]
      %v704 = vld [vmem:[%s1 + $0x9a8] sm:$0xff]
      %v705 = vld [vmem:[%s1 + $0x9b0] sm:$0xff]
      %v706 = vld [vmem:[%s1 + $0x9b8] sm:$0xff]
      %v707 = vld [vmem:[%s1 + $0x9c0] sm:$0xff]
      %v708 = vld [vmem:[%s1 + $0x9c8] sm:$0xff]
      %v709 = vld [vmem:[%s1 + $0x9d0] sm:$0xff]
      %v710 = vld [vmem:[%s1 + $0x9d8] sm:$0xff]
      %v711 = vld [vmem:[%s1 + $0x9e0] sm:$0xff]
      %v712 = vld [vmem:[%s1 + $0x9e8] sm:$0xff]
      %v713 = vld [vmem:[%s1 + $0x9f0] sm:$0xff]
      %v714 = vld [vmem:[%s1 + $0x9f8] sm:$0xff]
      %v715 = vld [vmem:[%s2] sm:$0xff]
      %v716 = vld [vmem:[%s2 + $0x8] sm:$0xff]
      %v717 = vld [vmem:[%s2 + $0x10] sm:$0xff]
      %v718 = vld [vmem:[%s2 + $0x18] sm:$0xff]
      %v719 = vld [vmem:[%s2 + $0x20] sm:$0xff]
      %v720 = vld [vmem:[%s2 + $0x28] sm:$0xff]
      %v721 = vld [vmem:[%s2 + $0x30] sm:$0xff]
      %v722 = vld [vmem:[%s2 + $0x38] sm:$0xff]
      %v723 = vld [vmem:[%s2 + $0x40] sm:$0xff]
      %v724 = vld [vmem:[%s2 + $0x48] sm:$0xff]
      %v725 = vld [vmem:[%s2 + $0x50] sm:$0xff]
      %v726 = vld [vmem:[%s2 + $0x58] sm:$0xff]
      %v727 = vld [vmem:[%s2 + $0x60] sm:$0xff]
      %v728 = vld [vmem:[%s2 + $0x68] sm:$0xff]
      %v729 = vld [vmem:[%s2 + $0x70] sm:$0xff]
      %v730 = vld [vmem:[%s2 + $0x78] sm:$0xff]
      %v731 = vld [vmem:[%s2 + $0x80] sm:$0xff]
      %v732 = vld [vmem:[%s2 + $0x88] sm:$0xff]
      %v733 = vld [vmem:[%s2 + $0x90] sm:$0xff]
      %v734 = vld [vmem:[%s2 + $0x98] sm:$0xff]
      %v735 = vld [vmem:[%s2 + $0xa0] sm:$0xff]
      %v736 = vld [vmem:[%s2 + $0xa8] sm:$0xff]
      %v737 = vld [vmem:[%s2 + $0xb0] sm:$0xff]
      %v738 = vld [vmem:[%s2 + $0xb8] sm:$0xff]
      %v739 = vld [vmem:[%s2 + $0xc0] sm:$0xff]
      %v740 = vld [vmem:[%s2 + $0xc8] sm:$0xff]
      %v741 = vld [vmem:[%s2 + $0xd0] sm:$0xff]
      %v742 = vld [vmem:[%s2 + $0xd8] sm:$0xff]
      %v743 = vld [vmem:[%s2 + $0xe0] sm:$0xff]
      %v744 = vld [vmem:[%s2 + $0xe8] sm:$0xff]
      %v745 = vld [vmem:[%s2 + $0xf0] sm:$0xff]
      %v746 = vld [vmem:[%s2 + $0xf8] sm:$0xff]
      %v747 = vld [vmem:[%s2 + $0x100] sm:$0xff]
      %v748 = vld [vmem:[%s2 + $0x108] sm:$0xff]
      %v749 = vld [vmem:[%s2 + $0x110] sm:$0xff]
      %v750 = vld [vmem:[%s2 + $0x118] sm:$0xff]
      %v751 = vld [vmem:[%s2 + $0x120] sm:$0xff]
      %v752 = vld [vmem:[%s2 + $0x128] sm:$0xff]
      %v753 = vld [vmem:[%s2 + $0x130] sm:$0xff]
      %v754 = vld [vmem:[%s2 + $0x138] sm:$0xff]
      %v755 = vld [vmem:[%s2 + $0x140] sm:$0xff]
      %v756 = vld [vmem:[%s2 + $0x148] sm:$0xff]
      %v757 = vld [vmem:[%s2 + $0x150] sm:$0xff]
      %v758 = vld [vmem:[%s2 + $0x158] sm:$0xff]
      %v759 = vld [vmem:[%s2 + $0x160] sm:$0xff]
      %v760 = vld [vmem:[%s2 + $0x168] sm:$0xff]
      %v761 = vld [vmem:[%s2 + $0x170] sm:$0xff]
      %v762 = vld [vmem:[%s2 + $0x178] sm:$0xff]
      %v763 = vld [vmem:[%s2 + $0x180] sm:$0xff]
      %v764 = vld [vmem:[%s2 + $0x188] sm:$0xff]
      %v765 = vld [vmem:[%s2 + $0x190] sm:$0xff]
      %v766 = vld [vmem:[%s2 + $0x198] sm:$0xff]
      %v767 = vld [vmem:[%s2 + $0x1a0] sm:$0xff]
      %v768 = vld [vmem:[%s2 + $0x1a8] sm:$0xff]
      %v769 = vld [vmem:[%s2 + $0x1b0] sm:$0xff]
      %v770 = vld [vmem:[%s2 + $0x1b8] sm:$0xff]
      %v771 = vld [vmem:[%s2 + $0x1c0] sm:$0xff]
      %v772 = vld [vmem:[%s2 + $0x1c8] sm:$0xff]
      %v773 = vld [vmem:[%s2 + $0x1d0] sm:$0xff]
      %v774 = vld [vmem:[%s2 + $0x1d8] sm:$0xff]
      %v775 = vld [vmem:[%s2 + $0x1e0] sm:$0xff]
      %v776 = vld [vmem:[%s2 + $0x1e8] sm:$0xff]
      %v777 = vld [vmem:[%s2 + $0x1f0] sm:$0xff]
      %v778 = vld [vmem:[%s2 + $0x1f8] sm:$0xff]
      %v779 = vld [vmem:[%s2 + $0x200] sm:$0xff]
      %v780 = vld [vmem:[%s2 + $0x208] sm:$0xff]
      %v781 = vld [vmem:[%s2 + $0x210] sm:$0xff]
      %v782 = vld [vmem:[%s2 + $0x218] sm:$0xff]
      %v783 = vld [vmem:[%s2 + $0x220] sm:$0xff]
      %v784 = vld [vmem:[%s2 + $0x228] sm:$0xff]
      %v785 = vld [vmem:[%s2 + $0x230] sm:$0xff]
      %v786 = vld [vmem:[%s2 + $0x238] sm:$0xff]
      %v787 = vld [vmem:[%s2 + $0x240] sm:$0xff]
      %v788 = vld [vmem:[%s2 + $0x248] sm:$0xff]
      %v789 = vld [vmem:[%s2 + $0x250] sm:$0xff]
      %v790 = vld [vmem:[%s2 + $0x258] sm:$0xff]
      %v791 = vld [vmem:[%s2 + $0x260] sm:$0xff]
      %v792 = vld [vmem:[%s2 + $0x268] sm:$0xff]
      %v793 = vld [vmem:[%s2 + $0x270] sm:$0xff]
      %v794 = vld [vmem:[%s2 + $0x278] sm:$0xff]
      %796 = vset.pattern.permute.xlu0 0
      %797 = vperm.xlu0 %796, %v715
      %v798 = vpop.permute.xlu0 %797
      %801 = vset.pattern.permute.xlu0 0
      %802 = vperm.xlu0 %801, %v716
      %v803 = vpop.permute.xlu0 %802
      %806 = vset.pattern.permute.xlu0 0
      %807 = vperm.xlu0 %806, %v717
      %v808 = vpop.permute.xlu0 %807
      %811 = vset.pattern.permute.xlu0 0
      %812 = vperm.xlu0 %811, %v718
      %v813 = vpop.permute.xlu0 %812
      %816 = vset.pattern.permute.xlu0 0
      %817 = vperm.xlu0 %816, %v719
      %v818 = vpop.permute.xlu0 %817
      %821 = vset.pattern.permute.xlu0 0
      %822 = vperm.xlu0 %821, %v720
      %v823 = vpop.permute.xlu0 %822
      %826 = vset.pattern.permute.xlu0 0
      %827 = vperm.xlu0 %826, %v721
      %v828 = vpop.permute.xlu0 %827
      %831 = vset.pattern.permute.xlu0 0
      %832 = vperm.xlu0 %831, %v722
      %v833 = vpop.permute.xlu0 %832
      %836 = vset.pattern.permute.xlu0 0
      %837 = vperm.xlu0 %836, %v723
      %v838 = vpop.permute.xlu0 %837
      %841 = vset.pattern.permute.xlu0 0
      %842 = vperm.xlu0 %841, %v724
      %v843 = vpop.permute.xlu0 %842
      %846 = vset.pattern.permute.xlu0 0
      %847 = vperm.xlu0 %846, %v725
      %v848 = vpop.permute.xlu0 %847
      %851 = vset.pattern.permute.xlu0 0
      %852 = vperm.xlu0 %851, %v726
      %v853 = vpop.permute.xlu0 %852
      %856 = vset.pattern.permute.xlu0 0
      %857 = vperm.xlu0 %856, %v727
      %v858 = vpop.permute.xlu0 %857
      %861 = vset.pattern.permute.xlu0 0
      %862 = vperm.xlu0 %861, %v728
      %v863 = vpop.permute.xlu0 %862
      %866 = vset.pattern.permute.xlu0 0
      %867 = vperm.xlu0 %866, %v729
      %v868 = vpop.permute.xlu0 %867
      %871 = vset.pattern.permute.xlu0 0
      %872 = vperm.xlu0 %871, %v730
      %v873 = vpop.permute.xlu0 %872
      %876 = vset.pattern.permute.xlu0 0
      %877 = vperm.xlu0 %876, %v731
      %v878 = vpop.permute.xlu0 %877
      %881 = vset.pattern.permute.xlu0 0
      %882 = vperm.xlu0 %881, %v732
      %v883 = vpop.permute.xlu0 %882
      %886 = vset.pattern.permute.xlu0 0
      %887 = vperm.xlu0 %886, %v733
      %v888 = vpop.permute.xlu0 %887
      %891 = vset.pattern.permute.xlu0 0
      %892 = vperm.xlu0 %891, %v734
      %v893 = vpop.permute.xlu0 %892
      %896 = vset.pattern.permute.xlu0 0
      %897 = vperm.xlu0 %896, %v735
      %v898 = vpop.permute.xlu0 %897
      %901 = vset.pattern.permute.xlu0 0
      %902 = vperm.xlu0 %901, %v736
      %v903 = vpop.permute.xlu0 %902
      %906 = vset.pattern.permute.xlu0 0
      %907 = vperm.xlu0 %906, %v737
      %v908 = vpop.permute.xlu0 %907
      %911 = vset.pattern.permute.xlu0 0
      %912 = vperm.xlu0 %911, %v738
      %v913 = vpop.permute.xlu0 %912
      %916 = vset.pattern.permute.xlu0 0
      %917 = vperm.xlu0 %916, %v739
      %v918 = vpop.permute.xlu0 %917
      %921 = vset.pattern.permute.xlu0 0
      %922 = vperm.xlu0 %921, %v740
      %v923 = vpop.permute.xlu0 %922
      %926 = vset.pattern.permute.xlu0 0
      %927 = vperm.xlu0 %926, %v741
      %v928 = vpop.permute.xlu0 %927
      %931 = vset.pattern.permute.xlu0 0
      %932 = vperm.xlu0 %931, %v742
      %v933 = vpop.permute.xlu0 %932
      %936 = vset.pattern.permute.xlu0 0
      %937 = vperm.xlu0 %936, %v743
      %v938 = vpop.permute.xlu0 %937
      %941 = vset.pattern.permute.xlu0 0
      %942 = vperm.xlu0 %941, %v744
      %v943 = vpop.permute.xlu0 %942
      %946 = vset.pattern.permute.xlu0 0
      %947 = vperm.xlu0 %946, %v745
      %v948 = vpop.permute.xlu0 %947
      %951 = vset.pattern.permute.xlu0 0
      %952 = vperm.xlu0 %951, %v746
      %v953 = vpop.permute.xlu0 %952
      %956 = vset.pattern.permute.xlu0 0
      %957 = vperm.xlu0 %956, %v747
      %v958 = vpop.permute.xlu0 %957
      %961 = vset.pattern.permute.xlu0 0
      %962 = vperm.xlu0 %961, %v748
      %v963 = vpop.permute.xlu0 %962
      %966 = vset.pattern.permute.xlu0 0
      %967 = vperm.xlu0 %966, %v749
      %v968 = vpop.permute.xlu0 %967
      %971 = vset.pattern.permute.xlu0 0
      %972 = vperm.xlu0 %971, %v750
      %v973 = vpop.permute.xlu0 %972
      %976 = vset.pattern.permute.xlu0 0
      %977 = vperm.xlu0 %976, %v751
      %v978 = vpop.permute.xlu0 %977
      %981 = vset.pattern.permute.xlu0 0
      %982 = vperm.xlu0 %981, %v752
      %v983 = vpop.permute.xlu0 %982
      %986 = vset.pattern.permute.xlu0 0
      %987 = vperm.xlu0 %986, %v753
      %v988 = vpop.permute.xlu0 %987
      %991 = vset.pattern.permute.xlu0 0
      %992 = vperm.xlu0 %991, %v754
      %v993 = vpop.permute.xlu0 %992
      %996 = vset.pattern.permute.xlu0 0
      %997 = vperm.xlu0 %996, %v755
      %v998 = vpop.permute.xlu0 %997
      %1001 = vset.pattern.permute.xlu0 0
      %1002 = vperm.xlu0 %1001, %v756
      %v1003 = vpop.permute.xlu0 %1002
      %1006 = vset.pattern.permute.xlu0 0
      %1007 = vperm.xlu0 %1006, %v757
      %v1008 = vpop.permute.xlu0 %1007
      %1011 = vset.pattern.permute.xlu0 0
      %1012 = vperm.xlu0 %1011, %v758
      %v1013 = vpop.permute.xlu0 %1012
      %1016 = vset.pattern.permute.xlu0 0
      %1017 = vperm.xlu0 %1016, %v759
      %v1018 = vpop.permute.xlu0 %1017
      %1021 = vset.pattern.permute.xlu0 0
      %1022 = vperm.xlu0 %1021, %v760
      %v1023 = vpop.permute.xlu0 %1022
      %1026 = vset.pattern.permute.xlu0 0
      %1027 = vperm.xlu0 %1026, %v761
      %v1028 = vpop.permute.xlu0 %1027
      %1031 = vset.pattern.permute.xlu0 0
      %1032 = vperm.xlu0 %1031, %v762
      %v1033 = vpop.permute.xlu0 %1032
      %1036 = vset.pattern.permute.xlu0 0
      %1037 = vperm.xlu0 %1036, %v763
      %v1038 = vpop.permute.xlu0 %1037
      %1041 = vset.pattern.permute.xlu0 0
      %1042 = vperm.xlu0 %1041, %v764
      %v1043 = vpop.permute.xlu0 %1042
      %1046 = vset.pattern.permute.xlu0 0
      %1047 = vperm.xlu0 %1046, %v765
      %v1048 = vpop.permute.xlu0 %1047
      %1051 = vset.pattern.permute.xlu0 0
      %1052 = vperm.xlu0 %1051, %v766
      %v1053 = vpop.permute.xlu0 %1052
      %1056 = vset.pattern.permute.xlu0 0
      %1057 = vperm.xlu0 %1056, %v767
      %v1058 = vpop.permute.xlu0 %1057
      %1061 = vset.pattern.permute.xlu0 0
      %1062 = vperm.xlu0 %1061, %v768
      %v1063 = vpop.permute.xlu0 %1062
      %1066 = vset.pattern.permute.xlu0 0
      %1067 = vperm.xlu0 %1066, %v769
      %v1068 = vpop.permute.xlu0 %1067
      %1071 = vset.pattern.permute.xlu0 0
      %1072 = vperm.xlu0 %1071, %v770
      %v1073 = vpop.permute.xlu0 %1072
      %1076 = vset.pattern.permute.xlu0 0
      %1077 = vperm.xlu0 %1076, %v771
      %v1078 = vpop.permute.xlu0 %1077
      %1081 = vset.pattern.permute.xlu0 0
      %1082 = vperm.xlu0 %1081, %v772
      %v1083 = vpop.permute.xlu0 %1082
      %1086 = vset.pattern.permute.xlu0 0
      %1087 = vperm.xlu0 %1086, %v773
      %v1088 = vpop.permute.xlu0 %1087
      %1091 = vset.pattern.permute.xlu0 0
      %1092 = vperm.xlu0 %1091, %v774
      %v1093 = vpop.permute.xlu0 %1092
      %1096 = vset.pattern.permute.xlu0 0
      %1097 = vperm.xlu0 %1096, %v775
      %v1098 = vpop.permute.xlu0 %1097
      %1101 = vset.pattern.permute.xlu0 0
      %1102 = vperm.xlu0 %1101, %v776
      %v1103 = vpop.permute.xlu0 %1102
      %1106 = vset.pattern.permute.xlu0 0
      %1107 = vperm.xlu0 %1106, %v777
      %v1108 = vpop.permute.xlu0 %1107
      %1111 = vset.pattern.permute.xlu0 0
      %1112 = vperm.xlu0 %1111, %v778
      %v1113 = vpop.permute.xlu0 %1112
      %1116 = vset.pattern.permute.xlu0 0
      %1117 = vperm.xlu0 %1116, %v779
      %v1118 = vpop.permute.xlu0 %1117
      %1121 = vset.pattern.permute.xlu0 0
      %1122 = vperm.xlu0 %1121, %v780
      %v1123 = vpop.permute.xlu0 %1122
      %1126 = vset.pattern.permute.xlu0 0
      %1127 = vperm.xlu0 %1126, %v781
      %v1128 = vpop.permute.xlu0 %1127
      %1131 = vset.pattern.permute.xlu0 0
      %1132 = vperm.xlu0 %1131, %v782
      %v1133 = vpop.permute.xlu0 %1132
      %1136 = vset.pattern.permute.xlu0 0
      %1137 = vperm.xlu0 %1136, %v783
      %v1138 = vpop.permute.xlu0 %1137
      %1141 = vset.pattern.permute.xlu0 0
      %1142 = vperm.xlu0 %1141, %v784
      %v1143 = vpop.permute.xlu0 %1142
      %1146 = vset.pattern.permute.xlu0 0
      %1147 = vperm.xlu0 %1146, %v785
      %v1148 = vpop.permute.xlu0 %1147
      %1151 = vset.pattern.permute.xlu0 0
      %1152 = vperm.xlu0 %1151, %v786
      %v1153 = vpop.permute.xlu0 %1152
      %1156 = vset.pattern.permute.xlu0 0
      %1157 = vperm.xlu0 %1156, %v787
      %v1158 = vpop.permute.xlu0 %1157
      %1161 = vset.pattern.permute.xlu0 0
      %1162 = vperm.xlu0 %1161, %v788
      %v1163 = vpop.permute.xlu0 %1162
      %1166 = vset.pattern.permute.xlu0 0
      %1167 = vperm.xlu0 %1166, %v789
      %v1168 = vpop.permute.xlu0 %1167
      %1171 = vset.pattern.permute.xlu0 0
      %1172 = vperm.xlu0 %1171, %v790
      %v1173 = vpop.permute.xlu0 %1172
      %1176 = vset.pattern.permute.xlu0 0
      %1177 = vperm.xlu0 %1176, %v791
      %v1178 = vpop.permute.xlu0 %1177
      %1181 = vset.pattern.permute.xlu0 0
      %1182 = vperm.xlu0 %1181, %v792
      %v1183 = vpop.permute.xlu0 %1182
      %1186 = vset.pattern.permute.xlu0 0
      %1187 = vperm.xlu0 %1186, %v793
      %v1188 = vpop.permute.xlu0 %1187
      %1191 = vset.pattern.permute.xlu0 0
      %1192 = vperm.xlu0 %1191, %v794
      %v1193 = vpop.permute.xlu0 %1192
      %v1515 = vunpack.c.l.b16 %v395
      %v1516 = vunpack.c.h.b16 %v395
      %v1517 = vunpack.c.l.b16 %v396
      %v1518 = vunpack.c.h.b16 %v396
      %v1519 = vunpack.c.l.b16 %v397
      %v1520 = vunpack.c.h.b16 %v397
      %v1521 = vunpack.c.l.b16 %v398
      %v1522 = vunpack.c.h.b16 %v398
      %v1523 = vunpack.c.l.b16 %v399
      %v1524 = vunpack.c.h.b16 %v399
      %v1525 = vunpack.c.l.b16 %v400
      %v1526 = vunpack.c.h.b16 %v400
      %v1527 = vunpack.c.l.b16 %v401
      %v1528 = vunpack.c.h.b16 %v401
      %v1529 = vunpack.c.l.b16 %v402
      %v1530 = vunpack.c.h.b16 %v402
      %v1531 = vunpack.c.l.b16 %v403
      %v1532 = vunpack.c.h.b16 %v403
      %v1533 = vunpack.c.l.b16 %v404
      %v1534 = vunpack.c.h.b16 %v404
      %v1535 = vunpack.c.l.b16 %v405
      %v1536 = vunpack.c.h.b16 %v405
      %v1537 = vunpack.c.l.b16 %v406
      %v1538 = vunpack.c.h.b16 %v406
      %v1539 = vunpack.c.l.b16 %v407
      %v1540 = vunpack.c.h.b16 %v407
      %v1541 = vunpack.c.l.b16 %v408
      %v1542 = vunpack.c.h.b16 %v408
      %v1543 = vunpack.c.l.b16 %v409
      %v1544 = vunpack.c.h.b16 %v409
      %v1545 = vunpack.c.l.b16 %v410
      %v1546 = vunpack.c.h.b16 %v410
      %v1547 = vunpack.c.l.b16 %v411
      %v1548 = vunpack.c.h.b16 %v411
      %v1549 = vunpack.c.l.b16 %v412
      %v1550 = vunpack.c.h.b16 %v412
      %v1551 = vunpack.c.l.b16 %v413
      %v1552 = vunpack.c.h.b16 %v413
      %v1553 = vunpack.c.l.b16 %v414
      %v1554 = vunpack.c.h.b16 %v414
      %v1555 = vunpack.c.l.b16 %v415
      %v1556 = vunpack.c.h.b16 %v415
      %v1557 = vunpack.c.l.b16 %v416
      %v1558 = vunpack.c.h.b16 %v416
      %v1559 = vunpack.c.l.b16 %v417
      %v1560 = vunpack.c.h.b16 %v417
      %v1561 = vunpack.c.l.b16 %v418
      %v1562 = vunpack.c.h.b16 %v418
      %v1563 = vunpack.c.l.b16 %v419
      %v1564 = vunpack.c.h.b16 %v419
      %v1565 = vunpack.c.l.b16 %v420
      %v1566 = vunpack.c.h.b16 %v420
      %v1567 = vunpack.c.l.b16 %v421
      %v1568 = vunpack.c.h.b16 %v421
      %v1569 = vunpack.c.l.b16 %v422
      %v1570 = vunpack.c.h.b16 %v422
      %v1571 = vunpack.c.l.b16 %v423
      %v1572 = vunpack.c.h.b16 %v423
      %v1573 = vunpack.c.l.b16 %v424
      %v1574 = vunpack.c.h.b16 %v424
      %v1575 = vunpack.c.l.b16 %v425
      %v1576 = vunpack.c.h.b16 %v425
      %v1577 = vunpack.c.l.b16 %v426
      %v1578 = vunpack.c.h.b16 %v426
      %v1579 = vunpack.c.l.b16 %v427
      %v1580 = vunpack.c.h.b16 %v427
      %v1581 = vunpack.c.l.b16 %v428
      %v1582 = vunpack.c.h.b16 %v428
      %v1583 = vunpack.c.l.b16 %v429
      %v1584 = vunpack.c.h.b16 %v429
      %v1585 = vunpack.c.l.b16 %v430
      %v1586 = vunpack.c.h.b16 %v430
      %v1587 = vunpack.c.l.b16 %v431
      %v1588 = vunpack.c.h.b16 %v431
      %v1589 = vunpack.c.l.b16 %v432
      %v1590 = vunpack.c.h.b16 %v432
      %v1591 = vunpack.c.l.b16 %v433
      %v1592 = vunpack.c.h.b16 %v433
      %v1593 = vunpack.c.l.b16 %v434
      %v1594 = vunpack.c.h.b16 %v434
      %v1595 = vunpack.c.l.b16 %v435
      %v1596 = vunpack.c.h.b16 %v435
      %v1597 = vunpack.c.l.b16 %v436
      %v1598 = vunpack.c.h.b16 %v436
      %v1599 = vunpack.c.l.b16 %v437
      %v1600 = vunpack.c.h.b16 %v437
      %v1601 = vunpack.c.l.b16 %v438
      %v1602 = vunpack.c.h.b16 %v438
      %v1603 = vunpack.c.l.b16 %v439
      %v1604 = vunpack.c.h.b16 %v439
      %v1605 = vunpack.c.l.b16 %v440
      %v1606 = vunpack.c.h.b16 %v440
      %v1607 = vunpack.c.l.b16 %v441
      %v1608 = vunpack.c.h.b16 %v441
      %v1609 = vunpack.c.l.b16 %v442
      %v1610 = vunpack.c.h.b16 %v442
      %v1611 = vunpack.c.l.b16 %v443
      %v1612 = vunpack.c.h.b16 %v443
      %v1613 = vunpack.c.l.b16 %v444
      %v1614 = vunpack.c.h.b16 %v444
      %v1615 = vunpack.c.l.b16 %v445
      %v1616 = vunpack.c.h.b16 %v445
      %v1617 = vunpack.c.l.b16 %v446
      %v1618 = vunpack.c.h.b16 %v446
      %v1619 = vunpack.c.l.b16 %v447
      %v1620 = vunpack.c.h.b16 %v447
      %v1621 = vunpack.c.l.b16 %v448
      %v1622 = vunpack.c.h.b16 %v448
      %v1623 = vunpack.c.l.b16 %v449
      %v1624 = vunpack.c.h.b16 %v449
      %v1625 = vunpack.c.l.b16 %v450
      %v1626 = vunpack.c.h.b16 %v450
      %v1627 = vunpack.c.l.b16 %v451
      %v1628 = vunpack.c.h.b16 %v451
      %v1629 = vunpack.c.l.b16 %v452
      %v1630 = vunpack.c.h.b16 %v452
      %v1631 = vunpack.c.l.b16 %v453
      %v1632 = vunpack.c.h.b16 %v453
      %v1633 = vunpack.c.l.b16 %v454
      %v1634 = vunpack.c.h.b16 %v454
      %v1635 = vunpack.c.l.b16 %v455
      %v1636 = vunpack.c.h.b16 %v455
      %v1637 = vunpack.c.l.b16 %v456
      %v1638 = vunpack.c.h.b16 %v456
      %v1639 = vunpack.c.l.b16 %v457
      %v1640 = vunpack.c.h.b16 %v457
      %v1641 = vunpack.c.l.b16 %v458
      %v1642 = vunpack.c.h.b16 %v458
      %v1643 = vunpack.c.l.b16 %v459
      %v1644 = vunpack.c.h.b16 %v459
      %v1645 = vunpack.c.l.b16 %v460
      %v1646 = vunpack.c.h.b16 %v460
      %v1647 = vunpack.c.l.b16 %v461
      %v1648 = vunpack.c.h.b16 %v461
      %v1649 = vunpack.c.l.b16 %v462
      %v1650 = vunpack.c.h.b16 %v462
      %v1651 = vunpack.c.l.b16 %v463
      %v1652 = vunpack.c.h.b16 %v463
      %v1653 = vunpack.c.l.b16 %v464
      %v1654 = vunpack.c.h.b16 %v464
      %v1655 = vunpack.c.l.b16 %v465
      %v1656 = vunpack.c.h.b16 %v465
      %v1657 = vunpack.c.l.b16 %v466
      %v1658 = vunpack.c.h.b16 %v466
      %v1659 = vunpack.c.l.b16 %v467
      %v1660 = vunpack.c.h.b16 %v467
      %v1661 = vunpack.c.l.b16 %v468
      %v1662 = vunpack.c.h.b16 %v468
      %v1663 = vunpack.c.l.b16 %v469
      %v1664 = vunpack.c.h.b16 %v469
      %v1665 = vunpack.c.l.b16 %v470
      %v1666 = vunpack.c.h.b16 %v470
      %v1667 = vunpack.c.l.b16 %v471
      %v1668 = vunpack.c.h.b16 %v471
      %v1669 = vunpack.c.l.b16 %v472
      %v1670 = vunpack.c.h.b16 %v472
      %v1671 = vunpack.c.l.b16 %v473
      %v1672 = vunpack.c.h.b16 %v473
      %v1673 = vunpack.c.l.b16 %v474
      %v1674 = vunpack.c.h.b16 %v474
      %v1675 = vunpack.c.l.b16 %v475
      %v1676 = vunpack.c.h.b16 %v475
      %v1677 = vunpack.c.l.b16 %v476
      %v1678 = vunpack.c.h.b16 %v476
      %v1679 = vunpack.c.l.b16 %v477
      %v1680 = vunpack.c.h.b16 %v477
      %v1681 = vunpack.c.l.b16 %v478
      %v1682 = vunpack.c.h.b16 %v478
      %v1683 = vunpack.c.l.b16 %v479
      %v1684 = vunpack.c.h.b16 %v479
      %v1685 = vunpack.c.l.b16 %v480
      %v1686 = vunpack.c.h.b16 %v480
      %v1687 = vunpack.c.l.b16 %v481
      %v1688 = vunpack.c.h.b16 %v481
      %v1689 = vunpack.c.l.b16 %v482
      %v1690 = vunpack.c.h.b16 %v482
      %v1691 = vunpack.c.l.b16 %v483
      %v1692 = vunpack.c.h.b16 %v483
      %v1693 = vunpack.c.l.b16 %v484
      %v1694 = vunpack.c.h.b16 %v484
      %v1695 = vunpack.c.l.b16 %v485
      %v1696 = vunpack.c.h.b16 %v485
      %v1697 = vunpack.c.l.b16 %v486
      %v1698 = vunpack.c.h.b16 %v486
      %v1699 = vunpack.c.l.b16 %v487
      %v1700 = vunpack.c.h.b16 %v487
      %v1701 = vunpack.c.l.b16 %v488
      %v1702 = vunpack.c.h.b16 %v488
      %v1703 = vunpack.c.l.b16 %v489
      %v1704 = vunpack.c.h.b16 %v489
      %v1705 = vunpack.c.l.b16 %v490
      %v1706 = vunpack.c.h.b16 %v490
      %v1707 = vunpack.c.l.b16 %v491
      %v1708 = vunpack.c.h.b16 %v491
      %v1709 = vunpack.c.l.b16 %v492
      %v1710 = vunpack.c.h.b16 %v492
      %v1711 = vunpack.c.l.b16 %v493
      %v1712 = vunpack.c.h.b16 %v493
      %v1713 = vunpack.c.l.b16 %v494
      %v1714 = vunpack.c.h.b16 %v494
      %v1715 = vunpack.c.l.b16 %v495
      %v1716 = vunpack.c.h.b16 %v495
      %v1717 = vunpack.c.l.b16 %v496
      %v1718 = vunpack.c.h.b16 %v496
      %v1719 = vunpack.c.l.b16 %v497
      %v1720 = vunpack.c.h.b16 %v497
      %v1721 = vunpack.c.l.b16 %v498
      %v1722 = vunpack.c.h.b16 %v498
      %v1723 = vunpack.c.l.b16 %v499
      %v1724 = vunpack.c.h.b16 %v499
      %v1725 = vunpack.c.l.b16 %v500
      %v1726 = vunpack.c.h.b16 %v500
      %v1727 = vunpack.c.l.b16 %v501
      %v1728 = vunpack.c.h.b16 %v501
      %v1729 = vunpack.c.l.b16 %v502
      %v1730 = vunpack.c.h.b16 %v502
      %v1731 = vunpack.c.l.b16 %v503
      %v1732 = vunpack.c.h.b16 %v503
      %v1733 = vunpack.c.l.b16 %v504
      %v1734 = vunpack.c.h.b16 %v504
      %v1735 = vunpack.c.l.b16 %v505
      %v1736 = vunpack.c.h.b16 %v505
      %v1737 = vunpack.c.l.b16 %v506
      %v1738 = vunpack.c.h.b16 %v506
      %v1739 = vunpack.c.l.b16 %v507
      %v1740 = vunpack.c.h.b16 %v507
      %v1741 = vunpack.c.l.b16 %v508
      %v1742 = vunpack.c.h.b16 %v508
      %v1743 = vunpack.c.l.b16 %v509
      %v1744 = vunpack.c.h.b16 %v509
      %v1745 = vunpack.c.l.b16 %v510
      %v1746 = vunpack.c.h.b16 %v510
      %v1747 = vunpack.c.l.b16 %v511
      %v1748 = vunpack.c.h.b16 %v511
      %v1749 = vunpack.c.l.b16 %v512
      %v1750 = vunpack.c.h.b16 %v512
      %v1751 = vunpack.c.l.b16 %v513
      %v1752 = vunpack.c.h.b16 %v513
      %v1753 = vunpack.c.l.b16 %v514
      %v1754 = vunpack.c.h.b16 %v514
      %v1755 = vunpack.c.l.b16 %v515
      %v1756 = vunpack.c.h.b16 %v515
      %v1757 = vunpack.c.l.b16 %v516
      %v1758 = vunpack.c.h.b16 %v516
      %v1759 = vunpack.c.l.b16 %v517
      %v1760 = vunpack.c.h.b16 %v517
      %v1761 = vunpack.c.l.b16 %v518
      %v1762 = vunpack.c.h.b16 %v518
      %v1763 = vunpack.c.l.b16 %v519
      %v1764 = vunpack.c.h.b16 %v519
      %v1765 = vunpack.c.l.b16 %v520
      %v1766 = vunpack.c.h.b16 %v520
      %v1767 = vunpack.c.l.b16 %v521
      %v1768 = vunpack.c.h.b16 %v521
      %v1769 = vunpack.c.l.b16 %v522
      %v1770 = vunpack.c.h.b16 %v522
      %v1771 = vunpack.c.l.b16 %v523
      %v1772 = vunpack.c.h.b16 %v523
      %v1773 = vunpack.c.l.b16 %v524
      %v1774 = vunpack.c.h.b16 %v524
      %v1775 = vunpack.c.l.b16 %v525
      %v1776 = vunpack.c.h.b16 %v525
      %v1777 = vunpack.c.l.b16 %v526
      %v1778 = vunpack.c.h.b16 %v526
      %v1779 = vunpack.c.l.b16 %v527
      %v1780 = vunpack.c.h.b16 %v527
      %v1781 = vunpack.c.l.b16 %v528
      %v1782 = vunpack.c.h.b16 %v528
      %v1783 = vunpack.c.l.b16 %v529
      %v1784 = vunpack.c.h.b16 %v529
      %v1785 = vunpack.c.l.b16 %v530
      %v1786 = vunpack.c.h.b16 %v530
      %v1787 = vunpack.c.l.b16 %v531
      %v1788 = vunpack.c.h.b16 %v531
      %v1789 = vunpack.c.l.b16 %v532
      %v1790 = vunpack.c.h.b16 %v532
      %v1791 = vunpack.c.l.b16 %v533
      %v1792 = vunpack.c.h.b16 %v533
      %v1793 = vunpack.c.l.b16 %v534
      %v1794 = vunpack.c.h.b16 %v534
      %v1795 = vunpack.c.l.b16 %v535
      %v1796 = vunpack.c.h.b16 %v535
      %v1797 = vunpack.c.l.b16 %v536
      %v1798 = vunpack.c.h.b16 %v536
      %v1799 = vunpack.c.l.b16 %v537
      %v1800 = vunpack.c.h.b16 %v537
      %v1801 = vunpack.c.l.b16 %v538
      %v1802 = vunpack.c.h.b16 %v538
      %v1803 = vunpack.c.l.b16 %v539
      %v1804 = vunpack.c.h.b16 %v539
      %v1805 = vunpack.c.l.b16 %v540
      %v1806 = vunpack.c.h.b16 %v540
      %v1807 = vunpack.c.l.b16 %v541
      %v1808 = vunpack.c.h.b16 %v541
      %v1809 = vunpack.c.l.b16 %v542
      %v1810 = vunpack.c.h.b16 %v542
      %v1811 = vunpack.c.l.b16 %v543
      %v1812 = vunpack.c.h.b16 %v543
      %v1813 = vunpack.c.l.b16 %v544
      %v1814 = vunpack.c.h.b16 %v544
      %v1815 = vunpack.c.l.b16 %v545
      %v1816 = vunpack.c.h.b16 %v545
      %v1817 = vunpack.c.l.b16 %v546
      %v1818 = vunpack.c.h.b16 %v546
      %v1819 = vunpack.c.l.b16 %v547
      %v1820 = vunpack.c.h.b16 %v547
      %v1821 = vunpack.c.l.b16 %v548
      %v1822 = vunpack.c.h.b16 %v548
      %v1823 = vunpack.c.l.b16 %v549
      %v1824 = vunpack.c.h.b16 %v549
      %v1825 = vunpack.c.l.b16 %v550
      %v1826 = vunpack.c.h.b16 %v550
      %v1827 = vunpack.c.l.b16 %v551
      %v1828 = vunpack.c.h.b16 %v551
      %v1829 = vunpack.c.l.b16 %v552
      %v1830 = vunpack.c.h.b16 %v552
      %v1831 = vunpack.c.l.b16 %v553
      %v1832 = vunpack.c.h.b16 %v553
      %v1833 = vunpack.c.l.b16 %v554
      %v1834 = vunpack.c.h.b16 %v554
      %v1835 = vunpack.c.l.b16 %v555
      %v1836 = vunpack.c.h.b16 %v555
      %v1837 = vunpack.c.l.b16 %v556
      %v1838 = vunpack.c.h.b16 %v556
      %v1839 = vunpack.c.l.b16 %v557
      %v1840 = vunpack.c.h.b16 %v557
      %v1841 = vunpack.c.l.b16 %v558
      %v1842 = vunpack.c.h.b16 %v558
      %v1843 = vunpack.c.l.b16 %v559
      %v1844 = vunpack.c.h.b16 %v559
      %v1845 = vunpack.c.l.b16 %v560
      %v1846 = vunpack.c.h.b16 %v560
      %v1847 = vunpack.c.l.b16 %v561
      %v1848 = vunpack.c.h.b16 %v561
      %v1849 = vunpack.c.l.b16 %v562
      %v1850 = vunpack.c.h.b16 %v562
      %v1851 = vunpack.c.l.b16 %v563
      %v1852 = vunpack.c.h.b16 %v563
      %v1853 = vunpack.c.l.b16 %v564
      %v1854 = vunpack.c.h.b16 %v564
      %v1855 = vunpack.c.l.b16 %v565
      %v1856 = vunpack.c.h.b16 %v565
      %v1857 = vunpack.c.l.b16 %v566
      %v1858 = vunpack.c.h.b16 %v566
      %v1859 = vunpack.c.l.b16 %v567
      %v1860 = vunpack.c.h.b16 %v567
      %v1861 = vunpack.c.l.b16 %v568
      %v1862 = vunpack.c.h.b16 %v568
      %v1863 = vunpack.c.l.b16 %v569
      %v1864 = vunpack.c.h.b16 %v569
      %v1865 = vunpack.c.l.b16 %v570
      %v1866 = vunpack.c.h.b16 %v570
      %v1867 = vunpack.c.l.b16 %v571
      %v1868 = vunpack.c.h.b16 %v571
      %v1869 = vunpack.c.l.b16 %v572
      %v1870 = vunpack.c.h.b16 %v572
      %v1871 = vunpack.c.l.b16 %v573
      %v1872 = vunpack.c.h.b16 %v573
      %v1873 = vunpack.c.l.b16 %v574
      %v1874 = vunpack.c.h.b16 %v574
      %v1875 = vunpack.c.l.b16 %v575
      %v1876 = vunpack.c.h.b16 %v575
      %v1877 = vunpack.c.l.b16 %v576
      %v1878 = vunpack.c.h.b16 %v576
      %v1879 = vunpack.c.l.b16 %v577
      %v1880 = vunpack.c.h.b16 %v577
      %v1881 = vunpack.c.l.b16 %v578
      %v1882 = vunpack.c.h.b16 %v578
      %v1883 = vunpack.c.l.b16 %v579
      %v1884 = vunpack.c.h.b16 %v579
      %v1885 = vunpack.c.l.b16 %v580
      %v1886 = vunpack.c.h.b16 %v580
      %v1887 = vunpack.c.l.b16 %v581
      %v1888 = vunpack.c.h.b16 %v581
      %v1889 = vunpack.c.l.b16 %v582
      %v1890 = vunpack.c.h.b16 %v582
      %v1891 = vunpack.c.l.b16 %v583
      %v1892 = vunpack.c.h.b16 %v583
      %v1893 = vunpack.c.l.b16 %v584
      %v1894 = vunpack.c.h.b16 %v584
      %v1895 = vunpack.c.l.b16 %v585
      %v1896 = vunpack.c.h.b16 %v585
      %v1897 = vunpack.c.l.b16 %v586
      %v1898 = vunpack.c.h.b16 %v586
      %v1899 = vunpack.c.l.b16 %v587
      %v1900 = vunpack.c.h.b16 %v587
      %v1901 = vunpack.c.l.b16 %v588
      %v1902 = vunpack.c.h.b16 %v588
      %v1903 = vunpack.c.l.b16 %v589
      %v1904 = vunpack.c.h.b16 %v589
      %v1905 = vunpack.c.l.b16 %v590
      %v1906 = vunpack.c.h.b16 %v590
      %v1907 = vunpack.c.l.b16 %v591
      %v1908 = vunpack.c.h.b16 %v591
      %v1909 = vunpack.c.l.b16 %v592
      %v1910 = vunpack.c.h.b16 %v592
      %v1911 = vunpack.c.l.b16 %v593
      %v1912 = vunpack.c.h.b16 %v593
      %v1913 = vunpack.c.l.b16 %v594
      %v1914 = vunpack.c.h.b16 %v594
      %v1915 = vunpack.c.l.b16 %v595
      %v1916 = vunpack.c.h.b16 %v595
      %v1917 = vunpack.c.l.b16 %v596
      %v1918 = vunpack.c.h.b16 %v596
      %v1919 = vunpack.c.l.b16 %v597
      %v1920 = vunpack.c.h.b16 %v597
      %v1921 = vunpack.c.l.b16 %v598
      %v1922 = vunpack.c.h.b16 %v598
      %v1923 = vunpack.c.l.b16 %v599
      %v1924 = vunpack.c.h.b16 %v599
      %v1925 = vunpack.c.l.b16 %v600
      %v1926 = vunpack.c.h.b16 %v600
      %v1927 = vunpack.c.l.b16 %v601
      %v1928 = vunpack.c.h.b16 %v601
      %v1929 = vunpack.c.l.b16 %v602
      %v1930 = vunpack.c.h.b16 %v602
      %v1931 = vunpack.c.l.b16 %v603
      %v1932 = vunpack.c.h.b16 %v603
      %v1933 = vunpack.c.l.b16 %v604
      %v1934 = vunpack.c.h.b16 %v604
      %v1935 = vunpack.c.l.b16 %v605
      %v1936 = vunpack.c.h.b16 %v605
      %v1937 = vunpack.c.l.b16 %v606
      %v1938 = vunpack.c.h.b16 %v606
      %v1939 = vunpack.c.l.b16 %v607
      %v1940 = vunpack.c.h.b16 %v607
      %v1941 = vunpack.c.l.b16 %v608
      %v1942 = vunpack.c.h.b16 %v608
      %v1943 = vunpack.c.l.b16 %v609
      %v1944 = vunpack.c.h.b16 %v609
      %v1945 = vunpack.c.l.b16 %v610
      %v1946 = vunpack.c.h.b16 %v610
      %v1947 = vunpack.c.l.b16 %v611
      %v1948 = vunpack.c.h.b16 %v611
      %v1949 = vunpack.c.l.b16 %v612
      %v1950 = vunpack.c.h.b16 %v612
      %v1951 = vunpack.c.l.b16 %v613
      %v1952 = vunpack.c.h.b16 %v613
      %v1953 = vunpack.c.l.b16 %v614
      %v1954 = vunpack.c.h.b16 %v614
      %v1955 = vunpack.c.l.b16 %v615
      %v1956 = vunpack.c.h.b16 %v615
      %v1957 = vunpack.c.l.b16 %v616
      %v1958 = vunpack.c.h.b16 %v616
      %v1959 = vunpack.c.l.b16 %v617
      %v1960 = vunpack.c.h.b16 %v617
      %v1961 = vunpack.c.l.b16 %v618
      %v1962 = vunpack.c.h.b16 %v618
      %v1963 = vunpack.c.l.b16 %v619
      %v1964 = vunpack.c.h.b16 %v619
      %v1965 = vunpack.c.l.b16 %v620
      %v1966 = vunpack.c.h.b16 %v620
      %v1967 = vunpack.c.l.b16 %v621
      %v1968 = vunpack.c.h.b16 %v621
      %v1969 = vunpack.c.l.b16 %v622
      %v1970 = vunpack.c.h.b16 %v622
      %v1971 = vunpack.c.l.b16 %v623
      %v1972 = vunpack.c.h.b16 %v623
      %v1973 = vunpack.c.l.b16 %v624
      %v1974 = vunpack.c.h.b16 %v624
      %v1975 = vunpack.c.l.b16 %v625
      %v1976 = vunpack.c.h.b16 %v625
      %v1977 = vunpack.c.l.b16 %v626
      %v1978 = vunpack.c.h.b16 %v626
      %v1979 = vunpack.c.l.b16 %v627
      %v1980 = vunpack.c.h.b16 %v627
      %v1981 = vunpack.c.l.b16 %v628
      %v1982 = vunpack.c.h.b16 %v628
      %v1983 = vunpack.c.l.b16 %v629
      %v1984 = vunpack.c.h.b16 %v629
      %v1985 = vunpack.c.l.b16 %v630
      %v1986 = vunpack.c.h.b16 %v630
      %v1987 = vunpack.c.l.b16 %v631
      %v1988 = vunpack.c.h.b16 %v631
      %v1989 = vunpack.c.l.b16 %v632
      %v1990 = vunpack.c.h.b16 %v632
      %v1991 = vunpack.c.l.b16 %v633
      %v1992 = vunpack.c.h.b16 %v633
      %v1993 = vunpack.c.l.b16 %v634
      %v1994 = vunpack.c.h.b16 %v634
      %v1995 = vunpack.c.l.b16 %v635
      %v1996 = vunpack.c.h.b16 %v635
      %v1997 = vunpack.c.l.b16 %v636
      %v1998 = vunpack.c.h.b16 %v636
      %v1999 = vunpack.c.l.b16 %v637
      %v2000 = vunpack.c.h.b16 %v637
      %v2001 = vunpack.c.l.b16 %v638
      %v2002 = vunpack.c.h.b16 %v638
      %v2003 = vunpack.c.l.b16 %v639
      %v2004 = vunpack.c.h.b16 %v639
      %v2005 = vunpack.c.l.b16 %v640
      %v2006 = vunpack.c.h.b16 %v640
      %v2007 = vunpack.c.l.b16 %v641
      %v2008 = vunpack.c.h.b16 %v641
      %v2009 = vunpack.c.l.b16 %v642
      %v2010 = vunpack.c.h.b16 %v642
      %v2011 = vunpack.c.l.b16 %v643
      %v2012 = vunpack.c.h.b16 %v643
      %v2013 = vunpack.c.l.b16 %v644
      %v2014 = vunpack.c.h.b16 %v644
      %v2015 = vunpack.c.l.b16 %v645
      %v2016 = vunpack.c.h.b16 %v645
      %v2017 = vunpack.c.l.b16 %v646
      %v2018 = vunpack.c.h.b16 %v646
      %v2019 = vunpack.c.l.b16 %v647
      %v2020 = vunpack.c.h.b16 %v647
      %v2021 = vunpack.c.l.b16 %v648
      %v2022 = vunpack.c.h.b16 %v648
      %v2023 = vunpack.c.l.b16 %v649
      %v2024 = vunpack.c.h.b16 %v649
      %v2025 = vunpack.c.l.b16 %v650
      %v2026 = vunpack.c.h.b16 %v650
      %v2027 = vunpack.c.l.b16 %v651
      %v2028 = vunpack.c.h.b16 %v651
      %v2029 = vunpack.c.l.b16 %v652
      %v2030 = vunpack.c.h.b16 %v652
      %v2031 = vunpack.c.l.b16 %v653
      %v2032 = vunpack.c.h.b16 %v653
      %v2033 = vunpack.c.l.b16 %v654
      %v2034 = vunpack.c.h.b16 %v654
      %v2035 = vunpack.c.l.b16 %v655
      %v2036 = vunpack.c.h.b16 %v655
      %v2037 = vunpack.c.l.b16 %v656
      %v2038 = vunpack.c.h.b16 %v656
      %v2039 = vunpack.c.l.b16 %v657
      %v2040 = vunpack.c.h.b16 %v657
      %v2041 = vunpack.c.l.b16 %v658
      %v2042 = vunpack.c.h.b16 %v658
      %v2043 = vunpack.c.l.b16 %v659
      %v2044 = vunpack.c.h.b16 %v659
      %v2045 = vunpack.c.l.b16 %v660
      %v2046 = vunpack.c.h.b16 %v660
      %v2047 = vunpack.c.l.b16 %v661
      %v2048 = vunpack.c.h.b16 %v661
      %v2049 = vunpack.c.l.b16 %v662
      %v2050 = vunpack.c.h.b16 %v662
      %v2051 = vunpack.c.l.b16 %v663
      %v2052 = vunpack.c.h.b16 %v663
      %v2053 = vunpack.c.l.b16 %v664
      %v2054 = vunpack.c.h.b16 %v664
      %v2055 = vunpack.c.l.b16 %v665
      %v2056 = vunpack.c.h.b16 %v665
      %v2057 = vunpack.c.l.b16 %v666
      %v2058 = vunpack.c.h.b16 %v666
      %v2059 = vunpack.c.l.b16 %v667
      %v2060 = vunpack.c.h.b16 %v667
      %v2061 = vunpack.c.l.b16 %v668
      %v2062 = vunpack.c.h.b16 %v668
      %v2063 = vunpack.c.l.b16 %v669
      %v2064 = vunpack.c.h.b16 %v669
      %v2065 = vunpack.c.l.b16 %v670
      %v2066 = vunpack.c.h.b16 %v670
      %v2067 = vunpack.c.l.b16 %v671
      %v2068 = vunpack.c.h.b16 %v671
      %v2069 = vunpack.c.l.b16 %v672
      %v2070 = vunpack.c.h.b16 %v672
      %v2071 = vunpack.c.l.b16 %v673
      %v2072 = vunpack.c.h.b16 %v673
      %v2073 = vunpack.c.l.b16 %v674
      %v2074 = vunpack.c.h.b16 %v674
      %v2075 = vunpack.c.l.b16 %v675
      %v2076 = vunpack.c.h.b16 %v675
      %v2077 = vunpack.c.l.b16 %v676
      %v2078 = vunpack.c.h.b16 %v676
      %v2079 = vunpack.c.l.b16 %v677
      %v2080 = vunpack.c.h.b16 %v677
      %v2081 = vunpack.c.l.b16 %v678
      %v2082 = vunpack.c.h.b16 %v678
      %v2083 = vunpack.c.l.b16 %v679
      %v2084 = vunpack.c.h.b16 %v679
      %v2085 = vunpack.c.l.b16 %v680
      %v2086 = vunpack.c.h.b16 %v680
      %v2087 = vunpack.c.l.b16 %v681
      %v2088 = vunpack.c.h.b16 %v681
      %v2089 = vunpack.c.l.b16 %v682
      %v2090 = vunpack.c.h.b16 %v682
      %v2091 = vunpack.c.l.b16 %v683
      %v2092 = vunpack.c.h.b16 %v683
      %v2093 = vunpack.c.l.b16 %v684
      %v2094 = vunpack.c.h.b16 %v684
      %v2095 = vunpack.c.l.b16 %v685
      %v2096 = vunpack.c.h.b16 %v685
      %v2097 = vunpack.c.l.b16 %v686
      %v2098 = vunpack.c.h.b16 %v686
      %v2099 = vunpack.c.l.b16 %v687
      %v2100 = vunpack.c.h.b16 %v687
      %v2101 = vunpack.c.l.b16 %v688
      %v2102 = vunpack.c.h.b16 %v688
      %v2103 = vunpack.c.l.b16 %v689
      %v2104 = vunpack.c.h.b16 %v689
      %v2105 = vunpack.c.l.b16 %v690
      %v2106 = vunpack.c.h.b16 %v690
      %v2107 = vunpack.c.l.b16 %v691
      %v2108 = vunpack.c.h.b16 %v691
      %v2109 = vunpack.c.l.b16 %v692
      %v2110 = vunpack.c.h.b16 %v692
      %v2111 = vunpack.c.l.b16 %v693
      %v2112 = vunpack.c.h.b16 %v693
      %v2113 = vunpack.c.l.b16 %v694
      %v2114 = vunpack.c.h.b16 %v694
      %v2115 = vunpack.c.l.b16 %v695
      %v2116 = vunpack.c.h.b16 %v695
      %v2117 = vunpack.c.l.b16 %v696
      %v2118 = vunpack.c.h.b16 %v696
      %v2119 = vunpack.c.l.b16 %v697
      %v2120 = vunpack.c.h.b16 %v697
      %v2121 = vunpack.c.l.b16 %v698
      %v2122 = vunpack.c.h.b16 %v698
      %v2123 = vunpack.c.l.b16 %v699
      %v2124 = vunpack.c.h.b16 %v699
      %v2125 = vunpack.c.l.b16 %v700
      %v2126 = vunpack.c.h.b16 %v700
      %v2127 = vunpack.c.l.b16 %v701
      %v2128 = vunpack.c.h.b16 %v701
      %v2129 = vunpack.c.l.b16 %v702
      %v2130 = vunpack.c.h.b16 %v702
      %v2131 = vunpack.c.l.b16 %v703
      %v2132 = vunpack.c.h.b16 %v703
      %v2133 = vunpack.c.l.b16 %v704
      %v2134 = vunpack.c.h.b16 %v704
      %v2135 = vunpack.c.l.b16 %v705
      %v2136 = vunpack.c.h.b16 %v705
      %v2137 = vunpack.c.l.b16 %v706
      %v2138 = vunpack.c.h.b16 %v706
      %v2139 = vunpack.c.l.b16 %v707
      %v2140 = vunpack.c.h.b16 %v707
      %v2141 = vunpack.c.l.b16 %v708
      %v2142 = vunpack.c.h.b16 %v708
      %v2143 = vunpack.c.l.b16 %v709
      %v2144 = vunpack.c.h.b16 %v709
      %v2145 = vunpack.c.l.b16 %v710
      %v2146 = vunpack.c.h.b16 %v710
      %v2147 = vunpack.c.l.b16 %v711
      %v2148 = vunpack.c.h.b16 %v711
      %v2149 = vunpack.c.l.b16 %v712
      %v2150 = vunpack.c.h.b16 %v712
      %v2151 = vunpack.c.l.b16 %v713
      %v2152 = vunpack.c.h.b16 %v713
      %v2153 = vunpack.c.l.b16 %v714
      %v2154 = vunpack.c.h.b16 %v714
      %v2155 = vpack.c.b16 %v1523, %v1515
      %v2156 = vpack.c.b16 %v1524, %v1516
      %v2157 = vpack.c.b16 %v1525, %v1517
      %v2158 = vpack.c.b16 %v1526, %v1518
      %v2159 = vpack.c.b16 %v1527, %v1519
      %v2160 = vpack.c.b16 %v1528, %v1520
      %v2161 = vpack.c.b16 %v1529, %v1521
      %v2162 = vpack.c.b16 %v1530, %v1522
      %v2163 = vpack.c.b16 %v1539, %v1531
      %v2164 = vpack.c.b16 %v1540, %v1532
      %v2165 = vpack.c.b16 %v1541, %v1533
      %v2166 = vpack.c.b16 %v1542, %v1534
      %v2167 = vpack.c.b16 %v1543, %v1535
      %v2168 = vpack.c.b16 %v1544, %v1536
      %v2169 = vpack.c.b16 %v1545, %v1537
      %v2170 = vpack.c.b16 %v1546, %v1538
      %v2171 = vpack.c.b16 %v1555, %v1547
      %v2172 = vpack.c.b16 %v1556, %v1548
      %v2173 = vpack.c.b16 %v1557, %v1549
      %v2174 = vpack.c.b16 %v1558, %v1550
      %v2175 = vpack.c.b16 %v1559, %v1551
      %v2176 = vpack.c.b16 %v1560, %v1552
      %v2177 = vpack.c.b16 %v1561, %v1553
      %v2178 = vpack.c.b16 %v1562, %v1554
      %v2179 = vpack.c.b16 %v1571, %v1563
      %v2180 = vpack.c.b16 %v1572, %v1564
      %v2181 = vpack.c.b16 %v1573, %v1565
      %v2182 = vpack.c.b16 %v1574, %v1566
      %v2183 = vpack.c.b16 %v1575, %v1567
      %v2184 = vpack.c.b16 %v1576, %v1568
      %v2185 = vpack.c.b16 %v1577, %v1569
      %v2186 = vpack.c.b16 %v1578, %v1570
      %v2187 = vpack.c.b16 %v1587, %v1579
      %v2188 = vpack.c.b16 %v1588, %v1580
      %v2189 = vpack.c.b16 %v1589, %v1581
      %v2190 = vpack.c.b16 %v1590, %v1582
      %v2191 = vpack.c.b16 %v1591, %v1583
      %v2192 = vpack.c.b16 %v1592, %v1584
      %v2193 = vpack.c.b16 %v1593, %v1585
      %v2194 = vpack.c.b16 %v1594, %v1586
      %v2195 = vpack.c.b16 %v1603, %v1595
      %v2196 = vpack.c.b16 %v1604, %v1596
      %v2197 = vpack.c.b16 %v1605, %v1597
      %v2198 = vpack.c.b16 %v1606, %v1598
      %v2199 = vpack.c.b16 %v1607, %v1599
      %v2200 = vpack.c.b16 %v1608, %v1600
      %v2201 = vpack.c.b16 %v1609, %v1601
      %v2202 = vpack.c.b16 %v1610, %v1602
      %v2203 = vpack.c.b16 %v1619, %v1611
      %v2204 = vpack.c.b16 %v1620, %v1612
      %v2205 = vpack.c.b16 %v1621, %v1613
      %v2206 = vpack.c.b16 %v1622, %v1614
      %v2207 = vpack.c.b16 %v1623, %v1615
      %v2208 = vpack.c.b16 %v1624, %v1616
      %v2209 = vpack.c.b16 %v1625, %v1617
      %v2210 = vpack.c.b16 %v1626, %v1618
      %v2211 = vpack.c.b16 %v1635, %v1627
      %v2212 = vpack.c.b16 %v1636, %v1628
      %v2213 = vpack.c.b16 %v1637, %v1629
      %v2214 = vpack.c.b16 %v1638, %v1630
      %v2215 = vpack.c.b16 %v1639, %v1631
      %v2216 = vpack.c.b16 %v1640, %v1632
      %v2217 = vpack.c.b16 %v1641, %v1633
      %v2218 = vpack.c.b16 %v1642, %v1634
      %v2219 = vpack.c.b16 %v1651, %v1643
      %v2220 = vpack.c.b16 %v1652, %v1644
      %v2221 = vpack.c.b16 %v1653, %v1645
      %v2222 = vpack.c.b16 %v1654, %v1646
      %v2223 = vpack.c.b16 %v1655, %v1647
      %v2224 = vpack.c.b16 %v1656, %v1648
      %v2225 = vpack.c.b16 %v1657, %v1649
      %v2226 = vpack.c.b16 %v1658, %v1650
      %v2227 = vpack.c.b16 %v1667, %v1659
      %v2228 = vpack.c.b16 %v1668, %v1660
      %v2229 = vpack.c.b16 %v1669, %v1661
      %v2230 = vpack.c.b16 %v1670, %v1662
      %v2231 = vpack.c.b16 %v1671, %v1663
      %v2232 = vpack.c.b16 %v1672, %v1664
      %v2233 = vpack.c.b16 %v1673, %v1665
      %v2234 = vpack.c.b16 %v1674, %v1666
      %v2235 = vpack.c.b16 %v1683, %v1675
      %v2236 = vpack.c.b16 %v1684, %v1676
      %v2237 = vpack.c.b16 %v1685, %v1677
      %v2238 = vpack.c.b16 %v1686, %v1678
      %v2239 = vpack.c.b16 %v1687, %v1679
      %v2240 = vpack.c.b16 %v1688, %v1680
      %v2241 = vpack.c.b16 %v1689, %v1681
      %v2242 = vpack.c.b16 %v1690, %v1682
      %v2243 = vpack.c.b16 %v1699, %v1691
      %v2244 = vpack.c.b16 %v1700, %v1692
      %v2245 = vpack.c.b16 %v1701, %v1693
      %v2246 = vpack.c.b16 %v1702, %v1694
      %v2247 = vpack.c.b16 %v1703, %v1695
      %v2248 = vpack.c.b16 %v1704, %v1696
      %v2249 = vpack.c.b16 %v1705, %v1697
      %v2250 = vpack.c.b16 %v1706, %v1698
      %v2251 = vpack.c.b16 %v1715, %v1707
      %v2252 = vpack.c.b16 %v1716, %v1708
      %v2253 = vpack.c.b16 %v1717, %v1709
      %v2254 = vpack.c.b16 %v1718, %v1710
      %v2255 = vpack.c.b16 %v1719, %v1711
      %v2256 = vpack.c.b16 %v1720, %v1712
      %v2257 = vpack.c.b16 %v1721, %v1713
      %v2258 = vpack.c.b16 %v1722, %v1714
      %v2259 = vpack.c.b16 %v1731, %v1723
      %v2260 = vpack.c.b16 %v1732, %v1724
      %v2261 = vpack.c.b16 %v1733, %v1725
      %v2262 = vpack.c.b16 %v1734, %v1726
      %v2263 = vpack.c.b16 %v1735, %v1727
      %v2264 = vpack.c.b16 %v1736, %v1728
      %v2265 = vpack.c.b16 %v1737, %v1729
      %v2266 = vpack.c.b16 %v1738, %v1730
      %v2267 = vpack.c.b16 %v1747, %v1739
      %v2268 = vpack.c.b16 %v1748, %v1740
      %v2269 = vpack.c.b16 %v1749, %v1741
      %v2270 = vpack.c.b16 %v1750, %v1742
      %v2271 = vpack.c.b16 %v1751, %v1743
      %v2272 = vpack.c.b16 %v1752, %v1744
      %v2273 = vpack.c.b16 %v1753, %v1745
      %v2274 = vpack.c.b16 %v1754, %v1746
      %v2275 = vpack.c.b16 %v1763, %v1755
      %v2276 = vpack.c.b16 %v1764, %v1756
      %v2277 = vpack.c.b16 %v1765, %v1757
      %v2278 = vpack.c.b16 %v1766, %v1758
      %v2279 = vpack.c.b16 %v1767, %v1759
      %v2280 = vpack.c.b16 %v1768, %v1760
      %v2281 = vpack.c.b16 %v1769, %v1761
      %v2282 = vpack.c.b16 %v1770, %v1762
      %v2283 = vpack.c.b16 %v1779, %v1771
      %v2284 = vpack.c.b16 %v1780, %v1772
      %v2285 = vpack.c.b16 %v1781, %v1773
      %v2286 = vpack.c.b16 %v1782, %v1774
      %v2287 = vpack.c.b16 %v1783, %v1775
      %v2288 = vpack.c.b16 %v1784, %v1776
      %v2289 = vpack.c.b16 %v1785, %v1777
      %v2290 = vpack.c.b16 %v1786, %v1778
      %v2291 = vpack.c.b16 %v1795, %v1787
      %v2292 = vpack.c.b16 %v1796, %v1788
      %v2293 = vpack.c.b16 %v1797, %v1789
      %v2294 = vpack.c.b16 %v1798, %v1790
      %v2295 = vpack.c.b16 %v1799, %v1791
      %v2296 = vpack.c.b16 %v1800, %v1792
      %v2297 = vpack.c.b16 %v1801, %v1793
      %v2298 = vpack.c.b16 %v1802, %v1794
      %v2299 = vpack.c.b16 %v1811, %v1803
      %v2300 = vpack.c.b16 %v1812, %v1804
      %v2301 = vpack.c.b16 %v1813, %v1805
      %v2302 = vpack.c.b16 %v1814, %v1806
      %v2303 = vpack.c.b16 %v1815, %v1807
      %v2304 = vpack.c.b16 %v1816, %v1808
      %v2305 = vpack.c.b16 %v1817, %v1809
      %v2306 = vpack.c.b16 %v1818, %v1810
      %v2307 = vpack.c.b16 %v1827, %v1819
      %v2308 = vpack.c.b16 %v1828, %v1820
      %v2309 = vpack.c.b16 %v1829, %v1821
      %v2310 = vpack.c.b16 %v1830, %v1822
      %v2311 = vpack.c.b16 %v1831, %v1823
      %v2312 = vpack.c.b16 %v1832, %v1824
      %v2313 = vpack.c.b16 %v1833, %v1825
      %v2314 = vpack.c.b16 %v1834, %v1826
      %v2315 = vpack.c.b16 %v1843, %v1835
      %v2316 = vpack.c.b16 %v1844, %v1836
      %v2317 = vpack.c.b16 %v1845, %v1837
      %v2318 = vpack.c.b16 %v1846, %v1838
      %v2319 = vpack.c.b16 %v1847, %v1839
      %v2320 = vpack.c.b16 %v1848, %v1840
      %v2321 = vpack.c.b16 %v1849, %v1841
      %v2322 = vpack.c.b16 %v1850, %v1842
      %v2323 = vpack.c.b16 %v1859, %v1851
      %v2324 = vpack.c.b16 %v1860, %v1852
      %v2325 = vpack.c.b16 %v1861, %v1853
      %v2326 = vpack.c.b16 %v1862, %v1854
      %v2327 = vpack.c.b16 %v1863, %v1855
      %v2328 = vpack.c.b16 %v1864, %v1856
      %v2329 = vpack.c.b16 %v1865, %v1857
      %v2330 = vpack.c.b16 %v1866, %v1858
      %v2331 = vpack.c.b16 %v1875, %v1867
      %v2332 = vpack.c.b16 %v1876, %v1868
      %v2333 = vpack.c.b16 %v1877, %v1869
      %v2334 = vpack.c.b16 %v1878, %v1870
      %v2335 = vpack.c.b16 %v1879, %v1871
      %v2336 = vpack.c.b16 %v1880, %v1872
      %v2337 = vpack.c.b16 %v1881, %v1873
      %v2338 = vpack.c.b16 %v1882, %v1874
      %v2339 = vpack.c.b16 %v1891, %v1883
      %v2340 = vpack.c.b16 %v1892, %v1884
      %v2341 = vpack.c.b16 %v1893, %v1885
      %v2342 = vpack.c.b16 %v1894, %v1886
      %v2343 = vpack.c.b16 %v1895, %v1887
      %v2344 = vpack.c.b16 %v1896, %v1888
      %v2345 = vpack.c.b16 %v1897, %v1889
      %v2346 = vpack.c.b16 %v1898, %v1890
      %v2347 = vpack.c.b16 %v1907, %v1899
      %v2348 = vpack.c.b16 %v1908, %v1900
      %v2349 = vpack.c.b16 %v1909, %v1901
      %v2350 = vpack.c.b16 %v1910, %v1902
      %v2351 = vpack.c.b16 %v1911, %v1903
      %v2352 = vpack.c.b16 %v1912, %v1904
      %v2353 = vpack.c.b16 %v1913, %v1905
      %v2354 = vpack.c.b16 %v1914, %v1906
      %v2355 = vpack.c.b16 %v1923, %v1915
      %v2356 = vpack.c.b16 %v1924, %v1916
      %v2357 = vpack.c.b16 %v1925, %v1917
      %v2358 = vpack.c.b16 %v1926, %v1918
      %v2359 = vpack.c.b16 %v1927, %v1919
      %v2360 = vpack.c.b16 %v1928, %v1920
      %v2361 = vpack.c.b16 %v1929, %v1921
      %v2362 = vpack.c.b16 %v1930, %v1922
      %v2363 = vpack.c.b16 %v1939, %v1931
      %v2364 = vpack.c.b16 %v1940, %v1932
      %v2365 = vpack.c.b16 %v1941, %v1933
      %v2366 = vpack.c.b16 %v1942, %v1934
      %v2367 = vpack.c.b16 %v1943, %v1935
      %v2368 = vpack.c.b16 %v1944, %v1936
      %v2369 = vpack.c.b16 %v1945, %v1937
      %v2370 = vpack.c.b16 %v1946, %v1938
      %v2371 = vpack.c.b16 %v1955, %v1947
      %v2372 = vpack.c.b16 %v1956, %v1948
      %v2373 = vpack.c.b16 %v1957, %v1949
      %v2374 = vpack.c.b16 %v1958, %v1950
      %v2375 = vpack.c.b16 %v1959, %v1951
      %v2376 = vpack.c.b16 %v1960, %v1952
      %v2377 = vpack.c.b16 %v1961, %v1953
      %v2378 = vpack.c.b16 %v1962, %v1954
      %v2379 = vpack.c.b16 %v1971, %v1963
      %v2380 = vpack.c.b16 %v1972, %v1964
      %v2381 = vpack.c.b16 %v1973, %v1965
      %v2382 = vpack.c.b16 %v1974, %v1966
      %v2383 = vpack.c.b16 %v1975, %v1967
      %v2384 = vpack.c.b16 %v1976, %v1968
      %v2385 = vpack.c.b16 %v1977, %v1969
      %v2386 = vpack.c.b16 %v1978, %v1970
      %v2387 = vpack.c.b16 %v1987, %v1979
      %v2388 = vpack.c.b16 %v1988, %v1980
      %v2389 = vpack.c.b16 %v1989, %v1981
      %v2390 = vpack.c.b16 %v1990, %v1982
      %v2391 = vpack.c.b16 %v1991, %v1983
      %v2392 = vpack.c.b16 %v1992, %v1984
      %v2393 = vpack.c.b16 %v1993, %v1985
      %v2394 = vpack.c.b16 %v1994, %v1986
      %v2395 = vpack.c.b16 %v2003, %v1995
      %v2396 = vpack.c.b16 %v2004, %v1996
      %v2397 = vpack.c.b16 %v2005, %v1997
      %v2398 = vpack.c.b16 %v2006, %v1998
      %v2399 = vpack.c.b16 %v2007, %v1999
      %v2400 = vpack.c.b16 %v2008, %v2000
      %v2401 = vpack.c.b16 %v2009, %v2001
      %v2402 = vpack.c.b16 %v2010, %v2002
      %v2403 = vpack.c.b16 %v2019, %v2011
      %v2404 = vpack.c.b16 %v2020, %v2012
      %v2405 = vpack.c.b16 %v2021, %v2013
      %v2406 = vpack.c.b16 %v2022, %v2014
      %v2407 = vpack.c.b16 %v2023, %v2015
      %v2408 = vpack.c.b16 %v2024, %v2016
      %v2409 = vpack.c.b16 %v2025, %v2017
      %v2410 = vpack.c.b16 %v2026, %v2018
      %v2411 = vpack.c.b16 %v2035, %v2027
      %v2412 = vpack.c.b16 %v2036, %v2028
      %v2413 = vpack.c.b16 %v2037, %v2029
      %v2414 = vpack.c.b16 %v2038, %v2030
      %v2415 = vpack.c.b16 %v2039, %v2031
      %v2416 = vpack.c.b16 %v2040, %v2032
      %v2417 = vpack.c.b16 %v2041, %v2033
      %v2418 = vpack.c.b16 %v2042, %v2034
      %v2419 = vpack.c.b16 %v2051, %v2043
      %v2420 = vpack.c.b16 %v2052, %v2044
      %v2421 = vpack.c.b16 %v2053, %v2045
      %v2422 = vpack.c.b16 %v2054, %v2046
      %v2423 = vpack.c.b16 %v2055, %v2047
      %v2424 = vpack.c.b16 %v2056, %v2048
      %v2425 = vpack.c.b16 %v2057, %v2049
      %v2426 = vpack.c.b16 %v2058, %v2050
      %v2427 = vpack.c.b16 %v2067, %v2059
      %v2428 = vpack.c.b16 %v2068, %v2060
      %v2429 = vpack.c.b16 %v2069, %v2061
      %v2430 = vpack.c.b16 %v2070, %v2062
      %v2431 = vpack.c.b16 %v2071, %v2063
      %v2432 = vpack.c.b16 %v2072, %v2064
      %v2433 = vpack.c.b16 %v2073, %v2065
      %v2434 = vpack.c.b16 %v2074, %v2066
      %v2435 = vpack.c.b16 %v2083, %v2075
      %v2436 = vpack.c.b16 %v2084, %v2076
      %v2437 = vpack.c.b16 %v2085, %v2077
      %v2438 = vpack.c.b16 %v2086, %v2078
      %v2439 = vpack.c.b16 %v2087, %v2079
      %v2440 = vpack.c.b16 %v2088, %v2080
      %v2441 = vpack.c.b16 %v2089, %v2081
      %v2442 = vpack.c.b16 %v2090, %v2082
      %v2443 = vpack.c.b16 %v2099, %v2091
      %v2444 = vpack.c.b16 %v2100, %v2092
      %v2445 = vpack.c.b16 %v2101, %v2093
      %v2446 = vpack.c.b16 %v2102, %v2094
      %v2447 = vpack.c.b16 %v2103, %v2095
      %v2448 = vpack.c.b16 %v2104, %v2096
      %v2449 = vpack.c.b16 %v2105, %v2097
      %v2450 = vpack.c.b16 %v2106, %v2098
      %v2451 = vpack.c.b16 %v2115, %v2107
      %v2452 = vpack.c.b16 %v2116, %v2108
      %v2453 = vpack.c.b16 %v2117, %v2109
      %v2454 = vpack.c.b16 %v2118, %v2110
      %v2455 = vpack.c.b16 %v2119, %v2111
      %v2456 = vpack.c.b16 %v2120, %v2112
      %v2457 = vpack.c.b16 %v2121, %v2113
      %v2458 = vpack.c.b16 %v2122, %v2114
      %v2459 = vpack.c.b16 %v2131, %v2123
      %v2460 = vpack.c.b16 %v2132, %v2124
      %v2461 = vpack.c.b16 %v2133, %v2125
      %v2462 = vpack.c.b16 %v2134, %v2126
      %v2463 = vpack.c.b16 %v2135, %v2127
      %v2464 = vpack.c.b16 %v2136, %v2128
      %v2465 = vpack.c.b16 %v2137, %v2129
      %v2466 = vpack.c.b16 %v2138, %v2130
      %v2467 = vpack.c.b16 %v2147, %v2139
      %v2468 = vpack.c.b16 %v2148, %v2140
      %v2469 = vpack.c.b16 %v2149, %v2141
      %v2470 = vpack.c.b16 %v2150, %v2142
      %v2471 = vpack.c.b16 %v2151, %v2143
      %v2472 = vpack.c.b16 %v2152, %v2144
      %v2473 = vpack.c.b16 %v2153, %v2145
      %v2474 = vpack.c.b16 %v2154, %v2146
      %2795 = vmatprep.subr.bf16.mxu0 0
      %2796 = vmatpush1.bf16.msra.mxu0 %v331
      %2797 = vmatprep.subr.bf16.mxu0 0
      %2798 = vmatpush1.bf16.msra.mxu0 %v332
      %2799 = vmatprep.subr.bf16.mxu0 0
      %2800 = vmatpush1.bf16.msra.mxu0 %v333
      %2801 = vmatprep.subr.bf16.mxu0 0
      %2802 = vmatpush1.bf16.msra.mxu0 %v334
      %2803 = vmatprep.subr.bf16.mxu0 0
      %2804 = vmatpush1.bf16.msra.mxu0 %v335
      %2805 = vmatprep.subr.bf16.mxu0 0
      %2806 = vmatpush1.bf16.msra.mxu0 %v336
      %2807 = vmatprep.subr.bf16.mxu0 0
      %2808 = vmatpush1.bf16.msra.mxu0 %v337
      %2809 = vmatprep.subr.bf16.mxu0 0
      %2810 = vmatpush1.bf16.msra.mxu0 %v338
      %2811 = vmatprep.subr.bf16.mxu0 0
      %2812 = vmatpush1.bf16.msra.mxu0 %v339
      %2813 = vmatprep.subr.bf16.mxu0 0
      %2814 = vmatpush1.bf16.msra.mxu0 %v340
      %2815 = vmatprep.subr.bf16.mxu0 0
      %2816 = vmatpush1.bf16.msra.mxu0 %v341
      %2817 = vmatprep.subr.bf16.mxu0 0
      %2818 = vmatpush1.bf16.msra.mxu0 %v342
      %2819 = vmatprep.subr.bf16.mxu0 0
      %2820 = vmatpush1.bf16.msra.mxu0 %v343
      %2821 = vmatprep.subr.bf16.mxu0 0
      %2822 = vmatpush1.bf16.msra.mxu0 %v344
      %2823 = vmatprep.subr.bf16.mxu0 0
      %2824 = vmatpush1.bf16.msra.mxu0 %v345
      %2825 = vmatprep.subr.bf16.mxu0 0
      %2826 = vmatpush1.bf16.msra.mxu0 %v346
      %2827 = vmatprep.mubr.bf16.mxu0 %v2156
      %2828 = vmatmul.mubr.bf16.gmra.mrb[0].mxu0 %v2155
      %v2829 = vpop.f32.mrb[0].mxu0
      %v2830 = vadd.f32 %v798, %v2829
      %v2831 = vpop.f32.mrb[0].mxu0
      %v2832 = vpop.f32.mrb[0].mxu0
      %v2833 = vadd.f32 %v803, %v2832
      %v2834 = vpop.f32.mrb[0].mxu0
      %2835 = vmatprep.mubr.bf16.mxu0 %v2164
      %2836 = vmatmul.mubr.bf16.gmra.mrb[0].mxu0 %v2163
      %v2837 = vpop.f32.mrb[0].mxu0
      %v2838 = vadd.f32 %v808, %v2837
      %v2839 = vpop.f32.mrb[0].mxu0
      %v2840 = vpop.f32.mrb[0].mxu0
      %v2841 = vadd.f32 %v813, %v2840
      %v2842 = vpop.f32.mrb[0].mxu0
      %2843 = vmatprep.mubr.bf16.mxu0 %v2172
      %2844 = vmatmul.mubr.bf16.gmra.mrb[0].mxu0 %v2171
      %v2845 = vpop.f32.mrb[0].mxu0
      %v2846 = vadd.f32 %v818, %v2845
      %v2847 = vpop.f32.mrb[0].mxu0
      %v2848 = vpop.f32.mrb[0].mxu0
      %v2849 = vadd.f32 %v823, %v2848
      %v2850 = vpop.f32.mrb[0].mxu0
      %2851 = vmatprep.mubr.bf16.mxu0 %v2180
      %2852 = vmatmul.mubr.bf16.gmra.mrb[0].mxu0 %v2179
      %v2853 = vpop.f32.mrb[0].mxu0
      %v2854 = vadd.f32 %v828, %v2853
      %v2855 = vpop.f32.mrb[0].mxu0
      %v2856 = vpop.f32.mrb[0].mxu0
      %v2857 = vadd.f32 %v833, %v2856
      %v2858 = vpop.f32.mrb[0].mxu0
      %2859 = vmatprep.mubr.bf16.mxu0 %v2188
      %2860 = vmatmul.mubr.bf16.gmra.mrb[0].mxu0 %v2187
      %v2861 = vpop.f32.mrb[0].mxu0
      %v2862 = vadd.f32 %v838, %v2861
      %v2863 = vpop.f32.mrb[0].mxu0
      %v2864 = vpop.f32.mrb[0].mxu0
      %v2865 = vadd.f32 %v843, %v2864
      %v2866 = vpop.f32.mrb[0].mxu0
      %2867 = vmatprep.mubr.bf16.mxu0 %v2196
      %2868 = vmatmul.mubr.bf16.gmra.mrb[0].mxu0 %v2195
      %v2869 = vpop.f32.mrb[0].mxu0
      %v2870 = vadd.f32 %v848, %v2869
      %v2871 = vpop.f32.mrb[0].mxu0
      %v2872 = vpop.f32.mrb[0].mxu0
      %v2873 = vadd.f32 %v853, %v2872
      %v2874 = vpop.f32.mrb[0].mxu0
      %2875 = vmatprep.mubr.bf16.mxu0 %v2204
      %2876 = vmatmul.mubr.bf16.gmra.mrb[0].mxu0 %v2203
      %v2877 = vpop.f32.mrb[0].mxu0
      %v2878 = vadd.f32 %v858, %v2877
      %v2879 = vpop.f32.mrb[0].mxu0
      %v2880 = vpop.f32.mrb[0].mxu0
      %v2881 = vadd.f32 %v863, %v2880
      %v2882 = vpop.f32.mrb[0].mxu0
      %2883 = vmatprep.mubr.bf16.mxu0 %v2212
      %2884 = vmatmul.mubr.bf16.gmra.mrb[0].mxu0 %v2211
      %v2885 = vpop.f32.mrb[0].mxu0
      %v2886 = vadd.f32 %v868, %v2885
      %v2887 = vpop.f32.mrb[0].mxu0
      %v2888 = vpop.f32.mrb[0].mxu0
      %v2889 = vadd.f32 %v873, %v2888
      %v2890 = vpop.f32.mrb[0].mxu0
      %2891 = vmatprep.mubr.bf16.mxu0 %v2220
      %2892 = vmatmul.mubr.bf16.gmra.mrb[0].mxu0 %v2219
      %v2893 = vpop.f32.mrb[0].mxu0
      %v2894 = vadd.f32 %v878, %v2893
      %v2895 = vpop.f32.mrb[0].mxu0
      %v2896 = vpop.f32.mrb[0].mxu0
      %v2897 = vadd.f32 %v883, %v2896
      %v2898 = vpop.f32.mrb[0].mxu0
      %2899 = vmatprep.mubr.bf16.mxu0 %v2228
      %2900 = vmatmul.mubr.bf16.gmra.mrb[0].mxu0 %v2227
      %v2901 = vpop.f32.mrb[0].mxu0
      %v2902 = vadd.f32 %v888, %v2901
      %v2903 = vpop.f32.mrb[0].mxu0
      %v2904 = vpop.f32.mrb[0].mxu0
      %v2905 = vadd.f32 %v893, %v2904
      %v2906 = vpop.f32.mrb[0].mxu0
      %2907 = vmatprep.mubr.bf16.mxu0 %v2236
      %2908 = vmatmul.mubr.bf16.gmra.mrb[0].mxu0 %v2235
      %v2909 = vpop.f32.mrb[0].mxu0
      %v2910 = vadd.f32 %v898, %v2909
      %v2911 = vpop.f32.mrb[0].mxu0
      %v2912 = vpop.f32.mrb[0].mxu0
      %v2913 = vadd.f32 %v903, %v2912
      %v2914 = vpop.f32.mrb[0].mxu0
      %2915 = vmatprep.mubr.bf16.mxu0 %v2244
      %2916 = vmatmul.mubr.bf16.gmra.mrb[0].mxu0 %v2243
      %v2917 = vpop.f32.mrb[0].mxu0
      %v2918 = vadd.f32 %v908, %v2917
      %v2919 = vpop.f32.mrb[0].mxu0
      %v2920 = vpop.f32.mrb[0].mxu0
      %v2921 = vadd.f32 %v913, %v2920
      %v2922 = vpop.f32.mrb[0].mxu0
      %2923 = vmatprep.mubr.bf16.mxu0 %v2252
      %2924 = vmatmul.mubr.bf16.gmra.mrb[0].mxu0 %v2251
      %v2925 = vpop.f32.mrb[0].mxu0
      %v2926 = vadd.f32 %v918, %v2925
      %v2927 = vpop.f32.mrb[0].mxu0
      %v2928 = vpop.f32.mrb[0].mxu0
      %v2929 = vadd.f32 %v923, %v2928
      %v2930 = vpop.f32.mrb[0].mxu0
      %2931 = vmatprep.mubr.bf16.mxu0 %v2260
      %2932 = vmatmul.mubr.bf16.gmra.mrb[0].mxu0 %v2259
      %v2933 = vpop.f32.mrb[0].mxu0
      %v2934 = vadd.f32 %v928, %v2933
      %v2935 = vpop.f32.mrb[0].mxu0
      %v2936 = vpop.f32.mrb[0].mxu0
      %v2937 = vadd.f32 %v933, %v2936
      %v2938 = vpop.f32.mrb[0].mxu0
      %2939 = vmatprep.mubr.bf16.mxu0 %v2268
      %2940 = vmatmul.mubr.bf16.gmra.mrb[0].mxu0 %v2267
      %v2941 = vpop.f32.mrb[0].mxu0
      %v2942 = vadd.f32 %v938, %v2941
      %v2943 = vpop.f32.mrb[0].mxu0
      %v2944 = vpop.f32.mrb[0].mxu0
      %v2945 = vadd.f32 %v943, %v2944
      %v2946 = vpop.f32.mrb[0].mxu0
      %2947 = vmatprep.mubr.bf16.mxu0 %v2276
      %2948 = vmatmul.mubr.bf16.gmra.mrb[0].mxu0 %v2275
      %v2949 = vpop.f32.mrb[0].mxu0
      %v2950 = vadd.f32 %v948, %v2949
      %v2951 = vpop.f32.mrb[0].mxu0
      %v2952 = vpop.f32.mrb[0].mxu0
      %v2953 = vadd.f32 %v953, %v2952
      %v2954 = vpop.f32.mrb[0].mxu0
      %2955 = vmatprep.mubr.bf16.mxu0 %v2284
      %2956 = vmatmul.mubr.bf16.gmra.mrb[0].mxu0 %v2283
      %v2957 = vpop.f32.mrb[0].mxu0
      %v2958 = vadd.f32 %v958, %v2957
      %v2959 = vpop.f32.mrb[0].mxu0
      %v2960 = vpop.f32.mrb[0].mxu0
      %v2961 = vadd.f32 %v963, %v2960
      %v2962 = vpop.f32.mrb[0].mxu0
      %2963 = vmatprep.mubr.bf16.mxu0 %v2292
      %2964 = vmatmul.mubr.bf16.gmra.mrb[0].mxu0 %v2291
      %v2965 = vpop.f32.mrb[0].mxu0
      %v2966 = vadd.f32 %v968, %v2965
      %v2967 = vpop.f32.mrb[0].mxu0
      %v2968 = vpop.f32.mrb[0].mxu0
      %v2969 = vadd.f32 %v973, %v2968
      %v2970 = vpop.f32.mrb[0].mxu0
      %2971 = vmatprep.mubr.bf16.mxu0 %v2300
      %2972 = vmatmul.mubr.bf16.gmra.mrb[0].mxu0 %v2299
      %v2973 = vpop.f32.mrb[0].mxu0
      %v2974 = vadd.f32 %v978, %v2973
      %v2975 = vpop.f32.mrb[0].mxu0
      %v2976 = vpop.f32.mrb[0].mxu0
      %v2977 = vadd.f32 %v983, %v2976
      %v2978 = vpop.f32.mrb[0].mxu0
      %2979 = vmatprep.mubr.bf16.mxu0 %v2308
      %2980 = vmatmul.mubr.bf16.gmra.mrb[0].mxu0 %v2307
      %v2981 = vpop.f32.mrb[0].mxu0
      %v2982 = vadd.f32 %v988, %v2981
      %v2983 = vpop.f32.mrb[0].mxu0
      %v2984 = vpop.f32.mrb[0].mxu0
      %v2985 = vadd.f32 %v993, %v2984
      %v2986 = vpop.f32.mrb[0].mxu0
      %2987 = vmatprep.mubr.bf16.mxu0 %v2316
      %2988 = vmatmul.mubr.bf16.gmra.mrb[0].mxu0 %v2315
      %v2989 = vpop.f32.mrb[0].mxu0
      %v2990 = vadd.f32 %v998, %v2989
      %v2991 = vpop.f32.mrb[0].mxu0
      %v2992 = vpop.f32.mrb[0].mxu0
      %v2993 = vadd.f32 %v1003, %v2992
      %v2994 = vpop.f32.mrb[0].mxu0
      %2995 = vmatprep.mubr.bf16.mxu0 %v2324
      %2996 = vmatmul.mubr.bf16.gmra.mrb[0].mxu0 %v2323
      %v2997 = vpop.f32.mrb[0].mxu0
      %v2998 = vadd.f32 %v1008, %v2997
      %v2999 = vpop.f32.mrb[0].mxu0
      %v3000 = vpop.f32.mrb[0].mxu0
      %v3001 = vadd.f32 %v1013, %v3000
      %v3002 = vpop.f32.mrb[0].mxu0
      %3003 = vmatprep.mubr.bf16.mxu0 %v2332
      %3004 = vmatmul.mubr.bf16.gmra.mrb[0].mxu0 %v2331
      %v3005 = vpop.f32.mrb[0].mxu0
      %v3006 = vadd.f32 %v1018, %v3005
      %v3007 = vpop.f32.mrb[0].mxu0
      %v3008 = vpop.f32.mrb[0].mxu0
      %v3009 = vadd.f32 %v1023, %v3008
      %v3010 = vpop.f32.mrb[0].mxu0
      %3011 = vmatprep.mubr.bf16.mxu0 %v2340
      %3012 = vmatmul.mubr.bf16.gmra.mrb[0].mxu0 %v2339
      %v3013 = vpop.f32.mrb[0].mxu0
      %v3014 = vadd.f32 %v1028, %v3013
      %v3015 = vpop.f32.mrb[0].mxu0
      %v3016 = vpop.f32.mrb[0].mxu0
      %v3017 = vadd.f32 %v1033, %v3016
      %v3018 = vpop.f32.mrb[0].mxu0
      %3019 = vmatprep.mubr.bf16.mxu0 %v2348
      %3020 = vmatmul.mubr.bf16.gmra.mrb[0].mxu0 %v2347
      %v3021 = vpop.f32.mrb[0].mxu0
      %v3022 = vadd.f32 %v1038, %v3021
      %v3023 = vpop.f32.mrb[0].mxu0
      %v3024 = vpop.f32.mrb[0].mxu0
      %v3025 = vadd.f32 %v1043, %v3024
      %v3026 = vpop.f32.mrb[0].mxu0
      %3027 = vmatprep.mubr.bf16.mxu0 %v2356
      %3028 = vmatmul.mubr.bf16.gmra.mrb[0].mxu0 %v2355
      %v3029 = vpop.f32.mrb[0].mxu0
      %v3030 = vadd.f32 %v1048, %v3029
      %v3031 = vpop.f32.mrb[0].mxu0
      %v3032 = vpop.f32.mrb[0].mxu0
      %v3033 = vadd.f32 %v1053, %v3032
      %v3034 = vpop.f32.mrb[0].mxu0
      %3035 = vmatprep.mubr.bf16.mxu0 %v2364
      %3036 = vmatmul.mubr.bf16.gmra.mrb[0].mxu0 %v2363
      %v3037 = vpop.f32.mrb[0].mxu0
      %v3038 = vadd.f32 %v1058, %v3037
      %v3039 = vpop.f32.mrb[0].mxu0
      %v3040 = vpop.f32.mrb[0].mxu0
      %v3041 = vadd.f32 %v1063, %v3040
      %v3042 = vpop.f32.mrb[0].mxu0
      %3043 = vmatprep.mubr.bf16.mxu0 %v2372
      %3044 = vmatmul.mubr.bf16.gmra.mrb[0].mxu0 %v2371
      %v3045 = vpop.f32.mrb[0].mxu0
      %v3046 = vadd.f32 %v1068, %v3045
      %v3047 = vpop.f32.mrb[0].mxu0
      %v3048 = vpop.f32.mrb[0].mxu0
      %v3049 = vadd.f32 %v1073, %v3048
      %v3050 = vpop.f32.mrb[0].mxu0
      %3051 = vmatprep.mubr.bf16.mxu0 %v2380
      %3052 = vmatmul.mubr.bf16.gmra.mrb[0].mxu0 %v2379
      %v3053 = vpop.f32.mrb[0].mxu0
      %v3054 = vadd.f32 %v1078, %v3053
      %v3055 = vpop.f32.mrb[0].mxu0
      %v3056 = vpop.f32.mrb[0].mxu0
      %v3057 = vadd.f32 %v1083, %v3056
      %v3058 = vpop.f32.mrb[0].mxu0
      %3059 = vmatprep.mubr.bf16.mxu0 %v2388
      %3060 = vmatmul.mubr.bf16.gmra.mrb[0].mxu0 %v2387
      %v3061 = vpop.f32.mrb[0].mxu0
      %v3062 = vadd.f32 %v1088, %v3061
      %v3063 = vpop.f32.mrb[0].mxu0
      %v3064 = vpop.f32.mrb[0].mxu0
      %v3065 = vadd.f32 %v1093, %v3064
      %v3066 = vpop.f32.mrb[0].mxu0
      %3067 = vmatprep.mubr.bf16.mxu0 %v2396
      %3068 = vmatmul.mubr.bf16.gmra.mrb[0].mxu0 %v2395
      %v3069 = vpop.f32.mrb[0].mxu0
      %v3070 = vadd.f32 %v1098, %v3069
      %v3071 = vpop.f32.mrb[0].mxu0
      %v3072 = vpop.f32.mrb[0].mxu0
      %v3073 = vadd.f32 %v1103, %v3072
      %v3074 = vpop.f32.mrb[0].mxu0
      %3075 = vmatprep.mubr.bf16.mxu0 %v2404
      %3076 = vmatmul.mubr.bf16.gmra.mrb[0].mxu0 %v2403
      %v3077 = vpop.f32.mrb[0].mxu0
      %v3078 = vadd.f32 %v1108, %v3077
      %v3079 = vpop.f32.mrb[0].mxu0
      %v3080 = vpop.f32.mrb[0].mxu0
      %v3081 = vadd.f32 %v1113, %v3080
      %v3082 = vpop.f32.mrb[0].mxu0
      %3083 = vmatprep.mubr.bf16.mxu0 %v2412
      %3084 = vmatmul.mubr.bf16.gmra.mrb[0].mxu0 %v2411
      %v3085 = vpop.f32.mrb[0].mxu0
      %v3086 = vadd.f32 %v1118, %v3085
      %v3087 = vpop.f32.mrb[0].mxu0
      %v3088 = vpop.f32.mrb[0].mxu0
      %v3089 = vadd.f32 %v1123, %v3088
      %v3090 = vpop.f32.mrb[0].mxu0
      %3091 = vmatprep.mubr.bf16.mxu0 %v2420
      %3092 = vmatmul.mubr.bf16.gmra.mrb[0].mxu0 %v2419
      %v3093 = vpop.f32.mrb[0].mxu0
      %v3094 = vadd.f32 %v1128, %v3093
      %v3095 = vpop.f32.mrb[0].mxu0
      %v3096 = vpop.f32.mrb[0].mxu0
      %v3097 = vadd.f32 %v1133, %v3096
      %v3098 = vpop.f32.mrb[0].mxu0
      %3099 = vmatprep.mubr.bf16.mxu0 %v2428
      %3100 = vmatmul.mubr.bf16.gmra.mrb[0].mxu0 %v2427
      %v3101 = vpop.f32.mrb[0].mxu0
      %v3102 = vadd.f32 %v1138, %v3101
      %v3103 = vpop.f32.mrb[0].mxu0
      %v3104 = vpop.f32.mrb[0].mxu0
      %v3105 = vadd.f32 %v1143, %v3104
      %v3106 = vpop.f32.mrb[0].mxu0
      %3107 = vmatprep.mubr.bf16.mxu0 %v2436
      %3108 = vmatmul.mubr.bf16.gmra.mrb[0].mxu0 %v2435
      %v3109 = vpop.f32.mrb[0].mxu0
      %v3110 = vadd.f32 %v1148, %v3109
      %v3111 = vpop.f32.mrb[0].mxu0
      %v3112 = vpop.f32.mrb[0].mxu0
      %v3113 = vadd.f32 %v1153, %v3112
      %v3114 = vpop.f32.mrb[0].mxu0
      %3115 = vmatprep.mubr.bf16.mxu0 %v2444
      %3116 = vmatmul.mubr.bf16.gmra.mrb[0].mxu0 %v2443
      %v3117 = vpop.f32.mrb[0].mxu0
      %v3118 = vadd.f32 %v1158, %v3117
      %v3119 = vpop.f32.mrb[0].mxu0
      %v3120 = vpop.f32.mrb[0].mxu0
      %v3121 = vadd.f32 %v1163, %v3120
      %v3122 = vpop.f32.mrb[0].mxu0
      %3123 = vmatprep.mubr.bf16.mxu0 %v2452
      %3124 = vmatmul.mubr.bf16.gmra.mrb[0].mxu0 %v2451
      %v3125 = vpop.f32.mrb[0].mxu0
      %v3126 = vadd.f32 %v1168, %v3125
      %v3127 = vpop.f32.mrb[0].mxu0
      %v3128 = vpop.f32.mrb[0].mxu0
      %v3129 = vadd.f32 %v1173, %v3128
      %v3130 = vpop.f32.mrb[0].mxu0
      %3131 = vmatprep.mubr.bf16.mxu0 %v2460
      %3132 = vmatmul.mubr.bf16.gmra.mrb[0].mxu0 %v2459
      %v3133 = vpop.f32.mrb[0].mxu0
      %v3134 = vadd.f32 %v1178, %v3133
      %v3135 = vpop.f32.mrb[0].mxu0
      %v3136 = vpop.f32.mrb[0].mxu0
      %v3137 = vadd.f32 %v1183, %v3136
      %v3138 = vpop.f32.mrb[0].mxu0
      %3139 = vmatprep.mubr.bf16.mxu0 %v2468
      %3140 = vmatmul.mubr.bf16.gmra.mrb[0].mxu0 %v2467
      %v3141 = vpop.f32.mrb[0].mxu0
      %v3142 = vadd.f32 %v1188, %v3141
      %v3143 = vpop.f32.mrb[0].mxu0
      %v3144 = vpop.f32.mrb[0].mxu0
      %v3145 = vadd.f32 %v1193, %v3144
      %v3146 = vpop.f32.mrb[0].mxu0
      %3147 = vdwg.mxu0
      %3148 = vmatprep.subr.bf16.mxu0 0
      %3149 = vmatpush1.bf16.msra.mxu0 %v347
      %3150 = vmatprep.subr.bf16.mxu0 0
      %3151 = vmatpush1.bf16.msra.mxu0 %v348
      %3152 = vmatprep.subr.bf16.mxu0 0
      %3153 = vmatpush1.bf16.msra.mxu0 %v349
      %3154 = vmatprep.subr.bf16.mxu0 0
      %3155 = vmatpush1.bf16.msra.mxu0 %v350
      %3156 = vmatprep.subr.bf16.mxu0 0
      %3157 = vmatpush1.bf16.msra.mxu0 %v351
      %3158 = vmatprep.subr.bf16.mxu0 0
      %3159 = vmatpush1.bf16.msra.mxu0 %v352
      %3160 = vmatprep.subr.bf16.mxu0 0
      %3161 = vmatpush1.bf16.msra.mxu0 %v353
      %3162 = vmatprep.subr.bf16.mxu0 0
      %3163 = vmatpush1.bf16.msra.mxu0 %v354
      %3164 = vmatprep.subr.bf16.mxu0 0
      %3165 = vmatpush1.bf16.msra.mxu0 %v355
      %3166 = vmatprep.subr.bf16.mxu0 0
      %3167 = vmatpush1.bf16.msra.mxu0 %v356
      %3168 = vmatprep.subr.bf16.mxu0 0
      %3169 = vmatpush1.bf16.msra.mxu0 %v357
      %3170 = vmatprep.subr.bf16.mxu0 0
      %3171 = vmatpush1.bf16.msra.mxu0 %v358
      %3172 = vmatprep.subr.bf16.mxu0 0
      %3173 = vmatpush1.bf16.msra.mxu0 %v359
      %3174 = vmatprep.subr.bf16.mxu0 0
      %3175 = vmatpush1.bf16.msra.mxu0 %v360
      %3176 = vmatprep.subr.bf16.mxu0 0
      %3177 = vmatpush1.bf16.msra.mxu0 %v361
      %3178 = vmatprep.subr.bf16.mxu0 0
      %3179 = vmatpush1.bf16.msra.mxu0 %v362
      %3180 = vmatprep.mubr.bf16.mxu0 %v2158
      %3181 = vmatmul.mubr.bf16.gmra.mrb[0].mxu0 %v2157
      %v3182 = vpop.f32.mrb[0].mxu0
      %v3183 = vadd.f32 %v2830, %v3182
      %v3184 = vpop.f32.mrb[0].mxu0
      %v3185 = vpop.f32.mrb[0].mxu0
      %v3186 = vadd.f32 %v2833, %v3185
      %v3187 = vpop.f32.mrb[0].mxu0
      %3188 = vmatprep.mubr.bf16.mxu0 %v2166
      %3189 = vmatmul.mubr.bf16.gmra.mrb[0].mxu0 %v2165
      %v3190 = vpop.f32.mrb[0].mxu0
      %v3191 = vadd.f32 %v2838, %v3190
      %v3192 = vpop.f32.mrb[0].mxu0
      %v3193 = vpop.f32.mrb[0].mxu0
      %v3194 = vadd.f32 %v2841, %v3193
      %v3195 = vpop.f32.mrb[0].mxu0
      %3196 = vmatprep.mubr.bf16.mxu0 %v2174
      %3197 = vmatmul.mubr.bf16.gmra.mrb[0].mxu0 %v2173
      %v3198 = vpop.f32.mrb[0].mxu0
      %v3199 = vadd.f32 %v2846, %v3198
      %v3200 = vpop.f32.mrb[0].mxu0
      %v3201 = vpop.f32.mrb[0].mxu0
      %v3202 = vadd.f32 %v2849, %v3201
      %v3203 = vpop.f32.mrb[0].mxu0
      %3204 = vmatprep.mubr.bf16.mxu0 %v2182
      %3205 = vmatmul.mubr.bf16.gmra.mrb[0].mxu0 %v2181
      %v3206 = vpop.f32.mrb[0].mxu0
      %v3207 = vadd.f32 %v2854, %v3206
      %v3208 = vpop.f32.mrb[0].mxu0
      %v3209 = vpop.f32.mrb[0].mxu0
      %v3210 = vadd.f32 %v2857, %v3209
      %v3211 = vpop.f32.mrb[0].mxu0
      %3212 = vmatprep.mubr.bf16.mxu0 %v2190
      %3213 = vmatmul.mubr.bf16.gmra.mrb[0].mxu0 %v2189
      %v3214 = vpop.f32.mrb[0].mxu0
      %v3215 = vadd.f32 %v2862, %v3214
      %v3216 = vpop.f32.mrb[0].mxu0
      %v3217 = vpop.f32.mrb[0].mxu0
      %v3218 = vadd.f32 %v2865, %v3217
      %v3219 = vpop.f32.mrb[0].mxu0
      %3220 = vmatprep.mubr.bf16.mxu0 %v2198
      %3221 = vmatmul.mubr.bf16.gmra.mrb[0].mxu0 %v2197
      %v3222 = vpop.f32.mrb[0].mxu0
      %v3223 = vadd.f32 %v2870, %v3222
      %v3224 = vpop.f32.mrb[0].mxu0
      %v3225 = vpop.f32.mrb[0].mxu0
      %v3226 = vadd.f32 %v2873, %v3225
      %v3227 = vpop.f32.mrb[0].mxu0
      %3228 = vmatprep.mubr.bf16.mxu0 %v2206
      %3229 = vmatmul.mubr.bf16.gmra.mrb[0].mxu0 %v2205
      %v3230 = vpop.f32.mrb[0].mxu0
      %v3231 = vadd.f32 %v2878, %v3230
      %v3232 = vpop.f32.mrb[0].mxu0
      %v3233 = vpop.f32.mrb[0].mxu0
      %v3234 = vadd.f32 %v2881, %v3233
      %v3235 = vpop.f32.mrb[0].mxu0
      %3236 = vmatprep.mubr.bf16.mxu0 %v2214
      %3237 = vmatmul.mubr.bf16.gmra.mrb[0].mxu0 %v2213
      %v3238 = vpop.f32.mrb[0].mxu0
      %v3239 = vadd.f32 %v2886, %v3238
      %v3240 = vpop.f32.mrb[0].mxu0
      %v3241 = vpop.f32.mrb[0].mxu0
      %v3242 = vadd.f32 %v2889, %v3241
      %v3243 = vpop.f32.mrb[0].mxu0
      %3244 = vmatprep.mubr.bf16.mxu0 %v2222
      %3245 = vmatmul.mubr.bf16.gmra.mrb[0].mxu0 %v2221
      %v3246 = vpop.f32.mrb[0].mxu0
      %v3247 = vadd.f32 %v2894, %v3246
      %v3248 = vpop.f32.mrb[0].mxu0
      %v3249 = vpop.f32.mrb[0].mxu0
      %v3250 = vadd.f32 %v2897, %v3249
      %v3251 = vpop.f32.mrb[0].mxu0
      %3252 = vmatprep.mubr.bf16.mxu0 %v2230
      %3253 = vmatmul.mubr.bf16.gmra.mrb[0].mxu0 %v2229
      %v3254 = vpop.f32.mrb[0].mxu0
      %v3255 = vadd.f32 %v2902, %v3254
      %v3256 = vpop.f32.mrb[0].mxu0
      %v3257 = vpop.f32.mrb[0].mxu0
      %v3258 = vadd.f32 %v2905, %v3257
      %v3259 = vpop.f32.mrb[0].mxu0
      %3260 = vmatprep.mubr.bf16.mxu0 %v2238
      %3261 = vmatmul.mubr.bf16.gmra.mrb[0].mxu0 %v2237
      %v3262 = vpop.f32.mrb[0].mxu0
      %v3263 = vadd.f32 %v2910, %v3262
      %v3264 = vpop.f32.mrb[0].mxu0
      %v3265 = vpop.f32.mrb[0].mxu0
      %v3266 = vadd.f32 %v2913, %v3265
      %v3267 = vpop.f32.mrb[0].mxu0
      %3268 = vmatprep.mubr.bf16.mxu0 %v2246
      %3269 = vmatmul.mubr.bf16.gmra.mrb[0].mxu0 %v2245
      %v3270 = vpop.f32.mrb[0].mxu0
      %v3271 = vadd.f32 %v2918, %v3270
      %v3272 = vpop.f32.mrb[0].mxu0
      %v3273 = vpop.f32.mrb[0].mxu0
      %v3274 = vadd.f32 %v2921, %v3273
      %v3275 = vpop.f32.mrb[0].mxu0
      %3276 = vmatprep.mubr.bf16.mxu0 %v2254
      %3277 = vmatmul.mubr.bf16.gmra.mrb[0].mxu0 %v2253
      %v3278 = vpop.f32.mrb[0].mxu0
      %v3279 = vadd.f32 %v2926, %v3278
      %v3280 = vpop.f32.mrb[0].mxu0
      %v3281 = vpop.f32.mrb[0].mxu0
      %v3282 = vadd.f32 %v2929, %v3281
      %v3283 = vpop.f32.mrb[0].mxu0
      %3284 = vmatprep.mubr.bf16.mxu0 %v2262
      %3285 = vmatmul.mubr.bf16.gmra.mrb[0].mxu0 %v2261
      %v3286 = vpop.f32.mrb[0].mxu0
      %v3287 = vadd.f32 %v2934, %v3286
      %v3288 = vpop.f32.mrb[0].mxu0
      %v3289 = vpop.f32.mrb[0].mxu0
      %v3290 = vadd.f32 %v2937, %v3289
      %v3291 = vpop.f32.mrb[0].mxu0
      %3292 = vmatprep.mubr.bf16.mxu0 %v2270
      %3293 = vmatmul.mubr.bf16.gmra.mrb[0].mxu0 %v2269
      %v3294 = vpop.f32.mrb[0].mxu0
      %v3295 = vadd.f32 %v2942, %v3294
      %v3296 = vpop.f32.mrb[0].mxu0
      %v3297 = vpop.f32.mrb[0].mxu0
      %v3298 = vadd.f32 %v2945, %v3297
      %v3299 = vpop.f32.mrb[0].mxu0
      %3300 = vmatprep.mubr.bf16.mxu0 %v2278
      %3301 = vmatmul.mubr.bf16.gmra.mrb[0].mxu0 %v2277
      %v3302 = vpop.f32.mrb[0].mxu0
      %v3303 = vadd.f32 %v2950, %v3302
      %v3304 = vpop.f32.mrb[0].mxu0
      %v3305 = vpop.f32.mrb[0].mxu0
      %v3306 = vadd.f32 %v2953, %v3305
      %v3307 = vpop.f32.mrb[0].mxu0
      %3308 = vmatprep.mubr.bf16.mxu0 %v2286
      %3309 = vmatmul.mubr.bf16.gmra.mrb[0].mxu0 %v2285
      %v3310 = vpop.f32.mrb[0].mxu0
      %v3311 = vadd.f32 %v2958, %v3310
      %v3312 = vpop.f32.mrb[0].mxu0
      %v3313 = vpop.f32.mrb[0].mxu0
      %v3314 = vadd.f32 %v2961, %v3313
      %v3315 = vpop.f32.mrb[0].mxu0
      %3316 = vmatprep.mubr.bf16.mxu0 %v2294
      %3317 = vmatmul.mubr.bf16.gmra.mrb[0].mxu0 %v2293
      %v3318 = vpop.f32.mrb[0].mxu0
      %v3319 = vadd.f32 %v2966, %v3318
      %v3320 = vpop.f32.mrb[0].mxu0
      %v3321 = vpop.f32.mrb[0].mxu0
      %v3322 = vadd.f32 %v2969, %v3321
      %v3323 = vpop.f32.mrb[0].mxu0
      %3324 = vmatprep.mubr.bf16.mxu0 %v2302
      %3325 = vmatmul.mubr.bf16.gmra.mrb[0].mxu0 %v2301
      %v3326 = vpop.f32.mrb[0].mxu0
      %v3327 = vadd.f32 %v2974, %v3326
      %v3328 = vpop.f32.mrb[0].mxu0
      %v3329 = vpop.f32.mrb[0].mxu0
      %v3330 = vadd.f32 %v2977, %v3329
      %v3331 = vpop.f32.mrb[0].mxu0
      %3332 = vmatprep.mubr.bf16.mxu0 %v2310
      %3333 = vmatmul.mubr.bf16.gmra.mrb[0].mxu0 %v2309
      %v3334 = vpop.f32.mrb[0].mxu0
      %v3335 = vadd.f32 %v2982, %v3334
      %v3336 = vpop.f32.mrb[0].mxu0
      %v3337 = vpop.f32.mrb[0].mxu0
      %v3338 = vadd.f32 %v2985, %v3337
      %v3339 = vpop.f32.mrb[0].mxu0
      %3340 = vmatprep.mubr.bf16.mxu0 %v2318
      %3341 = vmatmul.mubr.bf16.gmra.mrb[0].mxu0 %v2317
      %v3342 = vpop.f32.mrb[0].mxu0
      %v3343 = vadd.f32 %v2990, %v3342
      %v3344 = vpop.f32.mrb[0].mxu0
      %v3345 = vpop.f32.mrb[0].mxu0
      %v3346 = vadd.f32 %v2993, %v3345
      %v3347 = vpop.f32.mrb[0].mxu0
      %3348 = vmatprep.mubr.bf16.mxu0 %v2326
      %3349 = vmatmul.mubr.bf16.gmra.mrb[0].mxu0 %v2325
      %v3350 = vpop.f32.mrb[0].mxu0
      %v3351 = vadd.f32 %v2998, %v3350
      %v3352 = vpop.f32.mrb[0].mxu0
      %v3353 = vpop.f32.mrb[0].mxu0
      %v3354 = vadd.f32 %v3001, %v3353
      %v3355 = vpop.f32.mrb[0].mxu0
      %3356 = vmatprep.mubr.bf16.mxu0 %v2334
      %3357 = vmatmul.mubr.bf16.gmra.mrb[0].mxu0 %v2333
      %v3358 = vpop.f32.mrb[0].mxu0
      %v3359 = vadd.f32 %v3006, %v3358
      %v3360 = vpop.f32.mrb[0].mxu0
      %v3361 = vpop.f32.mrb[0].mxu0
      %v3362 = vadd.f32 %v3009, %v3361
      %v3363 = vpop.f32.mrb[0].mxu0
      %3364 = vmatprep.mubr.bf16.mxu0 %v2342
      %3365 = vmatmul.mubr.bf16.gmra.mrb[0].mxu0 %v2341
      %v3366 = vpop.f32.mrb[0].mxu0
      %v3367 = vadd.f32 %v3014, %v3366
      %v3368 = vpop.f32.mrb[0].mxu0
      %v3369 = vpop.f32.mrb[0].mxu0
      %v3370 = vadd.f32 %v3017, %v3369
      %v3371 = vpop.f32.mrb[0].mxu0
      %3372 = vmatprep.mubr.bf16.mxu0 %v2350
      %3373 = vmatmul.mubr.bf16.gmra.mrb[0].mxu0 %v2349
      %v3374 = vpop.f32.mrb[0].mxu0
      %v3375 = vadd.f32 %v3022, %v3374
      %v3376 = vpop.f32.mrb[0].mxu0
      %v3377 = vpop.f32.mrb[0].mxu0
      %v3378 = vadd.f32 %v3025, %v3377
      %v3379 = vpop.f32.mrb[0].mxu0
      %3380 = vmatprep.mubr.bf16.mxu0 %v2358
      %3381 = vmatmul.mubr.bf16.gmra.mrb[0].mxu0 %v2357
      %v3382 = vpop.f32.mrb[0].mxu0
      %v3383 = vadd.f32 %v3030, %v3382
      %v3384 = vpop.f32.mrb[0].mxu0
      %v3385 = vpop.f32.mrb[0].mxu0
      %v3386 = vadd.f32 %v3033, %v3385
      %v3387 = vpop.f32.mrb[0].mxu0
      %3388 = vmatprep.mubr.bf16.mxu0 %v2366
      %3389 = vmatmul.mubr.bf16.gmra.mrb[0].mxu0 %v2365
      %v3390 = vpop.f32.mrb[0].mxu0
      %v3391 = vadd.f32 %v3038, %v3390
      %v3392 = vpop.f32.mrb[0].mxu0
      %v3393 = vpop.f32.mrb[0].mxu0
      %v3394 = vadd.f32 %v3041, %v3393
      %v3395 = vpop.f32.mrb[0].mxu0
      %3396 = vmatprep.mubr.bf16.mxu0 %v2374
      %3397 = vmatmul.mubr.bf16.gmra.mrb[0].mxu0 %v2373
      %v3398 = vpop.f32.mrb[0].mxu0
      %v3399 = vadd.f32 %v3046, %v3398
      %v3400 = vpop.f32.mrb[0].mxu0
      %v3401 = vpop.f32.mrb[0].mxu0
      %v3402 = vadd.f32 %v3049, %v3401
      %v3403 = vpop.f32.mrb[0].mxu0
      %3404 = vmatprep.mubr.bf16.mxu0 %v2382
      %3405 = vmatmul.mubr.bf16.gmra.mrb[0].mxu0 %v2381
      %v3406 = vpop.f32.mrb[0].mxu0
      %v3407 = vadd.f32 %v3054, %v3406
      %v3408 = vpop.f32.mrb[0].mxu0
      %v3409 = vpop.f32.mrb[0].mxu0
      %v3410 = vadd.f32 %v3057, %v3409
      %v3411 = vpop.f32.mrb[0].mxu0
      %3412 = vmatprep.mubr.bf16.mxu0 %v2390
      %3413 = vmatmul.mubr.bf16.gmra.mrb[0].mxu0 %v2389
      %v3414 = vpop.f32.mrb[0].mxu0
      %v3415 = vadd.f32 %v3062, %v3414
      %v3416 = vpop.f32.mrb[0].mxu0
      %v3417 = vpop.f32.mrb[0].mxu0
      %v3418 = vadd.f32 %v3065, %v3417
      %v3419 = vpop.f32.mrb[0].mxu0
      %3420 = vmatprep.mubr.bf16.mxu0 %v2398
      %3421 = vmatmul.mubr.bf16.gmra.mrb[0].mxu0 %v2397
      %v3422 = vpop.f32.mrb[0].mxu0
      %v3423 = vadd.f32 %v3070, %v3422
      %v3424 = vpop.f32.mrb[0].mxu0
      %v3425 = vpop.f32.mrb[0].mxu0
      %v3426 = vadd.f32 %v3073, %v3425
      %v3427 = vpop.f32.mrb[0].mxu0
      %3428 = vmatprep.mubr.bf16.mxu0 %v2406
      %3429 = vmatmul.mubr.bf16.gmra.mrb[0].mxu0 %v2405
      %v3430 = vpop.f32.mrb[0].mxu0
      %v3431 = vadd.f32 %v3078, %v3430
      %v3432 = vpop.f32.mrb[0].mxu0
      %v3433 = vpop.f32.mrb[0].mxu0
      %v3434 = vadd.f32 %v3081, %v3433
      %v3435 = vpop.f32.mrb[0].mxu0
      %3436 = vmatprep.mubr.bf16.mxu0 %v2414
      %3437 = vmatmul.mubr.bf16.gmra.mrb[0].mxu0 %v2413
      %v3438 = vpop.f32.mrb[0].mxu0
      %v3439 = vadd.f32 %v3086, %v3438
      %v3440 = vpop.f32.mrb[0].mxu0
      %v3441 = vpop.f32.mrb[0].mxu0
      %v3442 = vadd.f32 %v3089, %v3441
      %v3443 = vpop.f32.mrb[0].mxu0
      %3444 = vmatprep.mubr.bf16.mxu0 %v2422
      %3445 = vmatmul.mubr.bf16.gmra.mrb[0].mxu0 %v2421
      %v3446 = vpop.f32.mrb[0].mxu0
      %v3447 = vadd.f32 %v3094, %v3446
      %v3448 = vpop.f32.mrb[0].mxu0
      %v3449 = vpop.f32.mrb[0].mxu0
      %v3450 = vadd.f32 %v3097, %v3449
      %v3451 = vpop.f32.mrb[0].mxu0
      %3452 = vmatprep.mubr.bf16.mxu0 %v2430
      %3453 = vmatmul.mubr.bf16.gmra.mrb[0].mxu0 %v2429
      %v3454 = vpop.f32.mrb[0].mxu0
      %v3455 = vadd.f32 %v3102, %v3454
      %v3456 = vpop.f32.mrb[0].mxu0
      %v3457 = vpop.f32.mrb[0].mxu0
      %v3458 = vadd.f32 %v3105, %v3457
      %v3459 = vpop.f32.mrb[0].mxu0
      %3460 = vmatprep.mubr.bf16.mxu0 %v2438
      %3461 = vmatmul.mubr.bf16.gmra.mrb[0].mxu0 %v2437
      %v3462 = vpop.f32.mrb[0].mxu0
      %v3463 = vadd.f32 %v3110, %v3462
      %v3464 = vpop.f32.mrb[0].mxu0
      %v3465 = vpop.f32.mrb[0].mxu0
      %v3466 = vadd.f32 %v3113, %v3465
      %v3467 = vpop.f32.mrb[0].mxu0
      %3468 = vmatprep.mubr.bf16.mxu0 %v2446
      %3469 = vmatmul.mubr.bf16.gmra.mrb[0].mxu0 %v2445
      %v3470 = vpop.f32.mrb[0].mxu0
      %v3471 = vadd.f32 %v3118, %v3470
      %v3472 = vpop.f32.mrb[0].mxu0
      %v3473 = vpop.f32.mrb[0].mxu0
      %v3474 = vadd.f32 %v3121, %v3473
      %v3475 = vpop.f32.mrb[0].mxu0
      %3476 = vmatprep.mubr.bf16.mxu0 %v2454
      %3477 = vmatmul.mubr.bf16.gmra.mrb[0].mxu0 %v2453
      %v3478 = vpop.f32.mrb[0].mxu0
      %v3479 = vadd.f32 %v3126, %v3478
      %v3480 = vpop.f32.mrb[0].mxu0
      %v3481 = vpop.f32.mrb[0].mxu0
      %v3482 = vadd.f32 %v3129, %v3481
      %v3483 = vpop.f32.mrb[0].mxu0
      %3484 = vmatprep.mubr.bf16.mxu0 %v2462
      %3485 = vmatmul.mubr.bf16.gmra.mrb[0].mxu0 %v2461
      %v3486 = vpop.f32.mrb[0].mxu0
      %v3487 = vadd.f32 %v3134, %v3486
      %v3488 = vpop.f32.mrb[0].mxu0
      %v3489 = vpop.f32.mrb[0].mxu0
      %v3490 = vadd.f32 %v3137, %v3489
      %v3491 = vpop.f32.mrb[0].mxu0
      %3492 = vmatprep.mubr.bf16.mxu0 %v2470
      %3493 = vmatmul.mubr.bf16.gmra.mrb[0].mxu0 %v2469
      %v3494 = vpop.f32.mrb[0].mxu0
      %v3495 = vadd.f32 %v3142, %v3494
      %v3496 = vpop.f32.mrb[0].mxu0
      %v3497 = vpop.f32.mrb[0].mxu0
      %v3498 = vadd.f32 %v3145, %v3497
      %v3499 = vpop.f32.mrb[0].mxu0
      %3500 = vdwg.mxu0
      %3501 = vmatprep.subr.bf16.mxu0 0
      %3502 = vmatpush1.bf16.msra.mxu0 %v363
      %3503 = vmatprep.subr.bf16.mxu0 0
      %3504 = vmatpush1.bf16.msra.mxu0 %v364
      %3505 = vmatprep.subr.bf16.mxu0 0
      %3506 = vmatpush1.bf16.msra.mxu0 %v365
      %3507 = vmatprep.subr.bf16.mxu0 0
      %3508 = vmatpush1.bf16.msra.mxu0 %v366
      %3509 = vmatprep.subr.bf16.mxu0 0
      %3510 = vmatpush1.bf16.msra.mxu0 %v367
      %3511 = vmatprep.subr.bf16.mxu0 0
      %3512 = vmatpush1.bf16.msra.mxu0 %v368
      %3513 = vmatprep.subr.bf16.mxu0 0
      %3514 = vmatpush1.bf16.msra.mxu0 %v369
      %3515 = vmatprep.subr.bf16.mxu0 0
      %3516 = vmatpush1.bf16.msra.mxu0 %v370
      %3517 = vmatprep.subr.bf16.mxu0 0
      %3518 = vmatpush1.bf16.msra.mxu0 %v371
      %3519 = vmatprep.subr.bf16.mxu0 0
      %3520 = vmatpush1.bf16.msra.mxu0 %v372
      %3521 = vmatprep.subr.bf16.mxu0 0
      %3522 = vmatpush1.bf16.msra.mxu0 %v373
      %3523 = vmatprep.subr.bf16.mxu0 0
      %3524 = vmatpush1.bf16.msra.mxu0 %v374
      %3525 = vmatprep.subr.bf16.mxu0 0
      %3526 = vmatpush1.bf16.msra.mxu0 %v375
      %3527 = vmatprep.subr.bf16.mxu0 0
      %3528 = vmatpush1.bf16.msra.mxu0 %v376
      %3529 = vmatprep.subr.bf16.mxu0 0
      %3530 = vmatpush1.bf16.msra.mxu0 %v377
      %3531 = vmatprep.subr.bf16.mxu0 0
      %3532 = vmatpush1.bf16.msra.mxu0 %v378
      %3533 = vmatprep.mubr.bf16.mxu0 %v2160
      %3534 = vmatmul.mubr.bf16.gmra.mrb[0].mxu0 %v2159
      %v3535 = vpop.f32.mrb[0].mxu0
      %v3536 = vadd.f32 %v3183, %v3535
      %v3537 = vpop.f32.mrb[0].mxu0
      %v3538 = vpop.f32.mrb[0].mxu0
      %v3539 = vadd.f32 %v3186, %v3538
      %v3540 = vpop.f32.mrb[0].mxu0
      %3541 = vmatprep.mubr.bf16.mxu0 %v2168
      %3542 = vmatmul.mubr.bf16.gmra.mrb[0].mxu0 %v2167
      %v3543 = vpop.f32.mrb[0].mxu0
      %v3544 = vadd.f32 %v3191, %v3543
      %v3545 = vpop.f32.mrb[0].mxu0
      %v3546 = vpop.f32.mrb[0].mxu0
      %v3547 = vadd.f32 %v3194, %v3546
      %v3548 = vpop.f32.mrb[0].mxu0
      %3549 = vmatprep.mubr.bf16.mxu0 %v2176
      %3550 = vmatmul.mubr.bf16.gmra.mrb[0].mxu0 %v2175
      %v3551 = vpop.f32.mrb[0].mxu0
      %v3552 = vadd.f32 %v3199, %v3551
      %v3553 = vpop.f32.mrb[0].mxu0
      %v3554 = vpop.f32.mrb[0].mxu0
      %v3555 = vadd.f32 %v3202, %v3554
      %v3556 = vpop.f32.mrb[0].mxu0
      %3557 = vmatprep.mubr.bf16.mxu0 %v2184
      %3558 = vmatmul.mubr.bf16.gmra.mrb[0].mxu0 %v2183
      %v3559 = vpop.f32.mrb[0].mxu0
      %v3560 = vadd.f32 %v3207, %v3559
      %v3561 = vpop.f32.mrb[0].mxu0
      %v3562 = vpop.f32.mrb[0].mxu0
      %v3563 = vadd.f32 %v3210, %v3562
      %v3564 = vpop.f32.mrb[0].mxu0
      %3565 = vmatprep.mubr.bf16.mxu0 %v2192
      %3566 = vmatmul.mubr.bf16.gmra.mrb[0].mxu0 %v2191
      %v3567 = vpop.f32.mrb[0].mxu0
      %v3568 = vadd.f32 %v3215, %v3567
      %v3569 = vpop.f32.mrb[0].mxu0
      %v3570 = vpop.f32.mrb[0].mxu0
      %v3571 = vadd.f32 %v3218, %v3570
      %v3572 = vpop.f32.mrb[0].mxu0
      %3573 = vmatprep.mubr.bf16.mxu0 %v2200
      %3574 = vmatmul.mubr.bf16.gmra.mrb[0].mxu0 %v2199
      %v3575 = vpop.f32.mrb[0].mxu0
      %v3576 = vadd.f32 %v3223, %v3575
      %v3577 = vpop.f32.mrb[0].mxu0
      %v3578 = vpop.f32.mrb[0].mxu0
      %v3579 = vadd.f32 %v3226, %v3578
      %v3580 = vpop.f32.mrb[0].mxu0
      %3581 = vmatprep.mubr.bf16.mxu0 %v2208
      %3582 = vmatmul.mubr.bf16.gmra.mrb[0].mxu0 %v2207
      %v3583 = vpop.f32.mrb[0].mxu0
      %v3584 = vadd.f32 %v3231, %v3583
      %v3585 = vpop.f32.mrb[0].mxu0
      %v3586 = vpop.f32.mrb[0].mxu0
      %v3587 = vadd.f32 %v3234, %v3586
      %v3588 = vpop.f32.mrb[0].mxu0
      %3589 = vmatprep.mubr.bf16.mxu0 %v2216
      %3590 = vmatmul.mubr.bf16.gmra.mrb[0].mxu0 %v2215
      %v3591 = vpop.f32.mrb[0].mxu0
      %v3592 = vadd.f32 %v3239, %v3591
      %v3593 = vpop.f32.mrb[0].mxu0
      %v3594 = vpop.f32.mrb[0].mxu0
      %v3595 = vadd.f32 %v3242, %v3594
      %v3596 = vpop.f32.mrb[0].mxu0
      %3597 = vmatprep.mubr.bf16.mxu0 %v2224
      %3598 = vmatmul.mubr.bf16.gmra.mrb[0].mxu0 %v2223
      %v3599 = vpop.f32.mrb[0].mxu0
      %v3600 = vadd.f32 %v3247, %v3599
      %v3601 = vpop.f32.mrb[0].mxu0
      %v3602 = vpop.f32.mrb[0].mxu0
      %v3603 = vadd.f32 %v3250, %v3602
      %v3604 = vpop.f32.mrb[0].mxu0
      %3605 = vmatprep.mubr.bf16.mxu0 %v2232
      %3606 = vmatmul.mubr.bf16.gmra.mrb[0].mxu0 %v2231
      %v3607 = vpop.f32.mrb[0].mxu0
      %v3608 = vadd.f32 %v3255, %v3607
      %v3609 = vpop.f32.mrb[0].mxu0
      %v3610 = vpop.f32.mrb[0].mxu0
      %v3611 = vadd.f32 %v3258, %v3610
      %v3612 = vpop.f32.mrb[0].mxu0
      %3613 = vmatprep.mubr.bf16.mxu0 %v2240
      %3614 = vmatmul.mubr.bf16.gmra.mrb[0].mxu0 %v2239
      %v3615 = vpop.f32.mrb[0].mxu0
      %v3616 = vadd.f32 %v3263, %v3615
      %v3617 = vpop.f32.mrb[0].mxu0
      %v3618 = vpop.f32.mrb[0].mxu0
      %v3619 = vadd.f32 %v3266, %v3618
      %v3620 = vpop.f32.mrb[0].mxu0
      %3621 = vmatprep.mubr.bf16.mxu0 %v2248
      %3622 = vmatmul.mubr.bf16.gmra.mrb[0].mxu0 %v2247
      %v3623 = vpop.f32.mrb[0].mxu0
      %v3624 = vadd.f32 %v3271, %v3623
      %v3625 = vpop.f32.mrb[0].mxu0
      %v3626 = vpop.f32.mrb[0].mxu0
      %v3627 = vadd.f32 %v3274, %v3626
      %v3628 = vpop.f32.mrb[0].mxu0
      %3629 = vmatprep.mubr.bf16.mxu0 %v2256
      %3630 = vmatmul.mubr.bf16.gmra.mrb[0].mxu0 %v2255
      %v3631 = vpop.f32.mrb[0].mxu0
      %v3632 = vadd.f32 %v3279, %v3631
      %v3633 = vpop.f32.mrb[0].mxu0
      %v3634 = vpop.f32.mrb[0].mxu0
      %v3635 = vadd.f32 %v3282, %v3634
      %v3636 = vpop.f32.mrb[0].mxu0
      %3637 = vmatprep.mubr.bf16.mxu0 %v2264
      %3638 = vmatmul.mubr.bf16.gmra.mrb[0].mxu0 %v2263
      %v3639 = vpop.f32.mrb[0].mxu0
      %v3640 = vadd.f32 %v3287, %v3639
      %v3641 = vpop.f32.mrb[0].mxu0
      %v3642 = vpop.f32.mrb[0].mxu0
      %v3643 = vadd.f32 %v3290, %v3642
      %v3644 = vpop.f32.mrb[0].mxu0
      %3645 = vmatprep.mubr.bf16.mxu0 %v2272
      %3646 = vmatmul.mubr.bf16.gmra.mrb[0].mxu0 %v2271
      %v3647 = vpop.f32.mrb[0].mxu0
      %v3648 = vadd.f32 %v3295, %v3647
      %v3649 = vpop.f32.mrb[0].mxu0
      %v3650 = vpop.f32.mrb[0].mxu0
      %v3651 = vadd.f32 %v3298, %v3650
      %v3652 = vpop.f32.mrb[0].mxu0
      %3653 = vmatprep.mubr.bf16.mxu0 %v2280
      %3654 = vmatmul.mubr.bf16.gmra.mrb[0].mxu0 %v2279
      %v3655 = vpop.f32.mrb[0].mxu0
      %v3656 = vadd.f32 %v3303, %v3655
      %v3657 = vpop.f32.mrb[0].mxu0
      %v3658 = vpop.f32.mrb[0].mxu0
      %v3659 = vadd.f32 %v3306, %v3658
      %v3660 = vpop.f32.mrb[0].mxu0
      %3661 = vmatprep.mubr.bf16.mxu0 %v2288
      %3662 = vmatmul.mubr.bf16.gmra.mrb[0].mxu0 %v2287
      %v3663 = vpop.f32.mrb[0].mxu0
      %v3664 = vadd.f32 %v3311, %v3663
      %v3665 = vpop.f32.mrb[0].mxu0
      %v3666 = vpop.f32.mrb[0].mxu0
      %v3667 = vadd.f32 %v3314, %v3666
      %v3668 = vpop.f32.mrb[0].mxu0
      %3669 = vmatprep.mubr.bf16.mxu0 %v2296
      %3670 = vmatmul.mubr.bf16.gmra.mrb[0].mxu0 %v2295
      %v3671 = vpop.f32.mrb[0].mxu0
      %v3672 = vadd.f32 %v3319, %v3671
      %v3673 = vpop.f32.mrb[0].mxu0
      %v3674 = vpop.f32.mrb[0].mxu0
      %v3675 = vadd.f32 %v3322, %v3674
      %v3676 = vpop.f32.mrb[0].mxu0
      %3677 = vmatprep.mubr.bf16.mxu0 %v2304
      %3678 = vmatmul.mubr.bf16.gmra.mrb[0].mxu0 %v2303
      %v3679 = vpop.f32.mrb[0].mxu0
      %v3680 = vadd.f32 %v3327, %v3679
      %v3681 = vpop.f32.mrb[0].mxu0
      %v3682 = vpop.f32.mrb[0].mxu0
      %v3683 = vadd.f32 %v3330, %v3682
      %v3684 = vpop.f32.mrb[0].mxu0
      %3685 = vmatprep.mubr.bf16.mxu0 %v2312
      %3686 = vmatmul.mubr.bf16.gmra.mrb[0].mxu0 %v2311
      %v3687 = vpop.f32.mrb[0].mxu0
      %v3688 = vadd.f32 %v3335, %v3687
      %v3689 = vpop.f32.mrb[0].mxu0
      %v3690 = vpop.f32.mrb[0].mxu0
      %v3691 = vadd.f32 %v3338, %v3690
      %v3692 = vpop.f32.mrb[0].mxu0
      %3693 = vmatprep.mubr.bf16.mxu0 %v2320
      %3694 = vmatmul.mubr.bf16.gmra.mrb[0].mxu0 %v2319
      %v3695 = vpop.f32.mrb[0].mxu0
      %v3696 = vadd.f32 %v3343, %v3695
      %v3697 = vpop.f32.mrb[0].mxu0
      %v3698 = vpop.f32.mrb[0].mxu0
      %v3699 = vadd.f32 %v3346, %v3698
      %v3700 = vpop.f32.mrb[0].mxu0
      %3701 = vmatprep.mubr.bf16.mxu0 %v2328
      %3702 = vmatmul.mubr.bf16.gmra.mrb[0].mxu0 %v2327
      %v3703 = vpop.f32.mrb[0].mxu0
      %v3704 = vadd.f32 %v3351, %v3703
      %v3705 = vpop.f32.mrb[0].mxu0
      %v3706 = vpop.f32.mrb[0].mxu0
      %v3707 = vadd.f32 %v3354, %v3706
      %v3708 = vpop.f32.mrb[0].mxu0
      %3709 = vmatprep.mubr.bf16.mxu0 %v2336
      %3710 = vmatmul.mubr.bf16.gmra.mrb[0].mxu0 %v2335
      %v3711 = vpop.f32.mrb[0].mxu0
      %v3712 = vadd.f32 %v3359, %v3711
      %v3713 = vpop.f32.mrb[0].mxu0
      %v3714 = vpop.f32.mrb[0].mxu0
      %v3715 = vadd.f32 %v3362, %v3714
      %v3716 = vpop.f32.mrb[0].mxu0
      %3717 = vmatprep.mubr.bf16.mxu0 %v2344
      %3718 = vmatmul.mubr.bf16.gmra.mrb[0].mxu0 %v2343
      %v3719 = vpop.f32.mrb[0].mxu0
      %v3720 = vadd.f32 %v3367, %v3719
      %v3721 = vpop.f32.mrb[0].mxu0
      %v3722 = vpop.f32.mrb[0].mxu0
      %v3723 = vadd.f32 %v3370, %v3722
      %v3724 = vpop.f32.mrb[0].mxu0
      %3725 = vmatprep.mubr.bf16.mxu0 %v2352
      %3726 = vmatmul.mubr.bf16.gmra.mrb[0].mxu0 %v2351
      %v3727 = vpop.f32.mrb[0].mxu0
      %v3728 = vadd.f32 %v3375, %v3727
      %v3729 = vpop.f32.mrb[0].mxu0
      %v3730 = vpop.f32.mrb[0].mxu0
      %v3731 = vadd.f32 %v3378, %v3730
      %v3732 = vpop.f32.mrb[0].mxu0
      %3733 = vmatprep.mubr.bf16.mxu0 %v2360
      %3734 = vmatmul.mubr.bf16.gmra.mrb[0].mxu0 %v2359
      %v3735 = vpop.f32.mrb[0].mxu0
      %v3736 = vadd.f32 %v3383, %v3735
      %v3737 = vpop.f32.mrb[0].mxu0
      %v3738 = vpop.f32.mrb[0].mxu0
      %v3739 = vadd.f32 %v3386, %v3738
      %v3740 = vpop.f32.mrb[0].mxu0
      %3741 = vmatprep.mubr.bf16.mxu0 %v2368
      %3742 = vmatmul.mubr.bf16.gmra.mrb[0].mxu0 %v2367
      %v3743 = vpop.f32.mrb[0].mxu0
      %v3744 = vadd.f32 %v3391, %v3743
      %v3745 = vpop.f32.mrb[0].mxu0
      %v3746 = vpop.f32.mrb[0].mxu0
      %v3747 = vadd.f32 %v3394, %v3746
      %v3748 = vpop.f32.mrb[0].mxu0
      %3749 = vmatprep.mubr.bf16.mxu0 %v2376
      %3750 = vmatmul.mubr.bf16.gmra.mrb[0].mxu0 %v2375
      %v3751 = vpop.f32.mrb[0].mxu0
      %v3752 = vadd.f32 %v3399, %v3751
      %v3753 = vpop.f32.mrb[0].mxu0
      %v3754 = vpop.f32.mrb[0].mxu0
      %v3755 = vadd.f32 %v3402, %v3754
      %v3756 = vpop.f32.mrb[0].mxu0
      %3757 = vmatprep.mubr.bf16.mxu0 %v2384
      %3758 = vmatmul.mubr.bf16.gmra.mrb[0].mxu0 %v2383
      %v3759 = vpop.f32.mrb[0].mxu0
      %v3760 = vadd.f32 %v3407, %v3759
      %v3761 = vpop.f32.mrb[0].mxu0
      %v3762 = vpop.f32.mrb[0].mxu0
      %v3763 = vadd.f32 %v3410, %v3762
      %v3764 = vpop.f32.mrb[0].mxu0
      %3765 = vmatprep.mubr.bf16.mxu0 %v2392
      %3766 = vmatmul.mubr.bf16.gmra.mrb[0].mxu0 %v2391
      %v3767 = vpop.f32.mrb[0].mxu0
      %v3768 = vadd.f32 %v3415, %v3767
      %v3769 = vpop.f32.mrb[0].mxu0
      %v3770 = vpop.f32.mrb[0].mxu0
      %v3771 = vadd.f32 %v3418, %v3770
      %v3772 = vpop.f32.mrb[0].mxu0
      %3773 = vmatprep.mubr.bf16.mxu0 %v2400
      %3774 = vmatmul.mubr.bf16.gmra.mrb[0].mxu0 %v2399
      %v3775 = vpop.f32.mrb[0].mxu0
      %v3776 = vadd.f32 %v3423, %v3775
      %v3777 = vpop.f32.mrb[0].mxu0
      %v3778 = vpop.f32.mrb[0].mxu0
      %v3779 = vadd.f32 %v3426, %v3778
      %v3780 = vpop.f32.mrb[0].mxu0
      %3781 = vmatprep.mubr.bf16.mxu0 %v2408
      %3782 = vmatmul.mubr.bf16.gmra.mrb[0].mxu0 %v2407
      %v3783 = vpop.f32.mrb[0].mxu0
      %v3784 = vadd.f32 %v3431, %v3783
      %v3785 = vpop.f32.mrb[0].mxu0
      %v3786 = vpop.f32.mrb[0].mxu0
      %v3787 = vadd.f32 %v3434, %v3786
      %v3788 = vpop.f32.mrb[0].mxu0
      %3789 = vmatprep.mubr.bf16.mxu0 %v2416
      %3790 = vmatmul.mubr.bf16.gmra.mrb[0].mxu0 %v2415
      %v3791 = vpop.f32.mrb[0].mxu0
      %v3792 = vadd.f32 %v3439, %v3791
      %v3793 = vpop.f32.mrb[0].mxu0
      %v3794 = vpop.f32.mrb[0].mxu0
      %v3795 = vadd.f32 %v3442, %v3794
      %v3796 = vpop.f32.mrb[0].mxu0
      %3797 = vmatprep.mubr.bf16.mxu0 %v2424
      %3798 = vmatmul.mubr.bf16.gmra.mrb[0].mxu0 %v2423
      %v3799 = vpop.f32.mrb[0].mxu0
      %v3800 = vadd.f32 %v3447, %v3799
      %v3801 = vpop.f32.mrb[0].mxu0
      %v3802 = vpop.f32.mrb[0].mxu0
      %v3803 = vadd.f32 %v3450, %v3802
      %v3804 = vpop.f32.mrb[0].mxu0
      %3805 = vmatprep.mubr.bf16.mxu0 %v2432
      %3806 = vmatmul.mubr.bf16.gmra.mrb[0].mxu0 %v2431
      %v3807 = vpop.f32.mrb[0].mxu0
      %v3808 = vadd.f32 %v3455, %v3807
      %v3809 = vpop.f32.mrb[0].mxu0
      %v3810 = vpop.f32.mrb[0].mxu0
      %v3811 = vadd.f32 %v3458, %v3810
      %v3812 = vpop.f32.mrb[0].mxu0
      %3813 = vmatprep.mubr.bf16.mxu0 %v2440
      %3814 = vmatmul.mubr.bf16.gmra.mrb[0].mxu0 %v2439
      %v3815 = vpop.f32.mrb[0].mxu0
      %v3816 = vadd.f32 %v3463, %v3815
      %v3817 = vpop.f32.mrb[0].mxu0
      %v3818 = vpop.f32.mrb[0].mxu0
      %v3819 = vadd.f32 %v3466, %v3818
      %v3820 = vpop.f32.mrb[0].mxu0
      %3821 = vmatprep.mubr.bf16.mxu0 %v2448
      %3822 = vmatmul.mubr.bf16.gmra.mrb[0].mxu0 %v2447
      %v3823 = vpop.f32.mrb[0].mxu0
      %v3824 = vadd.f32 %v3471, %v3823
      %v3825 = vpop.f32.mrb[0].mxu0
      %v3826 = vpop.f32.mrb[0].mxu0
      %v3827 = vadd.f32 %v3474, %v3826
      %v3828 = vpop.f32.mrb[0].mxu0
      %3829 = vmatprep.mubr.bf16.mxu0 %v2456
      %3830 = vmatmul.mubr.bf16.gmra.mrb[0].mxu0 %v2455
      %v3831 = vpop.f32.mrb[0].mxu0
      %v3832 = vadd.f32 %v3479, %v3831
      %v3833 = vpop.f32.mrb[0].mxu0
      %v3834 = vpop.f32.mrb[0].mxu0
      %v3835 = vadd.f32 %v3482, %v3834
      %v3836 = vpop.f32.mrb[0].mxu0
      %3837 = vmatprep.mubr.bf16.mxu0 %v2464
      %3838 = vmatmul.mubr.bf16.gmra.mrb[0].mxu0 %v2463
      %v3839 = vpop.f32.mrb[0].mxu0
      %v3840 = vadd.f32 %v3487, %v3839
      %v3841 = vpop.f32.mrb[0].mxu0
      %v3842 = vpop.f32.mrb[0].mxu0
      %v3843 = vadd.f32 %v3490, %v3842
      %v3844 = vpop.f32.mrb[0].mxu0
      %3845 = vmatprep.mubr.bf16.mxu0 %v2472
      %3846 = vmatmul.mubr.bf16.gmra.mrb[0].mxu0 %v2471
      %v3847 = vpop.f32.mrb[0].mxu0
      %v3848 = vadd.f32 %v3495, %v3847
      %v3849 = vpop.f32.mrb[0].mxu0
      %v3850 = vpop.f32.mrb[0].mxu0
      %v3851 = vadd.f32 %v3498, %v3850
      %v3852 = vpop.f32.mrb[0].mxu0
      %3853 = vdwg.mxu0
      %3854 = vmatprep.subr.bf16.mxu0 0
      %3855 = vmatpush1.bf16.msra.mxu0 %v379
      %3856 = vmatprep.subr.bf16.mxu0 0
      %3857 = vmatpush1.bf16.msra.mxu0 %v380
      %3858 = vmatprep.subr.bf16.mxu0 0
      %3859 = vmatpush1.bf16.msra.mxu0 %v381
      %3860 = vmatprep.subr.bf16.mxu0 0
      %3861 = vmatpush1.bf16.msra.mxu0 %v382
      %3862 = vmatprep.subr.bf16.mxu0 0
      %3863 = vmatpush1.bf16.msra.mxu0 %v383
      %3864 = vmatprep.subr.bf16.mxu0 0
      %3865 = vmatpush1.bf16.msra.mxu0 %v384
      %3866 = vmatprep.subr.bf16.mxu0 0
      %3867 = vmatpush1.bf16.msra.mxu0 %v385
      %3868 = vmatprep.subr.bf16.mxu0 0
      %3869 = vmatpush1.bf16.msra.mxu0 %v386
      %3870 = vmatprep.subr.bf16.mxu0 0
      %3871 = vmatpush1.bf16.msra.mxu0 %v387
      %3872 = vmatprep.subr.bf16.mxu0 0
      %3873 = vmatpush1.bf16.msra.mxu0 %v388
      %3874 = vmatprep.subr.bf16.mxu0 0
      %3875 = vmatpush1.bf16.msra.mxu0 %v389
      %3876 = vmatprep.subr.bf16.mxu0 0
      %3877 = vmatpush1.bf16.msra.mxu0 %v390
      %3878 = vmatprep.subr.bf16.mxu0 0
      %3879 = vmatpush1.bf16.msra.mxu0 %v391
      %3880 = vmatprep.subr.bf16.mxu0 0
      %3881 = vmatpush1.bf16.msra.mxu0 %v392
      %3882 = vmatprep.subr.bf16.mxu0 0
      %3883 = vmatpush1.bf16.msra.mxu0 %v393
      %3884 = vmatprep.subr.bf16.mxu0 0
      %3885 = vmatpush1.bf16.msra.mxu0 %v394
      %3886 = vmatprep.mubr.bf16.mxu0 %v2162
      %3887 = vmatmul.mubr.bf16.gmra.mrb[0].mxu0 %v2161
      %v3888 = vpop.f32.mrb[0].mxu0
      %v3889 = vadd.f32 %v3536, %v3888
      %v3890 = vpop.f32.mrb[0].mxu0
      %v3891 = vpop.f32.mrb[0].mxu0
      %v3892 = vadd.f32 %v3539, %v3891
      %v3893 = vpop.f32.mrb[0].mxu0
      %3894 = vmatprep.mubr.bf16.mxu0 %v2170
      %3895 = vmatmul.mubr.bf16.gmra.mrb[0].mxu0 %v2169
      %v3896 = vpop.f32.mrb[0].mxu0
      %v3897 = vadd.f32 %v3544, %v3896
      %v3898 = vpop.f32.mrb[0].mxu0
      %v3899 = vpop.f32.mrb[0].mxu0
      %v3900 = vadd.f32 %v3547, %v3899
      %v3901 = vpop.f32.mrb[0].mxu0
      %3902 = vmatprep.mubr.bf16.mxu0 %v2178
      %3903 = vmatmul.mubr.bf16.gmra.mrb[0].mxu0 %v2177
      %v3904 = vpop.f32.mrb[0].mxu0
      %v3905 = vadd.f32 %v3552, %v3904
      %v3906 = vpop.f32.mrb[0].mxu0
      %v3907 = vpop.f32.mrb[0].mxu0
      %v3908 = vadd.f32 %v3555, %v3907
      %v3909 = vpop.f32.mrb[0].mxu0
      %3910 = vmatprep.mubr.bf16.mxu0 %v2186
      %3911 = vmatmul.mubr.bf16.gmra.mrb[0].mxu0 %v2185
      %v3912 = vpop.f32.mrb[0].mxu0
      %v3913 = vadd.f32 %v3560, %v3912
      %v3914 = vpop.f32.mrb[0].mxu0
      %v3915 = vpop.f32.mrb[0].mxu0
      %v3916 = vadd.f32 %v3563, %v3915
      %v3917 = vpop.f32.mrb[0].mxu0
      %3918 = vmatprep.mubr.bf16.mxu0 %v2194
      %3919 = vmatmul.mubr.bf16.gmra.mrb[0].mxu0 %v2193
      %v3920 = vpop.f32.mrb[0].mxu0
      %v3921 = vadd.f32 %v3568, %v3920
      %v3922 = vpop.f32.mrb[0].mxu0
      %v3923 = vpop.f32.mrb[0].mxu0
      %v3924 = vadd.f32 %v3571, %v3923
      %v3925 = vpop.f32.mrb[0].mxu0
      %3926 = vmatprep.mubr.bf16.mxu0 %v2202
      %3927 = vmatmul.mubr.bf16.gmra.mrb[0].mxu0 %v2201
      %v3928 = vpop.f32.mrb[0].mxu0
      %v3929 = vadd.f32 %v3576, %v3928
      %v3930 = vpop.f32.mrb[0].mxu0
      %v3931 = vpop.f32.mrb[0].mxu0
      %v3932 = vadd.f32 %v3579, %v3931
      %v3933 = vpop.f32.mrb[0].mxu0
      %3934 = vmatprep.mubr.bf16.mxu0 %v2210
      %3935 = vmatmul.mubr.bf16.gmra.mrb[0].mxu0 %v2209
      %v3936 = vpop.f32.mrb[0].mxu0
      %v3937 = vadd.f32 %v3584, %v3936
      %v3938 = vpop.f32.mrb[0].mxu0
      %v3939 = vpop.f32.mrb[0].mxu0
      %v3940 = vadd.f32 %v3587, %v3939
      %v3941 = vpop.f32.mrb[0].mxu0
      %3942 = vmatprep.mubr.bf16.mxu0 %v2218
      %3943 = vmatmul.mubr.bf16.gmra.mrb[0].mxu0 %v2217
      %v3944 = vpop.f32.mrb[0].mxu0
      %v3945 = vadd.f32 %v3592, %v3944
      %v3946 = vpop.f32.mrb[0].mxu0
      %v3947 = vpop.f32.mrb[0].mxu0
      %v3948 = vadd.f32 %v3595, %v3947
      %v3949 = vpop.f32.mrb[0].mxu0
      %3950 = vmatprep.mubr.bf16.mxu0 %v2226
      %3951 = vmatmul.mubr.bf16.gmra.mrb[0].mxu0 %v2225
      %v3952 = vpop.f32.mrb[0].mxu0
      %v3953 = vadd.f32 %v3600, %v3952
      %v3954 = vpop.f32.mrb[0].mxu0
      %v3955 = vpop.f32.mrb[0].mxu0
      %v3956 = vadd.f32 %v3603, %v3955
      %v3957 = vpop.f32.mrb[0].mxu0
      %3958 = vmatprep.mubr.bf16.mxu0 %v2234
      %3959 = vmatmul.mubr.bf16.gmra.mrb[0].mxu0 %v2233
      %v3960 = vpop.f32.mrb[0].mxu0
      %v3961 = vadd.f32 %v3608, %v3960
      %v3962 = vpop.f32.mrb[0].mxu0
      %v3963 = vpop.f32.mrb[0].mxu0
      %v3964 = vadd.f32 %v3611, %v3963
      %v3965 = vpop.f32.mrb[0].mxu0
      %3966 = vmatprep.mubr.bf16.mxu0 %v2242
      %3967 = vmatmul.mubr.bf16.gmra.mrb[0].mxu0 %v2241
      %v3968 = vpop.f32.mrb[0].mxu0
      %v3969 = vadd.f32 %v3616, %v3968
      %v3970 = vpop.f32.mrb[0].mxu0
      %v3971 = vpop.f32.mrb[0].mxu0
      %v3972 = vadd.f32 %v3619, %v3971
      %v3973 = vpop.f32.mrb[0].mxu0
      %3974 = vmatprep.mubr.bf16.mxu0 %v2250
      %3975 = vmatmul.mubr.bf16.gmra.mrb[0].mxu0 %v2249
      %v3976 = vpop.f32.mrb[0].mxu0
      %v3977 = vadd.f32 %v3624, %v3976
      %v3978 = vpop.f32.mrb[0].mxu0
      %v3979 = vpop.f32.mrb[0].mxu0
      %v3980 = vadd.f32 %v3627, %v3979
      %v3981 = vpop.f32.mrb[0].mxu0
      %3982 = vmatprep.mubr.bf16.mxu0 %v2258
      %3983 = vmatmul.mubr.bf16.gmra.mrb[0].mxu0 %v2257
      %v3984 = vpop.f32.mrb[0].mxu0
      %v3985 = vadd.f32 %v3632, %v3984
      %v3986 = vpop.f32.mrb[0].mxu0
      %v3987 = vpop.f32.mrb[0].mxu0
      %v3988 = vadd.f32 %v3635, %v3987
      %v3989 = vpop.f32.mrb[0].mxu0
      %3990 = vmatprep.mubr.bf16.mxu0 %v2266
      %3991 = vmatmul.mubr.bf16.gmra.mrb[0].mxu0 %v2265
      %v3992 = vpop.f32.mrb[0].mxu0
      %v3993 = vadd.f32 %v3640, %v3992
      %v3994 = vpop.f32.mrb[0].mxu0
      %v3995 = vpop.f32.mrb[0].mxu0
      %v3996 = vadd.f32 %v3643, %v3995
      %v3997 = vpop.f32.mrb[0].mxu0
      %3998 = vmatprep.mubr.bf16.mxu0 %v2274
      %3999 = vmatmul.mubr.bf16.gmra.mrb[0].mxu0 %v2273
      %v4000 = vpop.f32.mrb[0].mxu0
      %v4001 = vadd.f32 %v3648, %v4000
      %v4002 = vpop.f32.mrb[0].mxu0
      %v4003 = vpop.f32.mrb[0].mxu0
      %v4004 = vadd.f32 %v3651, %v4003
      %v4005 = vpop.f32.mrb[0].mxu0
      %4006 = vmatprep.mubr.bf16.mxu0 %v2282
      %4007 = vmatmul.mubr.bf16.gmra.mrb[0].mxu0 %v2281
      %v4008 = vpop.f32.mrb[0].mxu0
      %v4009 = vadd.f32 %v3656, %v4008
      %v4010 = vpop.f32.mrb[0].mxu0
      %v4011 = vpop.f32.mrb[0].mxu0
      %v4012 = vadd.f32 %v3659, %v4011
      %v4013 = vpop.f32.mrb[0].mxu0
      %4014 = vmatprep.mubr.bf16.mxu0 %v2290
      %4015 = vmatmul.mubr.bf16.gmra.mrb[0].mxu0 %v2289
      %v4016 = vpop.f32.mrb[0].mxu0
      %v4017 = vadd.f32 %v3664, %v4016
      %v4018 = vpop.f32.mrb[0].mxu0
      %v4019 = vpop.f32.mrb[0].mxu0
      %v4020 = vadd.f32 %v3667, %v4019
      %v4021 = vpop.f32.mrb[0].mxu0
      %4022 = vmatprep.mubr.bf16.mxu0 %v2298
      %4023 = vmatmul.mubr.bf16.gmra.mrb[0].mxu0 %v2297
      %v4024 = vpop.f32.mrb[0].mxu0
      %v4025 = vadd.f32 %v3672, %v4024
      %v4026 = vpop.f32.mrb[0].mxu0
      %v4027 = vpop.f32.mrb[0].mxu0
      %v4028 = vadd.f32 %v3675, %v4027
      %v4029 = vpop.f32.mrb[0].mxu0
      %4030 = vmatprep.mubr.bf16.mxu0 %v2306
      %4031 = vmatmul.mubr.bf16.gmra.mrb[0].mxu0 %v2305
      %v4032 = vpop.f32.mrb[0].mxu0
      %v4033 = vadd.f32 %v3680, %v4032
      %v4034 = vpop.f32.mrb[0].mxu0
      %v4035 = vpop.f32.mrb[0].mxu0
      %v4036 = vadd.f32 %v3683, %v4035
      %v4037 = vpop.f32.mrb[0].mxu0
      %4038 = vmatprep.mubr.bf16.mxu0 %v2314
      %4039 = vmatmul.mubr.bf16.gmra.mrb[0].mxu0 %v2313
      %v4040 = vpop.f32.mrb[0].mxu0
      %v4041 = vadd.f32 %v3688, %v4040
      %v4042 = vpop.f32.mrb[0].mxu0
      %v4043 = vpop.f32.mrb[0].mxu0
      %v4044 = vadd.f32 %v3691, %v4043
      %v4045 = vpop.f32.mrb[0].mxu0
      %4046 = vmatprep.mubr.bf16.mxu0 %v2322
      %4047 = vmatmul.mubr.bf16.gmra.mrb[0].mxu0 %v2321
      %v4048 = vpop.f32.mrb[0].mxu0
      %v4049 = vadd.f32 %v3696, %v4048
      %v4050 = vpop.f32.mrb[0].mxu0
      %v4051 = vpop.f32.mrb[0].mxu0
      %v4052 = vadd.f32 %v3699, %v4051
      %v4053 = vpop.f32.mrb[0].mxu0
      %4054 = vmatprep.mubr.bf16.mxu0 %v2330
      %4055 = vmatmul.mubr.bf16.gmra.mrb[0].mxu0 %v2329
      %v4056 = vpop.f32.mrb[0].mxu0
      %v4057 = vadd.f32 %v3704, %v4056
      %v4058 = vpop.f32.mrb[0].mxu0
      %v4059 = vpop.f32.mrb[0].mxu0
      %v4060 = vadd.f32 %v3707, %v4059
      %v4061 = vpop.f32.mrb[0].mxu0
      %4062 = vmatprep.mubr.bf16.mxu0 %v2338
      %4063 = vmatmul.mubr.bf16.gmra.mrb[0].mxu0 %v2337
      %v4064 = vpop.f32.mrb[0].mxu0
      %v4065 = vadd.f32 %v3712, %v4064
      %v4066 = vpop.f32.mrb[0].mxu0
      %v4067 = vpop.f32.mrb[0].mxu0
      %v4068 = vadd.f32 %v3715, %v4067
      %v4069 = vpop.f32.mrb[0].mxu0
      %4070 = vmatprep.mubr.bf16.mxu0 %v2346
      %4071 = vmatmul.mubr.bf16.gmra.mrb[0].mxu0 %v2345
      %v4072 = vpop.f32.mrb[0].mxu0
      %v4073 = vadd.f32 %v3720, %v4072
      %v4074 = vpop.f32.mrb[0].mxu0
      %v4075 = vpop.f32.mrb[0].mxu0
      %v4076 = vadd.f32 %v3723, %v4075
      %v4077 = vpop.f32.mrb[0].mxu0
      %4078 = vmatprep.mubr.bf16.mxu0 %v2354
      %4079 = vmatmul.mubr.bf16.gmra.mrb[0].mxu0 %v2353
      %v4080 = vpop.f32.mrb[0].mxu0
      %v4081 = vadd.f32 %v3728, %v4080
      %v4082 = vpop.f32.mrb[0].mxu0
      %v4083 = vpop.f32.mrb[0].mxu0
      %v4084 = vadd.f32 %v3731, %v4083
      %v4085 = vpop.f32.mrb[0].mxu0
      %4086 = vmatprep.mubr.bf16.mxu0 %v2362
      %4087 = vmatmul.mubr.bf16.gmra.mrb[0].mxu0 %v2361
      %v4088 = vpop.f32.mrb[0].mxu0
      %v4089 = vadd.f32 %v3736, %v4088
      %v4090 = vpop.f32.mrb[0].mxu0
      %v4091 = vpop.f32.mrb[0].mxu0
      %v4092 = vadd.f32 %v3739, %v4091
      %v4093 = vpop.f32.mrb[0].mxu0
      %4094 = vmatprep.mubr.bf16.mxu0 %v2370
      %4095 = vmatmul.mubr.bf16.gmra.mrb[0].mxu0 %v2369
      %v4096 = vpop.f32.mrb[0].mxu0
      %v4097 = vadd.f32 %v3744, %v4096
      %v4098 = vpop.f32.mrb[0].mxu0
      %v4099 = vpop.f32.mrb[0].mxu0
      %v4100 = vadd.f32 %v3747, %v4099
      %v4101 = vpop.f32.mrb[0].mxu0
      %4102 = vmatprep.mubr.bf16.mxu0 %v2378
      %4103 = vmatmul.mubr.bf16.gmra.mrb[0].mxu0 %v2377
      %v4104 = vpop.f32.mrb[0].mxu0
      %v4105 = vadd.f32 %v3752, %v4104
      %v4106 = vpop.f32.mrb[0].mxu0
      %v4107 = vpop.f32.mrb[0].mxu0
      %v4108 = vadd.f32 %v3755, %v4107
      %v4109 = vpop.f32.mrb[0].mxu0
      %4110 = vmatprep.mubr.bf16.mxu0 %v2386
      %4111 = vmatmul.mubr.bf16.gmra.mrb[0].mxu0 %v2385
      %v4112 = vpop.f32.mrb[0].mxu0
      %v4113 = vadd.f32 %v3760, %v4112
      %v4114 = vpop.f32.mrb[0].mxu0
      %v4115 = vpop.f32.mrb[0].mxu0
      %v4116 = vadd.f32 %v3763, %v4115
      %v4117 = vpop.f32.mrb[0].mxu0
      %4118 = vmatprep.mubr.bf16.mxu0 %v2394
      %4119 = vmatmul.mubr.bf16.gmra.mrb[0].mxu0 %v2393
      %v4120 = vpop.f32.mrb[0].mxu0
      %v4121 = vadd.f32 %v3768, %v4120
      %v4122 = vpop.f32.mrb[0].mxu0
      %v4123 = vpop.f32.mrb[0].mxu0
      %v4124 = vadd.f32 %v3771, %v4123
      %v4125 = vpop.f32.mrb[0].mxu0
      %4126 = vmatprep.mubr.bf16.mxu0 %v2402
      %4127 = vmatmul.mubr.bf16.gmra.mrb[0].mxu0 %v2401
      %v4128 = vpop.f32.mrb[0].mxu0
      %v4129 = vadd.f32 %v3776, %v4128
      %v4130 = vpop.f32.mrb[0].mxu0
      %v4131 = vpop.f32.mrb[0].mxu0
      %v4132 = vadd.f32 %v3779, %v4131
      %v4133 = vpop.f32.mrb[0].mxu0
      %4134 = vmatprep.mubr.bf16.mxu0 %v2410
      %4135 = vmatmul.mubr.bf16.gmra.mrb[0].mxu0 %v2409
      %v4136 = vpop.f32.mrb[0].mxu0
      %v4137 = vadd.f32 %v3784, %v4136
      %v4138 = vpop.f32.mrb[0].mxu0
      %v4139 = vpop.f32.mrb[0].mxu0
      %v4140 = vadd.f32 %v3787, %v4139
      %v4141 = vpop.f32.mrb[0].mxu0
      %4142 = vmatprep.mubr.bf16.mxu0 %v2418
      %4143 = vmatmul.mubr.bf16.gmra.mrb[0].mxu0 %v2417
      %v4144 = vpop.f32.mrb[0].mxu0
      %v4145 = vadd.f32 %v3792, %v4144
      %v4146 = vpop.f32.mrb[0].mxu0
      %v4147 = vpop.f32.mrb[0].mxu0
      %v4148 = vadd.f32 %v3795, %v4147
      %v4149 = vpop.f32.mrb[0].mxu0
      %4150 = vmatprep.mubr.bf16.mxu0 %v2426
      %4151 = vmatmul.mubr.bf16.gmra.mrb[0].mxu0 %v2425
      %v4152 = vpop.f32.mrb[0].mxu0
      %v4153 = vadd.f32 %v3800, %v4152
      %v4154 = vpop.f32.mrb[0].mxu0
      %v4155 = vpop.f32.mrb[0].mxu0
      %v4156 = vadd.f32 %v3803, %v4155
      %v4157 = vpop.f32.mrb[0].mxu0
      %4158 = vmatprep.mubr.bf16.mxu0 %v2434
      %4159 = vmatmul.mubr.bf16.gmra.mrb[0].mxu0 %v2433
      %v4160 = vpop.f32.mrb[0].mxu0
      %v4161 = vadd.f32 %v3808, %v4160
      %v4162 = vpop.f32.mrb[0].mxu0
      %v4163 = vpop.f32.mrb[0].mxu0
      %v4164 = vadd.f32 %v3811, %v4163
      %v4165 = vpop.f32.mrb[0].mxu0
      %4166 = vmatprep.mubr.bf16.mxu0 %v2442
      %4167 = vmatmul.mubr.bf16.gmra.mrb[0].mxu0 %v2441
      %v4168 = vpop.f32.mrb[0].mxu0
      %v4169 = vadd.f32 %v3816, %v4168
      %v4170 = vpop.f32.mrb[0].mxu0
      %v4171 = vpop.f32.mrb[0].mxu0
      %v4172 = vadd.f32 %v3819, %v4171
      %v4173 = vpop.f32.mrb[0].mxu0
      %4174 = vmatprep.mubr.bf16.mxu0 %v2450
      %4175 = vmatmul.mubr.bf16.gmra.mrb[0].mxu0 %v2449
      %v4176 = vpop.f32.mrb[0].mxu0
      %v4177 = vadd.f32 %v3824, %v4176
      %v4178 = vpop.f32.mrb[0].mxu0
      %v4179 = vpop.f32.mrb[0].mxu0
      %v4180 = vadd.f32 %v3827, %v4179
      %v4181 = vpop.f32.mrb[0].mxu0
      %4182 = vmatprep.mubr.bf16.mxu0 %v2458
      %4183 = vmatmul.mubr.bf16.gmra.mrb[0].mxu0 %v2457
      %v4184 = vpop.f32.mrb[0].mxu0
      %v4185 = vadd.f32 %v3832, %v4184
      %v4186 = vpop.f32.mrb[0].mxu0
      %v4187 = vpop.f32.mrb[0].mxu0
      %v4188 = vadd.f32 %v3835, %v4187
      %v4189 = vpop.f32.mrb[0].mxu0
      %4190 = vmatprep.mubr.bf16.mxu0 %v2466
      %4191 = vmatmul.mubr.bf16.gmra.mrb[0].mxu0 %v2465
      %v4192 = vpop.f32.mrb[0].mxu0
      %v4193 = vadd.f32 %v3840, %v4192
      %v4194 = vpop.f32.mrb[0].mxu0
      %v4195 = vpop.f32.mrb[0].mxu0
      %v4196 = vadd.f32 %v3843, %v4195
      %v4197 = vpop.f32.mrb[0].mxu0
      %4198 = vmatprep.mubr.bf16.mxu0 %v2474
      %4199 = vmatmul.mubr.bf16.gmra.mrb[0].mxu0 %v2473
      %v4200 = vpop.f32.mrb[0].mxu0
      %v4201 = vadd.f32 %v3848, %v4200
      %v4202 = vpop.f32.mrb[0].mxu0
      %v4203 = vpop.f32.mrb[0].mxu0
      %v4204 = vadd.f32 %v3851, %v4203
      %v4205 = vpop.f32.mrb[0].mxu0
      %4206 = vdwg.mxu0
      %v4207 = vmul.f32 %v3889, 2.0
      %v4208 = vmul.f32 %v3892, 2.0
      %v4209 = vmul.f32 %v3897, 2.0
      %v4210 = vmul.f32 %v3900, 2.0
      %v4211 = vmul.f32 %v3905, 2.0
      %v4212 = vmul.f32 %v3908, 2.0
      %v4213 = vmul.f32 %v3913, 2.0
      %v4214 = vmul.f32 %v3916, 2.0
      %v4215 = vmul.f32 %v3921, 2.0
      %v4216 = vmul.f32 %v3924, 2.0
      %v4217 = vmul.f32 %v3929, 2.0
      %v4218 = vmul.f32 %v3932, 2.0
      %v4219 = vmul.f32 %v3937, 2.0
      %v4220 = vmul.f32 %v3940, 2.0
      %v4221 = vmul.f32 %v3945, 2.0
      %v4222 = vmul.f32 %v3948, 2.0
      %v4223 = vmul.f32 %v3953, 2.0
      %v4224 = vmul.f32 %v3956, 2.0
      %v4225 = vmul.f32 %v3961, 2.0
      %v4226 = vmul.f32 %v3964, 2.0
      %v4227 = vmul.f32 %v3969, 2.0
      %v4228 = vmul.f32 %v3972, 2.0
      %v4229 = vmul.f32 %v3977, 2.0
      %v4230 = vmul.f32 %v3980, 2.0
      %v4231 = vmul.f32 %v3985, 2.0
      %v4232 = vmul.f32 %v3988, 2.0
      %v4233 = vmul.f32 %v3993, 2.0
      %v4234 = vmul.f32 %v3996, 2.0
      %v4235 = vmul.f32 %v4001, 2.0
      %v4236 = vmul.f32 %v4004, 2.0
      %v4237 = vmul.f32 %v4009, 2.0
      %v4238 = vmul.f32 %v4012, 2.0
      %v4239 = vmul.f32 %v4017, 2.0
      %v4240 = vmul.f32 %v4020, 2.0
      %v4241 = vmul.f32 %v4025, 2.0
      %v4242 = vmul.f32 %v4028, 2.0
      %v4243 = vmul.f32 %v4033, 2.0
      %v4244 = vmul.f32 %v4036, 2.0
      %v4245 = vmul.f32 %v4041, 2.0
      %v4246 = vmul.f32 %v4044, 2.0
      %v4247 = vmul.f32 %v4049, 2.0
      %v4248 = vmul.f32 %v4052, 2.0
      %v4249 = vmul.f32 %v4057, 2.0
      %v4250 = vmul.f32 %v4060, 2.0
      %v4251 = vmul.f32 %v4065, 2.0
      %v4252 = vmul.f32 %v4068, 2.0
      %v4253 = vmul.f32 %v4073, 2.0
      %v4254 = vmul.f32 %v4076, 2.0
      %v4255 = vmul.f32 %v4081, 2.0
      %v4256 = vmul.f32 %v4084, 2.0
      %v4257 = vmul.f32 %v4089, 2.0
      %v4258 = vmul.f32 %v4092, 2.0
      %v4259 = vmul.f32 %v4097, 2.0
      %v4260 = vmul.f32 %v4100, 2.0
      %v4261 = vmul.f32 %v4105, 2.0
      %v4262 = vmul.f32 %v4108, 2.0
      %v4263 = vmul.f32 %v4113, 2.0
      %v4264 = vmul.f32 %v4116, 2.0
      %v4265 = vmul.f32 %v4121, 2.0
      %v4266 = vmul.f32 %v4124, 2.0
      %v4267 = vmul.f32 %v4129, 2.0
      %v4268 = vmul.f32 %v4132, 2.0
      %v4269 = vmul.f32 %v4137, 2.0
      %v4270 = vmul.f32 %v4140, 2.0
      %v4271 = vmul.f32 %v4145, 2.0
      %v4272 = vmul.f32 %v4148, 2.0
      %v4273 = vmul.f32 %v4153, 2.0
      %v4274 = vmul.f32 %v4156, 2.0
      %v4275 = vmul.f32 %v4161, 2.0
      %v4276 = vmul.f32 %v4164, 2.0
      %v4277 = vmul.f32 %v4169, 2.0
      %v4278 = vmul.f32 %v4172, 2.0
      %v4279 = vmul.f32 %v4177, 2.0
      %v4280 = vmul.f32 %v4180, 2.0
      %v4281 = vmul.f32 %v4185, 2.0
      %v4282 = vmul.f32 %v4188, 2.0
      %v4283 = vmul.f32 %v4193, 2.0
      %v4284 = vmul.f32 %v4196, 2.0
      %v4285 = vmul.f32 %v4201, 2.0
      %v4286 = vmul.f32 %v4204, 2.0
      %v4287 = vmul.f32 %v3889, %v3889
      %v4288 = vmul.f32 %v3892, %v3892
      %v4289 = vmul.f32 %v3897, %v3897
      %v4290 = vmul.f32 %v3900, %v3900
      %v4291 = vmul.f32 %v3905, %v3905
      %v4292 = vmul.f32 %v3908, %v3908
      %v4293 = vmul.f32 %v3913, %v3913
      %v4294 = vmul.f32 %v3916, %v3916
      %v4295 = vmul.f32 %v3921, %v3921
      %v4296 = vmul.f32 %v3924, %v3924
      %v4297 = vmul.f32 %v3929, %v3929
      %v4298 = vmul.f32 %v3932, %v3932
      %v4299 = vmul.f32 %v3937, %v3937
      %v4300 = vmul.f32 %v3940, %v3940
      %v4301 = vmul.f32 %v3945, %v3945
      %v4302 = vmul.f32 %v3948, %v3948
      %v4303 = vmul.f32 %v3953, %v3953
      %v4304 = vmul.f32 %v3956, %v3956
      %v4305 = vmul.f32 %v3961, %v3961
      %v4306 = vmul.f32 %v3964, %v3964
      %v4307 = vmul.f32 %v3969, %v3969
      %v4308 = vmul.f32 %v3972, %v3972
      %v4309 = vmul.f32 %v3977, %v3977
      %v4310 = vmul.f32 %v3980, %v3980
      %v4311 = vmul.f32 %v3985, %v3985
      %v4312 = vmul.f32 %v3988, %v3988
      %v4313 = vmul.f32 %v3993, %v3993
      %v4314 = vmul.f32 %v3996, %v3996
      %v4315 = vmul.f32 %v4001, %v4001
      %v4316 = vmul.f32 %v4004, %v4004
      %v4317 = vmul.f32 %v4009, %v4009
      %v4318 = vmul.f32 %v4012, %v4012
      %v4319 = vmul.f32 %v4017, %v4017
      %v4320 = vmul.f32 %v4020, %v4020
      %v4321 = vmul.f32 %v4025, %v4025
      %v4322 = vmul.f32 %v4028, %v4028
      %v4323 = vmul.f32 %v4033, %v4033
      %v4324 = vmul.f32 %v4036, %v4036
      %v4325 = vmul.f32 %v4041, %v4041
      %v4326 = vmul.f32 %v4044, %v4044
      %v4327 = vmul.f32 %v4049, %v4049
      %v4328 = vmul.f32 %v4052, %v4052
      %v4329 = vmul.f32 %v4057, %v4057
      %v4330 = vmul.f32 %v4060, %v4060
      %v4331 = vmul.f32 %v4065, %v4065
      %v4332 = vmul.f32 %v4068, %v4068
      %v4333 = vmul.f32 %v4073, %v4073
      %v4334 = vmul.f32 %v4076, %v4076
      %v4335 = vmul.f32 %v4081, %v4081
      %v4336 = vmul.f32 %v4084, %v4084
      %v4337 = vmul.f32 %v4089, %v4089
      %v4338 = vmul.f32 %v4092, %v4092
      %v4339 = vmul.f32 %v4097, %v4097
      %v4340 = vmul.f32 %v4100, %v4100
      %v4341 = vmul.f32 %v4105, %v4105
      %v4342 = vmul.f32 %v4108, %v4108
      %v4343 = vmul.f32 %v4113, %v4113
      %v4344 = vmul.f32 %v4116, %v4116
      %v4345 = vmul.f32 %v4121, %v4121
      %v4346 = vmul.f32 %v4124, %v4124
      %v4347 = vmul.f32 %v4129, %v4129
      %v4348 = vmul.f32 %v4132, %v4132
      %v4349 = vmul.f32 %v4137, %v4137
      %v4350 = vmul.f32 %v4140, %v4140
      %v4351 = vmul.f32 %v4145, %v4145
      %v4352 = vmul.f32 %v4148, %v4148
      %v4353 = vmul.f32 %v4153, %v4153
      %v4354 = vmul.f32 %v4156, %v4156
      %v4355 = vmul.f32 %v4161, %v4161
      %v4356 = vmul.f32 %v4164, %v4164
      %v4357 = vmul.f32 %v4169, %v4169
      %v4358 = vmul.f32 %v4172, %v4172
      %v4359 = vmul.f32 %v4177, %v4177
      %v4360 = vmul.f32 %v4180, %v4180
      %v4361 = vmul.f32 %v4185, %v4185
      %v4362 = vmul.f32 %v4188, %v4188
      %v4363 = vmul.f32 %v4193, %v4193
      %v4364 = vmul.f32 %v4196, %v4196
      %v4365 = vmul.f32 %v4201, %v4201
      %v4366 = vmul.f32 %v4204, %v4204
      %v4367 = vmul.f32 %v4287, %v3889
      %v4368 = vmul.f32 %v4288, %v3892
      %v4369 = vmul.f32 %v4289, %v3897
      %v4370 = vmul.f32 %v4290, %v3900
      %v4371 = vmul.f32 %v4291, %v3905
      %v4372 = vmul.f32 %v4292, %v3908
      %v4373 = vmul.f32 %v4293, %v3913
      %v4374 = vmul.f32 %v4294, %v3916
      %v4375 = vmul.f32 %v4295, %v3921
      %v4376 = vmul.f32 %v4296, %v3924
      %v4377 = vmul.f32 %v4297, %v3929
      %v4378 = vmul.f32 %v4298, %v3932
      %v4379 = vmul.f32 %v4299, %v3937
      %v4380 = vmul.f32 %v4300, %v3940
      %v4381 = vmul.f32 %v4301, %v3945
      %v4382 = vmul.f32 %v4302, %v3948
      %v4383 = vmul.f32 %v4303, %v3953
      %v4384 = vmul.f32 %v4304, %v3956
      %v4385 = vmul.f32 %v4305, %v3961
      %v4386 = vmul.f32 %v4306, %v3964
      %v4387 = vmul.f32 %v4307, %v3969
      %v4388 = vmul.f32 %v4308, %v3972
      %v4389 = vmul.f32 %v4309, %v3977
      %v4390 = vmul.f32 %v4310, %v3980
      %v4391 = vmul.f32 %v4311, %v3985
      %v4392 = vmul.f32 %v4312, %v3988
      %v4393 = vmul.f32 %v4313, %v3993
      %v4394 = vmul.f32 %v4314, %v3996
      %v4395 = vmul.f32 %v4315, %v4001
      %v4396 = vmul.f32 %v4316, %v4004
      %v4397 = vmul.f32 %v4317, %v4009
      %v4398 = vmul.f32 %v4318, %v4012
      %v4399 = vmul.f32 %v4319, %v4017
      %v4400 = vmul.f32 %v4320, %v4020
      %v4401 = vmul.f32 %v4321, %v4025
      %v4402 = vmul.f32 %v4322, %v4028
      %v4403 = vmul.f32 %v4323, %v4033
      %v4404 = vmul.f32 %v4324, %v4036
      %v4405 = vmul.f32 %v4325, %v4041
      %v4406 = vmul.f32 %v4326, %v4044
      %v4407 = vmul.f32 %v4327, %v4049
      %v4408 = vmul.f32 %v4328, %v4052
      %v4409 = vmul.f32 %v4329, %v4057
      %v4410 = vmul.f32 %v4330, %v4060
      %v4411 = vmul.f32 %v4331, %v4065
      %v4412 = vmul.f32 %v4332, %v4068
      %v4413 = vmul.f32 %v4333, %v4073
      %v4414 = vmul.f32 %v4334, %v4076
      %v4415 = vmul.f32 %v4335, %v4081
      %v4416 = vmul.f32 %v4336, %v4084
      %v4417 = vmul.f32 %v4337, %v4089
      %v4418 = vmul.f32 %v4338, %v4092
      %v4419 = vmul.f32 %v4339, %v4097
      %v4420 = vmul.f32 %v4340, %v4100
      %v4421 = vmul.f32 %v4341, %v4105
      %v4422 = vmul.f32 %v4342, %v4108
      %v4423 = vmul.f32 %v4343, %v4113
      %v4424 = vmul.f32 %v4344, %v4116
      %v4425 = vmul.f32 %v4345, %v4121
      %v4426 = vmul.f32 %v4346, %v4124
      %v4427 = vmul.f32 %v4347, %v4129
      %v4428 = vmul.f32 %v4348, %v4132
      %v4429 = vmul.f32 %v4349, %v4137
      %v4430 = vmul.f32 %v4350, %v4140
      %v4431 = vmul.f32 %v4351, %v4145
      %v4432 = vmul.f32 %v4352, %v4148
      %v4433 = vmul.f32 %v4353, %v4153
      %v4434 = vmul.f32 %v4354, %v4156
      %v4435 = vmul.f32 %v4355, %v4161
      %v4436 = vmul.f32 %v4356, %v4164
      %v4437 = vmul.f32 %v4357, %v4169
      %v4438 = vmul.f32 %v4358, %v4172
      %v4439 = vmul.f32 %v4359, %v4177
      %v4440 = vmul.f32 %v4360, %v4180
      %v4441 = vmul.f32 %v4361, %v4185
      %v4442 = vmul.f32 %v4362, %v4188
      %v4443 = vmul.f32 %v4363, %v4193
      %v4444 = vmul.f32 %v4364, %v4196
      %v4445 = vmul.f32 %v4365, %v4201
      %v4446 = vmul.f32 %v4366, %v4204
      %v4447 = vmul.f32 %v4367, 0.35772
      %v4448 = vmul.f32 %v4368, 0.35772
      %v4449 = vmul.f32 %v4369, 0.35772
      %v4450 = vmul.f32 %v4370, 0.35772
      %v4451 = vmul.f32 %v4371, 0.35772
      %v4452 = vmul.f32 %v4372, 0.35772
      %v4453 = vmul.f32 %v4373, 0.35772
      %v4454 = vmul.f32 %v4374, 0.35772
      %v4455 = vmul.f32 %v4375, 0.35772
      %v4456 = vmul.f32 %v4376, 0.35772
      %v4457 = vmul.f32 %v4377, 0.35772
      %v4458 = vmul.f32 %v4378, 0.35772
      %v4459 = vmul.f32 %v4379, 0.35772
      %v4460 = vmul.f32 %v4380, 0.35772
      %v4461 = vmul.f32 %v4381, 0.35772
      %v4462 = vmul.f32 %v4382, 0.35772
      %v4463 = vmul.f32 %v4383, 0.35772
      %v4464 = vmul.f32 %v4384, 0.35772
      %v4465 = vmul.f32 %v4385, 0.35772
      %v4466 = vmul.f32 %v4386, 0.35772
      %v4467 = vmul.f32 %v4387, 0.35772
      %v4468 = vmul.f32 %v4388, 0.35772
      %v4469 = vmul.f32 %v4389, 0.35772
      %v4470 = vmul.f32 %v4390, 0.35772
      %v4471 = vmul.f32 %v4391, 0.35772
      %v4472 = vmul.f32 %v4392, 0.35772
      %v4473 = vmul.f32 %v4393, 0.35772
      %v4474 = vmul.f32 %v4394, 0.35772
      %v4475 = vmul.f32 %v4395, 0.35772
      %v4476 = vmul.f32 %v4396, 0.35772
      %v4477 = vmul.f32 %v4397, 0.35772
      %v4478 = vmul.f32 %v4398, 0.35772
      %v4479 = vmul.f32 %v4399, 0.35772
      %v4480 = vmul.f32 %v4400, 0.35772
      %v4481 = vmul.f32 %v4401, 0.35772
      %v4482 = vmul.f32 %v4402, 0.35772
      %v4483 = vmul.f32 %v4403, 0.35772
      %v4484 = vmul.f32 %v4404, 0.35772
      %v4485 = vmul.f32 %v4405, 0.35772
      %v4486 = vmul.f32 %v4406, 0.35772
      %v4487 = vmul.f32 %v4407, 0.35772
      %v4488 = vmul.f32 %v4408, 0.35772
      %v4489 = vmul.f32 %v4409, 0.35772
      %v4490 = vmul.f32 %v4410, 0.35772
      %v4491 = vmul.f32 %v4411, 0.35772
      %v4492 = vmul.f32 %v4412, 0.35772
      %v4493 = vmul.f32 %v4413, 0.35772
      %v4494 = vmul.f32 %v4414, 0.35772
      %v4495 = vmul.f32 %v4415, 0.35772
      %v4496 = vmul.f32 %v4416, 0.35772
      %v4497 = vmul.f32 %v4417, 0.35772
      %v4498 = vmul.f32 %v4418, 0.35772
      %v4499 = vmul.f32 %v4419, 0.35772
      %v4500 = vmul.f32 %v4420, 0.35772
      %v4501 = vmul.f32 %v4421, 0.35772
      %v4502 = vmul.f32 %v4422, 0.35772
      %v4503 = vmul.f32 %v4423, 0.35772
      %v4504 = vmul.f32 %v4424, 0.35772
      %v4505 = vmul.f32 %v4425, 0.35772
      %v4506 = vmul.f32 %v4426, 0.35772
      %v4507 = vmul.f32 %v4427, 0.35772
      %v4508 = vmul.f32 %v4428, 0.35772
      %v4509 = vmul.f32 %v4429, 0.35772
      %v4510 = vmul.f32 %v4430, 0.35772
      %v4511 = vmul.f32 %v4431, 0.35772
      %v4512 = vmul.f32 %v4432, 0.35772
      %v4513 = vmul.f32 %v4433, 0.35772
      %v4514 = vmul.f32 %v4434, 0.35772
      %v4515 = vmul.f32 %v4435, 0.35772
      %v4516 = vmul.f32 %v4436, 0.35772
      %v4517 = vmul.f32 %v4437, 0.35772
      %v4518 = vmul.f32 %v4438, 0.35772
      %v4519 = vmul.f32 %v4439, 0.35772
      %v4520 = vmul.f32 %v4440, 0.35772
      %v4521 = vmul.f32 %v4441, 0.35772
      %v4522 = vmul.f32 %v4442, 0.35772
      %v4523 = vmul.f32 %v4443, 0.35772
      %v4524 = vmul.f32 %v4444, 0.35772
      %v4525 = vmul.f32 %v4445, 0.35772
      %v4526 = vmul.f32 %v4446, 0.35772
      %v4527 = vadd.f32 %v4207, %v4447
      %v4528 = vadd.f32 %v4208, %v4448
      %v4529 = vadd.f32 %v4209, %v4449
      %v4530 = vadd.f32 %v4210, %v4450
      %v4531 = vadd.f32 %v4211, %v4451
      %v4532 = vadd.f32 %v4212, %v4452
      %v4533 = vadd.f32 %v4213, %v4453
      %v4534 = vadd.f32 %v4214, %v4454
      %v4535 = vadd.f32 %v4215, %v4455
      %v4536 = vadd.f32 %v4216, %v4456
      %v4537 = vadd.f32 %v4217, %v4457
      %v4538 = vadd.f32 %v4218, %v4458
      %v4539 = vadd.f32 %v4219, %v4459
      %v4540 = vadd.f32 %v4220, %v4460
      %v4541 = vadd.f32 %v4221, %v4461
      %v4542 = vadd.f32 %v4222, %v4462
      %v4543 = vadd.f32 %v4223, %v4463
      %v4544 = vadd.f32 %v4224, %v4464
      %v4545 = vadd.f32 %v4225, %v4465
      %v4546 = vadd.f32 %v4226, %v4466
      %v4547 = vadd.f32 %v4227, %v4467
      %v4548 = vadd.f32 %v4228, %v4468
      %v4549 = vadd.f32 %v4229, %v4469
      %v4550 = vadd.f32 %v4230, %v4470
      %v4551 = vadd.f32 %v4231, %v4471
      %v4552 = vadd.f32 %v4232, %v4472
      %v4553 = vadd.f32 %v4233, %v4473
      %v4554 = vadd.f32 %v4234, %v4474
      %v4555 = vadd.f32 %v4235, %v4475
      %v4556 = vadd.f32 %v4236, %v4476
      %v4557 = vadd.f32 %v4237, %v4477
      %v4558 = vadd.f32 %v4238, %v4478
      %v4559 = vadd.f32 %v4239, %v4479
      %v4560 = vadd.f32 %v4240, %v4480
      %v4561 = vadd.f32 %v4241, %v4481
      %v4562 = vadd.f32 %v4242, %v4482
      %v4563 = vadd.f32 %v4243, %v4483
      %v4564 = vadd.f32 %v4244, %v4484
      %v4565 = vadd.f32 %v4245, %v4485
      %v4566 = vadd.f32 %v4246, %v4486
      %v4567 = vadd.f32 %v4247, %v4487
      %v4568 = vadd.f32 %v4248, %v4488
      %v4569 = vadd.f32 %v4249, %v4489
      %v4570 = vadd.f32 %v4250, %v4490
      %v4571 = vadd.f32 %v4251, %v4491
      %v4572 = vadd.f32 %v4252, %v4492
      %v4573 = vadd.f32 %v4253, %v4493
      %v4574 = vadd.f32 %v4254, %v4494
      %v4575 = vadd.f32 %v4255, %v4495
      %v4576 = vadd.f32 %v4256, %v4496
      %v4577 = vadd.f32 %v4257, %v4497
      %v4578 = vadd.f32 %v4258, %v4498
      %v4579 = vadd.f32 %v4259, %v4499
      %v4580 = vadd.f32 %v4260, %v4500
      %v4581 = vadd.f32 %v4261, %v4501
      %v4582 = vadd.f32 %v4262, %v4502
      %v4583 = vadd.f32 %v4263, %v4503
      %v4584 = vadd.f32 %v4264, %v4504
      %v4585 = vadd.f32 %v4265, %v4505
      %v4586 = vadd.f32 %v4266, %v4506
      %v4587 = vadd.f32 %v4267, %v4507
      %v4588 = vadd.f32 %v4268, %v4508
      %v4589 = vadd.f32 %v4269, %v4509
      %v4590 = vadd.f32 %v4270, %v4510
      %v4591 = vadd.f32 %v4271, %v4511
      %v4592 = vadd.f32 %v4272, %v4512
      %v4593 = vadd.f32 %v4273, %v4513
      %v4594 = vadd.f32 %v4274, %v4514
      %v4595 = vadd.f32 %v4275, %v4515
      %v4596 = vadd.f32 %v4276, %v4516
      %v4597 = vadd.f32 %v4277, %v4517
      %v4598 = vadd.f32 %v4278, %v4518
      %v4599 = vadd.f32 %v4279, %v4519
      %v4600 = vadd.f32 %v4280, %v4520
      %v4601 = vadd.f32 %v4281, %v4521
      %v4602 = vadd.f32 %v4282, %v4522
      %v4603 = vadd.f32 %v4283, %v4523
      %v4604 = vadd.f32 %v4284, %v4524
      %v4605 = vadd.f32 %v4285, %v4525
      %v4606 = vadd.f32 %v4286, %v4526
      %v4607 = vmul.f32 %v4527, 0.7978846
      %v4608 = vmul.f32 %v4528, 0.7978846
      %v4609 = vmul.f32 %v4529, 0.7978846
      %v4610 = vmul.f32 %v4530, 0.7978846
      %v4611 = vmul.f32 %v4531, 0.7978846
      %v4612 = vmul.f32 %v4532, 0.7978846
      %v4613 = vmul.f32 %v4533, 0.7978846
      %v4614 = vmul.f32 %v4534, 0.7978846
      %v4615 = vmul.f32 %v4535, 0.7978846
      %v4616 = vmul.f32 %v4536, 0.7978846
      %v4617 = vmul.f32 %v4537, 0.7978846
      %v4618 = vmul.f32 %v4538, 0.7978846
      %v4619 = vmul.f32 %v4539, 0.7978846
      %v4620 = vmul.f32 %v4540, 0.7978846
      %v4621 = vmul.f32 %v4541, 0.7978846
      %v4622 = vmul.f32 %v4542, 0.7978846
      %v4623 = vmul.f32 %v4543, 0.7978846
      %v4624 = vmul.f32 %v4544, 0.7978846
      %v4625 = vmul.f32 %v4545, 0.7978846
      %v4626 = vmul.f32 %v4546, 0.7978846
      %v4627 = vmul.f32 %v4547, 0.7978846
      %v4628 = vmul.f32 %v4548, 0.7978846
      %v4629 = vmul.f32 %v4549, 0.7978846
      %v4630 = vmul.f32 %v4550, 0.7978846
      %v4631 = vmul.f32 %v4551, 0.7978846
      %v4632 = vmul.f32 %v4552, 0.7978846
      %v4633 = vmul.f32 %v4553, 0.7978846
      %v4634 = vmul.f32 %v4554, 0.7978846
      %v4635 = vmul.f32 %v4555, 0.7978846
      %v4636 = vmul.f32 %v4556, 0.7978846
      %v4637 = vmul.f32 %v4557, 0.7978846
      %v4638 = vmul.f32 %v4558, 0.7978846
      %v4639 = vmul.f32 %v4559, 0.7978846
      %v4640 = vmul.f32 %v4560, 0.7978846
      %v4641 = vmul.f32 %v4561, 0.7978846
      %v4642 = vmul.f32 %v4562, 0.7978846
      %v4643 = vmul.f32 %v4563, 0.7978846
      %v4644 = vmul.f32 %v4564, 0.7978846
      %v4645 = vmul.f32 %v4565, 0.7978846
      %v4646 = vmul.f32 %v4566, 0.7978846
      %v4647 = vmul.f32 %v4567, 0.7978846
      %v4648 = vmul.f32 %v4568, 0.7978846
      %v4649 = vmul.f32 %v4569, 0.7978846
      %v4650 = vmul.f32 %v4570, 0.7978846
      %v4651 = vmul.f32 %v4571, 0.7978846
      %v4652 = vmul.f32 %v4572, 0.7978846
      %v4653 = vmul.f32 %v4573, 0.7978846
      %v4654 = vmul.f32 %v4574, 0.7978846
      %v4655 = vmul.f32 %v4575, 0.7978846
      %v4656 = vmul.f32 %v4576, 0.7978846
      %v4657 = vmul.f32 %v4577, 0.7978846
      %v4658 = vmul.f32 %v4578, 0.7978846
      %v4659 = vmul.f32 %v4579, 0.7978846
      %v4660 = vmul.f32 %v4580, 0.7978846
      %v4661 = vmul.f32 %v4581, 0.7978846
      %v4662 = vmul.f32 %v4582, 0.7978846
      %v4663 = vmul.f32 %v4583, 0.7978846
      %v4664 = vmul.f32 %v4584, 0.7978846
      %v4665 = vmul.f32 %v4585, 0.7978846
      %v4666 = vmul.f32 %v4586, 0.7978846
      %v4667 = vmul.f32 %v4587, 0.7978846
      %v4668 = vmul.f32 %v4588, 0.7978846
      %v4669 = vmul.f32 %v4589, 0.7978846
      %v4670 = vmul.f32 %v4590, 0.7978846
      %v4671 = vmul.f32 %v4591, 0.7978846
      %v4672 = vmul.f32 %v4592, 0.7978846
      %v4673 = vmul.f32 %v4593, 0.7978846
      %v4674 = vmul.f32 %v4594, 0.7978846
      %v4675 = vmul.f32 %v4595, 0.7978846
      %v4676 = vmul.f32 %v4596, 0.7978846
      %v4677 = vmul.f32 %v4597, 0.7978846
      %v4678 = vmul.f32 %v4598, 0.7978846
      %v4679 = vmul.f32 %v4599, 0.7978846
      %v4680 = vmul.f32 %v4600, 0.7978846
      %v4681 = vmul.f32 %v4601, 0.7978846
      %v4682 = vmul.f32 %v4602, 0.7978846
      %v4683 = vmul.f32 %v4603, 0.7978846
      %v4684 = vmul.f32 %v4604, 0.7978846
      %v4685 = vmul.f32 %v4605, 0.7978846
      %v4686 = vmul.f32 %v4606, 0.7978846
      %v4687 = vtanh.pop %v4607
      %v4688 = vtanh.pop %v4608
      %v4689 = vtanh.pop %v4609
      %v4690 = vtanh.pop %v4610
      %v4691 = vtanh.pop %v4611
      %v4692 = vtanh.pop %v4612
      %v4693 = vtanh.pop %v4613
      %v4694 = vtanh.pop %v4614
      %v4695 = vtanh.pop %v4615
      %v4696 = vtanh.pop %v4616
      %v4697 = vtanh.pop %v4617
      %v4698 = vtanh.pop %v4618
      %v4699 = vtanh.pop %v4619
      %v4700 = vtanh.pop %v4620
      %v4701 = vtanh.pop %v4621
      %v4702 = vtanh.pop %v4622
      %v4703 = vtanh.pop %v4623
      %v4704 = vtanh.pop %v4624
      %v4705 = vtanh.pop %v4625
      %v4706 = vtanh.pop %v4626
      %v4707 = vtanh.pop %v4627
      %v4708 = vtanh.pop %v4628
      %v4709 = vtanh.pop %v4629
      %v4710 = vtanh.pop %v4630
      %v4711 = vtanh.pop %v4631
      %v4712 = vtanh.pop %v4632
      %v4713 = vtanh.pop %v4633
      %v4714 = vtanh.pop %v4634
      %v4715 = vtanh.pop %v4635
      %v4716 = vtanh.pop %v4636
      %v4717 = vtanh.pop %v4637
      %v4718 = vtanh.pop %v4638
      %v4719 = vtanh.pop %v4639
      %v4720 = vtanh.pop %v4640
      %v4721 = vtanh.pop %v4641
      %v4722 = vtanh.pop %v4642
      %v4723 = vtanh.pop %v4643
      %v4724 = vtanh.pop %v4644
      %v4725 = vtanh.pop %v4645
      %v4726 = vtanh.pop %v4646
      %v4727 = vtanh.pop %v4647
      %v4728 = vtanh.pop %v4648
      %v4729 = vtanh.pop %v4649
      %v4730 = vtanh.pop %v4650
      %v4731 = vtanh.pop %v4651
      %v4732 = vtanh.pop %v4652
      %v4733 = vtanh.pop %v4653
      %v4734 = vtanh.pop %v4654
      %v4735 = vtanh.pop %v4655
      %v4736 = vtanh.pop %v4656
      %v4737 = vtanh.pop %v4657
      %v4738 = vtanh.pop %v4658
      %v4739 = vtanh.pop %v4659
      %v4740 = vtanh.pop %v4660
      %v4741 = vtanh.pop %v4661
      %v4742 = vtanh.pop %v4662
      %v4743 = vtanh.pop %v4663
      %v4744 = vtanh.pop %v4664
      %v4745 = vtanh.pop %v4665
      %v4746 = vtanh.pop %v4666
      %v4747 = vtanh.pop %v4667
      %v4748 = vtanh.pop %v4668
      %v4749 = vtanh.pop %v4669
      %v4750 = vtanh.pop %v4670
      %v4751 = vtanh.pop %v4671
      %v4752 = vtanh.pop %v4672
      %v4753 = vtanh.pop %v4673
      %v4754 = vtanh.pop %v4674
      %v4755 = vtanh.pop %v4675
      %v4756 = vtanh.pop %v4676
      %v4757 = vtanh.pop %v4677
      %v4758 = vtanh.pop %v4678
      %v4759 = vtanh.pop %v4679
      %v4760 = vtanh.pop %v4680
      %v4761 = vtanh.pop %v4681
      %v4762 = vtanh.pop %v4682
      %v4763 = vtanh.pop %v4683
      %v4764 = vtanh.pop %v4684
      %v4765 = vtanh.pop %v4685
      %v4766 = vtanh.pop %v4686
      %v4767 = vadd.f32 %v4687, 1.0
      %v4768 = vadd.f32 %v4688, 1.0
      %v4769 = vadd.f32 %v4689, 1.0
      %v4770 = vadd.f32 %v4690, 1.0
      %v4771 = vadd.f32 %v4691, 1.0
      %v4772 = vadd.f32 %v4692, 1.0
      %v4773 = vadd.f32 %v4693, 1.0
      %v4774 = vadd.f32 %v4694, 1.0
      %v4775 = vadd.f32 %v4695, 1.0
      %v4776 = vadd.f32 %v4696, 1.0
      %v4777 = vadd.f32 %v4697, 1.0
      %v4778 = vadd.f32 %v4698, 1.0
      %v4779 = vadd.f32 %v4699, 1.0
      %v4780 = vadd.f32 %v4700, 1.0
      %v4781 = vadd.f32 %v4701, 1.0
      %v4782 = vadd.f32 %v4702, 1.0
      %v4783 = vadd.f32 %v4703, 1.0
      %v4784 = vadd.f32 %v4704, 1.0
      %v4785 = vadd.f32 %v4705, 1.0
      %v4786 = vadd.f32 %v4706, 1.0
      %v4787 = vadd.f32 %v4707, 1.0
      %v4788 = vadd.f32 %v4708, 1.0
      %v4789 = vadd.f32 %v4709, 1.0
      %v4790 = vadd.f32 %v4710, 1.0
      %v4791 = vadd.f32 %v4711, 1.0
      %v4792 = vadd.f32 %v4712, 1.0
      %v4793 = vadd.f32 %v4713, 1.0
      %v4794 = vadd.f32 %v4714, 1.0
      %v4795 = vadd.f32 %v4715, 1.0
      %v4796 = vadd.f32 %v4716, 1.0
      %v4797 = vadd.f32 %v4717, 1.0
      %v4798 = vadd.f32 %v4718, 1.0
      %v4799 = vadd.f32 %v4719, 1.0
      %v4800 = vadd.f32 %v4720, 1.0
      %v4801 = vadd.f32 %v4721, 1.0
      %v4802 = vadd.f32 %v4722, 1.0
      %v4803 = vadd.f32 %v4723, 1.0
      %v4804 = vadd.f32 %v4724, 1.0
      %v4805 = vadd.f32 %v4725, 1.0
      %v4806 = vadd.f32 %v4726, 1.0
      %v4807 = vadd.f32 %v4727, 1.0
      %v4808 = vadd.f32 %v4728, 1.0
      %v4809 = vadd.f32 %v4729, 1.0
      %v4810 = vadd.f32 %v4730, 1.0
      %v4811 = vadd.f32 %v4731, 1.0
      %v4812 = vadd.f32 %v4732, 1.0
      %v4813 = vadd.f32 %v4733, 1.0
      %v4814 = vadd.f32 %v4734, 1.0
      %v4815 = vadd.f32 %v4735, 1.0
      %v4816 = vadd.f32 %v4736, 1.0
      %v4817 = vadd.f32 %v4737, 1.0
      %v4818 = vadd.f32 %v4738, 1.0
      %v4819 = vadd.f32 %v4739, 1.0
      %v4820 = vadd.f32 %v4740, 1.0
      %v4821 = vadd.f32 %v4741, 1.0
      %v4822 = vadd.f32 %v4742, 1.0
      %v4823 = vadd.f32 %v4743, 1.0
      %v4824 = vadd.f32 %v4744, 1.0
      %v4825 = vadd.f32 %v4745, 1.0
      %v4826 = vadd.f32 %v4746, 1.0
      %v4827 = vadd.f32 %v4747, 1.0
      %v4828 = vadd.f32 %v4748, 1.0
      %v4829 = vadd.f32 %v4749, 1.0
      %v4830 = vadd.f32 %v4750, 1.0
      %v4831 = vadd.f32 %v4751, 1.0
      %v4832 = vadd.f32 %v4752, 1.0
      %v4833 = vadd.f32 %v4753, 1.0
      %v4834 = vadd.f32 %v4754, 1.0
      %v4835 = vadd.f32 %v4755, 1.0
      %v4836 = vadd.f32 %v4756, 1.0
      %v4837 = vadd.f32 %v4757, 1.0
      %v4838 = vadd.f32 %v4758, 1.0
      %v4839 = vadd.f32 %v4759, 1.0
      %v4840 = vadd.f32 %v4760, 1.0
      %v4841 = vadd.f32 %v4761, 1.0
      %v4842 = vadd.f32 %v4762, 1.0
      %v4843 = vadd.f32 %v4763, 1.0
      %v4844 = vadd.f32 %v4764, 1.0
      %v4845 = vadd.f32 %v4765, 1.0
      %v4846 = vadd.f32 %v4766, 1.0
      %v4847 = vmul.f32 %v3889, %v4767
      %v4848 = vmul.f32 %v3892, %v4768
      %v4849 = vmul.f32 %v3897, %v4769
      %v4850 = vmul.f32 %v3900, %v4770
      %v4851 = vmul.f32 %v3905, %v4771
      %v4852 = vmul.f32 %v3908, %v4772
      %v4853 = vmul.f32 %v3913, %v4773
      %v4854 = vmul.f32 %v3916, %v4774
      %v4855 = vmul.f32 %v3921, %v4775
      %v4856 = vmul.f32 %v3924, %v4776
      %v4857 = vmul.f32 %v3929, %v4777
      %v4858 = vmul.f32 %v3932, %v4778
      %v4859 = vmul.f32 %v3937, %v4779
      %v4860 = vmul.f32 %v3940, %v4780
      %v4861 = vmul.f32 %v3945, %v4781
      %v4862 = vmul.f32 %v3948, %v4782
      %v4863 = vmul.f32 %v3953, %v4783
      %v4864 = vmul.f32 %v3956, %v4784
      %v4865 = vmul.f32 %v3961, %v4785
      %v4866 = vmul.f32 %v3964, %v4786
      %v4867 = vmul.f32 %v3969, %v4787
      %v4868 = vmul.f32 %v3972, %v4788
      %v4869 = vmul.f32 %v3977, %v4789
      %v4870 = vmul.f32 %v3980, %v4790
      %v4871 = vmul.f32 %v3985, %v4791
      %v4872 = vmul.f32 %v3988, %v4792
      %v4873 = vmul.f32 %v3993, %v4793
      %v4874 = vmul.f32 %v3996, %v4794
      %v4875 = vmul.f32 %v4001, %v4795
      %v4876 = vmul.f32 %v4004, %v4796
      %v4877 = vmul.f32 %v4009, %v4797
      %v4878 = vmul.f32 %v4012, %v4798
      %v4879 = vmul.f32 %v4017, %v4799
      %v4880 = vmul.f32 %v4020, %v4800
      %v4881 = vmul.f32 %v4025, %v4801
      %v4882 = vmul.f32 %v4028, %v4802
      %v4883 = vmul.f32 %v4033, %v4803
      %v4884 = vmul.f32 %v4036, %v4804
      %v4885 = vmul.f32 %v4041, %v4805
      %v4886 = vmul.f32 %v4044, %v4806
      %v4887 = vmul.f32 %v4049, %v4807
      %v4888 = vmul.f32 %v4052, %v4808
      %v4889 = vmul.f32 %v4057, %v4809
      %v4890 = vmul.f32 %v4060, %v4810
      %v4891 = vmul.f32 %v4065, %v4811
      %v4892 = vmul.f32 %v4068, %v4812
      %v4893 = vmul.f32 %v4073, %v4813
      %v4894 = vmul.f32 %v4076, %v4814
      %v4895 = vmul.f32 %v4081, %v4815
      %v4896 = vmul.f32 %v4084, %v4816
      %v4897 = vmul.f32 %v4089, %v4817
      %v4898 = vmul.f32 %v4092, %v4818
      %v4899 = vmul.f32 %v4097, %v4819
      %v4900 = vmul.f32 %v4100, %v4820
      %v4901 = vmul.f32 %v4105, %v4821
      %v4902 = vmul.f32 %v4108, %v4822
      %v4903 = vmul.f32 %v4113, %v4823
      %v4904 = vmul.f32 %v4116, %v4824
      %v4905 = vmul.f32 %v4121, %v4825
      %v4906 = vmul.f32 %v4124, %v4826
      %v4907 = vmul.f32 %v4129, %v4827
      %v4908 = vmul.f32 %v4132, %v4828
      %v4909 = vmul.f32 %v4137, %v4829
      %v4910 = vmul.f32 %v4140, %v4830
      %v4911 = vmul.f32 %v4145, %v4831
      %v4912 = vmul.f32 %v4148, %v4832
      %v4913 = vmul.f32 %v4153, %v4833
      %v4914 = vmul.f32 %v4156, %v4834
      %v4915 = vmul.f32 %v4161, %v4835
      %v4916 = vmul.f32 %v4164, %v4836
      %v4917 = vmul.f32 %v4169, %v4837
      %v4918 = vmul.f32 %v4172, %v4838
      %v4919 = vmul.f32 %v4177, %v4839
      %v4920 = vmul.f32 %v4180, %v4840
      %v4921 = vmul.f32 %v4185, %v4841
      %v4922 = vmul.f32 %v4188, %v4842
      %v4923 = vmul.f32 %v4193, %v4843
      %v4924 = vmul.f32 %v4196, %v4844
      %v4925 = vmul.f32 %v4201, %v4845
      %v4926 = vmul.f32 %v4204, %v4846
      %v4927 = vmul.f32 %v4847, 0.7978846
      %v4928 = vmul.f32 %v4848, 0.7978846
      %v4929 = vmul.f32 %v4849, 0.7978846
      %v4930 = vmul.f32 %v4850, 0.7978846
      %v4931 = vmul.f32 %v4851, 0.7978846
      %v4932 = vmul.f32 %v4852, 0.7978846
      %v4933 = vmul.f32 %v4853, 0.7978846
      %v4934 = vmul.f32 %v4854, 0.7978846
      %v4935 = vmul.f32 %v4855, 0.7978846
      %v4936 = vmul.f32 %v4856, 0.7978846
      %v4937 = vmul.f32 %v4857, 0.7978846
      %v4938 = vmul.f32 %v4858, 0.7978846
      %v4939 = vmul.f32 %v4859, 0.7978846
      %v4940 = vmul.f32 %v4860, 0.7978846
      %v4941 = vmul.f32 %v4861, 0.7978846
      %v4942 = vmul.f32 %v4862, 0.7978846
      %v4943 = vmul.f32 %v4863, 0.7978846
      %v4944 = vmul.f32 %v4864, 0.7978846
      %v4945 = vmul.f32 %v4865, 0.7978846
      %v4946 = vmul.f32 %v4866, 0.7978846
      %v4947 = vmul.f32 %v4867, 0.7978846
      %v4948 = vmul.f32 %v4868, 0.7978846
      %v4949 = vmul.f32 %v4869, 0.7978846
      %v4950 = vmul.f32 %v4870, 0.7978846
      %v4951 = vmul.f32 %v4871, 0.7978846
      %v4952 = vmul.f32 %v4872, 0.7978846
      %v4953 = vmul.f32 %v4873, 0.7978846
      %v4954 = vmul.f32 %v4874, 0.7978846
      %v4955 = vmul.f32 %v4875, 0.7978846
      %v4956 = vmul.f32 %v4876, 0.7978846
      %v4957 = vmul.f32 %v4877, 0.7978846
      %v4958 = vmul.f32 %v4878, 0.7978846
      %v4959 = vmul.f32 %v4879, 0.7978846
      %v4960 = vmul.f32 %v4880, 0.7978846
      %v4961 = vmul.f32 %v4881, 0.7978846
      %v4962 = vmul.f32 %v4882, 0.7978846
      %v4963 = vmul.f32 %v4883, 0.7978846
      %v4964 = vmul.f32 %v4884, 0.7978846
      %v4965 = vmul.f32 %v4885, 0.7978846
      %v4966 = vmul.f32 %v4886, 0.7978846
      %v4967 = vmul.f32 %v4887, 0.7978846
      %v4968 = vmul.f32 %v4888, 0.7978846
      %v4969 = vmul.f32 %v4889, 0.7978846
      %v4970 = vmul.f32 %v4890, 0.7978846
      %v4971 = vmul.f32 %v4891, 0.7978846
      %v4972 = vmul.f32 %v4892, 0.7978846
      %v4973 = vmul.f32 %v4893, 0.7978846
      %v4974 = vmul.f32 %v4894, 0.7978846
      %v4975 = vmul.f32 %v4895, 0.7978846
      %v4976 = vmul.f32 %v4896, 0.7978846
      %v4977 = vmul.f32 %v4897, 0.7978846
      %v4978 = vmul.f32 %v4898, 0.7978846
      %v4979 = vmul.f32 %v4899, 0.7978846
      %v4980 = vmul.f32 %v4900, 0.7978846
      %v4981 = vmul.f32 %v4901, 0.7978846
      %v4982 = vmul.f32 %v4902, 0.7978846
      %v4983 = vmul.f32 %v4903, 0.7978846
      %v4984 = vmul.f32 %v4904, 0.7978846
      %v4985 = vmul.f32 %v4905, 0.7978846
      %v4986 = vmul.f32 %v4906, 0.7978846
      %v4987 = vmul.f32 %v4907, 0.7978846
      %v4988 = vmul.f32 %v4908, 0.7978846
      %v4989 = vmul.f32 %v4909, 0.7978846
      %v4990 = vmul.f32 %v4910, 0.7978846
      %v4991 = vmul.f32 %v4911, 0.7978846
      %v4992 = vmul.f32 %v4912, 0.7978846
      %v4993 = vmul.f32 %v4913, 0.7978846
      %v4994 = vmul.f32 %v4914, 0.7978846
      %v4995 = vmul.f32 %v4915, 0.7978846
      %v4996 = vmul.f32 %v4916, 0.7978846
      %v4997 = vmul.f32 %v4917, 0.7978846
      %v4998 = vmul.f32 %v4918, 0.7978846
      %v4999 = vmul.f32 %v4919, 0.7978846
      %v5000 = vmul.f32 %v4920, 0.7978846
      %v5001 = vmul.f32 %v4921, 0.7978846
      %v5002 = vmul.f32 %v4922, 0.7978846
      %v5003 = vmul.f32 %v4923, 0.7978846
      %v5004 = vmul.f32 %v4924, 0.7978846
      %v5005 = vmul.f32 %v4925, 0.7978846
      %v5006 = vmul.f32 %v4926, 0.7978846
      %v5007 = vtanh.pop %v4927
      %v5008 = vtanh.pop %v4928
      %v5009 = vtanh.pop %v4929
      %v5010 = vtanh.pop %v4930
      %v5011 = vtanh.pop %v4931
      %v5012 = vtanh.pop %v4932
      %v5013 = vtanh.pop %v4933
      %v5014 = vtanh.pop %v4934
      %v5015 = vtanh.pop %v4935
      %v5016 = vtanh.pop %v4936
      %v5017 = vtanh.pop %v4937
      %v5018 = vtanh.pop %v4938
      %v5019 = vtanh.pop %v4939
      %v5020 = vtanh.pop %v4940
      %v5021 = vtanh.pop %v4941
      %v5022 = vtanh.pop %v4942
      %v5023 = vtanh.pop %v4943
      %v5024 = vtanh.pop %v4944
      %v5025 = vtanh.pop %v4945
      %v5026 = vtanh.pop %v4946
      %v5027 = vtanh.pop %v4947
      %v5028 = vtanh.pop %v4948
      %v5029 = vtanh.pop %v4949
      %v5030 = vtanh.pop %v4950
      %v5031 = vtanh.pop %v4951
      %v5032 = vtanh.pop %v4952
      %v5033 = vtanh.pop %v4953
      %v5034 = vtanh.pop %v4954
      %v5035 = vtanh.pop %v4955
      %v5036 = vtanh.pop %v4956
      %v5037 = vtanh.pop %v4957
      %v5038 = vtanh.pop %v4958
      %v5039 = vtanh.pop %v4959
      %v5040 = vtanh.pop %v4960
      %v5041 = vtanh.pop %v4961
      %v5042 = vtanh.pop %v4962
      %v5043 = vtanh.pop %v4963
      %v5044 = vtanh.pop %v4964
      %v5045 = vtanh.pop %v4965
      %v5046 = vtanh.pop %v4966
      %v5047 = vtanh.pop %v4967
      %v5048 = vtanh.pop %v4968
      %v5049 = vtanh.pop %v4969
      %v5050 = vtanh.pop %v4970
      %v5051 = vtanh.pop %v4971
      %v5052 = vtanh.pop %v4972
      %v5053 = vtanh.pop %v4973
      %v5054 = vtanh.pop %v4974
      %v5055 = vtanh.pop %v4975
      %v5056 = vtanh.pop %v4976
      %v5057 = vtanh.pop %v4977
      %v5058 = vtanh.pop %v4978
      %v5059 = vtanh.pop %v4979
      %v5060 = vtanh.pop %v4980
      %v5061 = vtanh.pop %v4981
      %v5062 = vtanh.pop %v4982
      %v5063 = vtanh.pop %v4983
      %v5064 = vtanh.pop %v4984
      %v5065 = vtanh.pop %v4985
      %v5066 = vtanh.pop %v4986
      %v5067 = vtanh.pop %v4987
      %v5068 = vtanh.pop %v4988
      %v5069 = vtanh.pop %v4989
      %v5070 = vtanh.pop %v4990
      %v5071 = vtanh.pop %v4991
      %v5072 = vtanh.pop %v4992
      %v5073 = vtanh.pop %v4993
      %v5074 = vtanh.pop %v4994
      %v5075 = vtanh.pop %v4995
      %v5076 = vtanh.pop %v4996
      %v5077 = vtanh.pop %v4997
      %v5078 = vtanh.pop %v4998
      %v5079 = vtanh.pop %v4999
      %v5080 = vtanh.pop %v5000
      %v5081 = vtanh.pop %v5001
      %v5082 = vtanh.pop %v5002
      %v5083 = vtanh.pop %v5003
      %v5084 = vtanh.pop %v5004
      %v5085 = vtanh.pop %v5005
      %v5086 = vtanh.pop %v5006
      %v5087 = vadd.f32 %v5007, 1.0
      %v5088 = vadd.f32 %v5008, 1.0
      %v5089 = vadd.f32 %v5009, 1.0
      %v5090 = vadd.f32 %v5010, 1.0
      %v5091 = vadd.f32 %v5011, 1.0
      %v5092 = vadd.f32 %v5012, 1.0
      %v5093 = vadd.f32 %v5013, 1.0
      %v5094 = vadd.f32 %v5014, 1.0
      %v5095 = vadd.f32 %v5015, 1.0
      %v5096 = vadd.f32 %v5016, 1.0
      %v5097 = vadd.f32 %v5017, 1.0
      %v5098 = vadd.f32 %v5018, 1.0
      %v5099 = vadd.f32 %v5019, 1.0
      %v5100 = vadd.f32 %v5020, 1.0
      %v5101 = vadd.f32 %v5021, 1.0
      %v5102 = vadd.f32 %v5022, 1.0
      %v5103 = vadd.f32 %v5023, 1.0
      %v5104 = vadd.f32 %v5024, 1.0
      %v5105 = vadd.f32 %v5025, 1.0
      %v5106 = vadd.f32 %v5026, 1.0
      %v5107 = vadd.f32 %v5027, 1.0
      %v5108 = vadd.f32 %v5028, 1.0
      %v5109 = vadd.f32 %v5029, 1.0
      %v5110 = vadd.f32 %v5030, 1.0
      %v5111 = vadd.f32 %v5031, 1.0
      %v5112 = vadd.f32 %v5032, 1.0
      %v5113 = vadd.f32 %v5033, 1.0
      %v5114 = vadd.f32 %v5034, 1.0
      %v5115 = vadd.f32 %v5035, 1.0
      %v5116 = vadd.f32 %v5036, 1.0
      %v5117 = vadd.f32 %v5037, 1.0
      %v5118 = vadd.f32 %v5038, 1.0
      %v5119 = vadd.f32 %v5039, 1.0
      %v5120 = vadd.f32 %v5040, 1.0
      %v5121 = vadd.f32 %v5041, 1.0
      %v5122 = vadd.f32 %v5042, 1.0
      %v5123 = vadd.f32 %v5043, 1.0
      %v5124 = vadd.f32 %v5044, 1.0
      %v5125 = vadd.f32 %v5045, 1.0
      %v5126 = vadd.f32 %v5046, 1.0
      %v5127 = vadd.f32 %v5047, 1.0
      %v5128 = vadd.f32 %v5048, 1.0
      %v5129 = vadd.f32 %v5049, 1.0
      %v5130 = vadd.f32 %v5050, 1.0
      %v5131 = vadd.f32 %v5051, 1.0
      %v5132 = vadd.f32 %v5052, 1.0
      %v5133 = vadd.f32 %v5053, 1.0
      %v5134 = vadd.f32 %v5054, 1.0
      %v5135 = vadd.f32 %v5055, 1.0
      %v5136 = vadd.f32 %v5056, 1.0
      %v5137 = vadd.f32 %v5057, 1.0
      %v5138 = vadd.f32 %v5058, 1.0
      %v5139 = vadd.f32 %v5059, 1.0
      %v5140 = vadd.f32 %v5060, 1.0
      %v5141 = vadd.f32 %v5061, 1.0
      %v5142 = vadd.f32 %v5062, 1.0
      %v5143 = vadd.f32 %v5063, 1.0
      %v5144 = vadd.f32 %v5064, 1.0
      %v5145 = vadd.f32 %v5065, 1.0
      %v5146 = vadd.f32 %v5066, 1.0
      %v5147 = vadd.f32 %v5067, 1.0
      %v5148 = vadd.f32 %v5068, 1.0
      %v5149 = vadd.f32 %v5069, 1.0
      %v5150 = vadd.f32 %v5070, 1.0
      %v5151 = vadd.f32 %v5071, 1.0
      %v5152 = vadd.f32 %v5072, 1.0
      %v5153 = vadd.f32 %v5073, 1.0
      %v5154 = vadd.f32 %v5074, 1.0
      %v5155 = vadd.f32 %v5075, 1.0
      %v5156 = vadd.f32 %v5076, 1.0
      %v5157 = vadd.f32 %v5077, 1.0
      %v5158 = vadd.f32 %v5078, 1.0
      %v5159 = vadd.f32 %v5079, 1.0
      %v5160 = vadd.f32 %v5080, 1.0
      %v5161 = vadd.f32 %v5081, 1.0
      %v5162 = vadd.f32 %v5082, 1.0
      %v5163 = vadd.f32 %v5083, 1.0
      %v5164 = vadd.f32 %v5084, 1.0
      %v5165 = vadd.f32 %v5085, 1.0
      %v5166 = vadd.f32 %v5086, 1.0
      %v5167 = vmul.f32 %v5087, %v3889
      %v5168 = vmul.f32 %v5088, %v3892
      %v5169 = vmul.f32 %v5089, %v3897
      %v5170 = vmul.f32 %v5090, %v3900
      %v5171 = vmul.f32 %v5091, %v3905
      %v5172 = vmul.f32 %v5092, %v3908
      %v5173 = vmul.f32 %v5093, %v3913
      %v5174 = vmul.f32 %v5094, %v3916
      %v5175 = vmul.f32 %v5095, %v3921
      %v5176 = vmul.f32 %v5096, %v3924
      %v5177 = vmul.f32 %v5097, %v3929
      %v5178 = vmul.f32 %v5098, %v3932
      %v5179 = vmul.f32 %v5099, %v3937
      %v5180 = vmul.f32 %v5100, %v3940
      %v5181 = vmul.f32 %v5101, %v3945
      %v5182 = vmul.f32 %v5102, %v3948
      %v5183 = vmul.f32 %v5103, %v3953
      %v5184 = vmul.f32 %v5104, %v3956
      %v5185 = vmul.f32 %v5105, %v3961
      %v5186 = vmul.f32 %v5106, %v3964
      %v5187 = vmul.f32 %v5107, %v3969
      %v5188 = vmul.f32 %v5108, %v3972
      %v5189 = vmul.f32 %v5109, %v3977
      %v5190 = vmul.f32 %v5110, %v3980
      %v5191 = vmul.f32 %v5111, %v3985
      %v5192 = vmul.f32 %v5112, %v3988
      %v5193 = vmul.f32 %v5113, %v3993
      %v5194 = vmul.f32 %v5114, %v3996
      %v5195 = vmul.f32 %v5115, %v4001
      %v5196 = vmul.f32 %v5116, %v4004
      %v5197 = vmul.f32 %v5117, %v4009
      %v5198 = vmul.f32 %v5118, %v4012
      %v5199 = vmul.f32 %v5119, %v4017
      %v5200 = vmul.f32 %v5120, %v4020
      %v5201 = vmul.f32 %v5121, %v4025
      %v5202 = vmul.f32 %v5122, %v4028
      %v5203 = vmul.f32 %v5123, %v4033
      %v5204 = vmul.f32 %v5124, %v4036
      %v5205 = vmul.f32 %v5125, %v4041
      %v5206 = vmul.f32 %v5126, %v4044
      %v5207 = vmul.f32 %v5127, %v4049
      %v5208 = vmul.f32 %v5128, %v4052
      %v5209 = vmul.f32 %v5129, %v4057
      %v5210 = vmul.f32 %v5130, %v4060
      %v5211 = vmul.f32 %v5131, %v4065
      %v5212 = vmul.f32 %v5132, %v4068
      %v5213 = vmul.f32 %v5133, %v4073
      %v5214 = vmul.f32 %v5134, %v4076
      %v5215 = vmul.f32 %v5135, %v4081
      %v5216 = vmul.f32 %v5136, %v4084
      %v5217 = vmul.f32 %v5137, %v4089
      %v5218 = vmul.f32 %v5138, %v4092
      %v5219 = vmul.f32 %v5139, %v4097
      %v5220 = vmul.f32 %v5140, %v4100
      %v5221 = vmul.f32 %v5141, %v4105
      %v5222 = vmul.f32 %v5142, %v4108
      %v5223 = vmul.f32 %v5143, %v4113
      %v5224 = vmul.f32 %v5144, %v4116
      %v5225 = vmul.f32 %v5145, %v4121
      %v5226 = vmul.f32 %v5146, %v4124
      %v5227 = vmul.f32 %v5147, %v4129
      %v5228 = vmul.f32 %v5148, %v4132
      %v5229 = vmul.f32 %v5149, %v4137
      %v5230 = vmul.f32 %v5150, %v4140
      %v5231 = vmul.f32 %v5151, %v4145
      %v5232 = vmul.f32 %v5152, %v4148
      %v5233 = vmul.f32 %v5153, %v4153
      %v5234 = vmul.f32 %v5154, %v4156
      %v5235 = vmul.f32 %v5155, %v4161
      %v5236 = vmul.f32 %v5156, %v4164
      %v5237 = vmul.f32 %v5157, %v4169
      %v5238 = vmul.f32 %v5158, %v4172
      %v5239 = vmul.f32 %v5159, %v4177
      %v5240 = vmul.f32 %v5160, %v4180
      %v5241 = vmul.f32 %v5161, %v4185
      %v5242 = vmul.f32 %v5162, %v4188
      %v5243 = vmul.f32 %v5163, %v4193
      %v5244 = vmul.f32 %v5164, %v4196
      %v5245 = vmul.f32 %v5165, %v4201
      %v5246 = vmul.f32 %v5166, %v4204
      %5247 = vst [vmem:[%s201] sm:$0xff] %v5167
      %5248 = vst [vmem:[%s201 + $0x8] sm:$0xff] %v5168
      %5249 = vst [vmem:[%s201 + $0x10] sm:$0xff] %v5169
      %5250 = vst [vmem:[%s201 + $0x18] sm:$0xff] %v5170
      %5251 = vst [vmem:[%s201 + $0x20] sm:$0xff] %v5171
      %5252 = vst [vmem:[%s201 + $0x28] sm:$0xff] %v5172
      %5253 = vst [vmem:[%s201 + $0x30] sm:$0xff] %v5173
      %5254 = vst [vmem:[%s201 + $0x38] sm:$0xff] %v5174
      %5255 = vst [vmem:[%s201 + $0x40] sm:$0xff] %v5175
      %5256 = vst [vmem:[%s201 + $0x48] sm:$0xff] %v5176
      %5257 = vst [vmem:[%s201 + $0x50] sm:$0xff] %v5177
      %5258 = vst [vmem:[%s201 + $0x58] sm:$0xff] %v5178
      %5259 = vst [vmem:[%s201 + $0x60] sm:$0xff] %v5179
      %5260 = vst [vmem:[%s201 + $0x68] sm:$0xff] %v5180
      %5261 = vst [vmem:[%s201 + $0x70] sm:$0xff] %v5181
      %5262 = vst [vmem:[%s201 + $0x78] sm:$0xff] %v5182
      %5263 = vst [vmem:[%s201 + $0x80] sm:$0xff] %v5183
      %5264 = vst [vmem:[%s201 + $0x88] sm:$0xff] %v5184
      %5265 = vst [vmem:[%s201 + $0x90] sm:$0xff] %v5185
      %5266 = vst [vmem:[%s201 + $0x98] sm:$0xff] %v5186
      %5267 = vst [vmem:[%s201 + $0xa0] sm:$0xff] %v5187
      %5268 = vst [vmem:[%s201 + $0xa8] sm:$0xff] %v5188
      %5269 = vst [vmem:[%s201 + $0xb0] sm:$0xff] %v5189
      %5270 = vst [vmem:[%s201 + $0xb8] sm:$0xff] %v5190
      %5271 = vst [vmem:[%s201 + $0xc0] sm:$0xff] %v5191
      %5272 = vst [vmem:[%s201 + $0xc8] sm:$0xff] %v5192
      %5273 = vst [vmem:[%s201 + $0xd0] sm:$0xff] %v5193
      %5274 = vst [vmem:[%s201 + $0xd8] sm:$0xff] %v5194
      %5275 = vst [vmem:[%s201 + $0xe0] sm:$0xff] %v5195
      %5276 = vst [vmem:[%s201 + $0xe8] sm:$0xff] %v5196
      %5277 = vst [vmem:[%s201 + $0xf0] sm:$0xff] %v5197
      %5278 = vst [vmem:[%s201 + $0xf8] sm:$0xff] %v5198
      %5279 = vst [vmem:[%s201 + $0x100] sm:$0xff] %v5199
      %5280 = vst [vmem:[%s201 + $0x108] sm:$0xff] %v5200
      %5281 = vst [vmem:[%s201 + $0x110] sm:$0xff] %v5201
      %5282 = vst [vmem:[%s201 + $0x118] sm:$0xff] %v5202
      %5283 = vst [vmem:[%s201 + $0x120] sm:$0xff] %v5203
      %5284 = vst [vmem:[%s201 + $0x128] sm:$0xff] %v5204
      %5285 = vst [vmem:[%s201 + $0x130] sm:$0xff] %v5205
      %5286 = vst [vmem:[%s201 + $0x138] sm:$0xff] %v5206
      %5287 = vst [vmem:[%s201 + $0x140] sm:$0xff] %v5207
      %5288 = vst [vmem:[%s201 + $0x148] sm:$0xff] %v5208
      %5289 = vst [vmem:[%s201 + $0x150] sm:$0xff] %v5209
      %5290 = vst [vmem:[%s201 + $0x158] sm:$0xff] %v5210
      %5291 = vst [vmem:[%s201 + $0x160] sm:$0xff] %v5211
      %5292 = vst [vmem:[%s201 + $0x168] sm:$0xff] %v5212
      %5293 = vst [vmem:[%s201 + $0x170] sm:$0xff] %v5213
      %5294 = vst [vmem:[%s201 + $0x178] sm:$0xff] %v5214
      %5295 = vst [vmem:[%s201 + $0x180] sm:$0xff] %v5215
      %5296 = vst [vmem:[%s201 + $0x188] sm:$0xff] %v5216
      %5297 = vst [vmem:[%s201 + $0x190] sm:$0xff] %v5217
      %5298 = vst [vmem:[%s201 + $0x198] sm:$0xff] %v5218
      %5299 = vst [vmem:[%s201 + $0x1a0] sm:$0xff] %v5219
      %5300 = vst [vmem:[%s201 + $0x1a8] sm:$0xff] %v5220
      %5301 = vst [vmem:[%s201 + $0x1b0] sm:$0xff] %v5221
      %5302 = vst [vmem:[%s201 + $0x1b8] sm:$0xff] %v5222
      %5303 = vst [vmem:[%s201 + $0x1c0] sm:$0xff] %v5223
      %5304 = vst [vmem:[%s201 + $0x1c8] sm:$0xff] %v5224
      %5305 = vst [vmem:[%s201 + $0x1d0] sm:$0xff] %v5225
      %5306 = vst [vmem:[%s201 + $0x1d8] sm:$0xff] %v5226
      %5307 = vst [vmem:[%s201 + $0x1e0] sm:$0xff] %v5227
      %5308 = vst [vmem:[%s201 + $0x1e8] sm:$0xff] %v5228
      %5309 = vst [vmem:[%s201 + $0x1f0] sm:$0xff] %v5229
      %5310 = vst [vmem:[%s201 + $0x1f8] sm:$0xff] %v5230
      %5311 = vst [vmem:[%s201 + $0x200] sm:$0xff] %v5231
      %5312 = vst [vmem:[%s201 + $0x208] sm:$0xff] %v5232
      %5313 = vst [vmem:[%s201 + $0x210] sm:$0xff] %v5233
      %5314 = vst [vmem:[%s201 + $0x218] sm:$0xff] %v5234
      %5315 = vst [vmem:[%s201 + $0x220] sm:$0xff] %v5235
      %5316 = vst [vmem:[%s201 + $0x228] sm:$0xff] %v5236
      %5317 = vst [vmem:[%s201 + $0x230] sm:$0xff] %v5237
      %5318 = vst [vmem:[%s201 + $0x238] sm:$0xff] %v5238
      %5319 = vst [vmem:[%s201 + $0x240] sm:$0xff] %v5239
      %5320 = vst [vmem:[%s201 + $0x248] sm:$0xff] %v5240
      %5321 = vst [vmem:[%s201 + $0x250] sm:$0xff] %v5241
      %5322 = vst [vmem:[%s201 + $0x258] sm:$0xff] %v5242
      %5323 = vst [vmem:[%s201 + $0x260] sm:$0xff] %v5243
      %5324 = vst [vmem:[%s201 + $0x268] sm:$0xff] %v5244
      %5325 = vst [vmem:[%s201 + $0x270] sm:$0xff] %v5245
      %5326 = vst [vmem:[%s201 + $0x278] sm:$0xff] %v5246
      %p5327 = scmp.lt.s32.totalorder %s18, 1
      %s5328 = scalar_select %p5327, %s18, 1
      %p5329 = scmp.lt.s32.totalorder %s19, 0
      %s5330 = scalar_select %p5329, %s19, 0
      %s5331 = smul.addr %s5328, 80
      %s5332 = sadd.s32 %s5330, %s5331
      %s5333 = smul.addr %s5332, 8
      %s5334 = scalar_lea.vmem %s3, %s5333
      // Predicated region
      $region33: #{model_forward.1} parent=31 // pred_check
        %p5335 = pneg %p116
      $region34: #{model_forward.1} parent=31 // pred_check_branch
        %5337 = sbr.rel (%p5335) target = $region36
      $region35: #{model_forward.1} parent=31 // pred_region
        _
      $region36: #{model_forward.1} parent=31 // pred_fallthru
        _
    $region32: #{model_forward.1} parent=5 // pred_fallthru
      _
    %p5338 = scmp.le.s32.totalorder 2, %s9
    // Predicated region
    $region37: #{model_forward.1} parent=5 // pred_check
      %p5339 = pneg %p5338
    $region38: #{model_forward.1} parent=5 // pred_check_branch
      %5341 = sbr.rel (%p5339) target = $region40
    $region39: #{model_forward.1} parent=5 // pred_region
      %s5342 = ssub.s32 %s9, 2
      // Predicated region
      $region41: #{model_forward.1} parent=39 // pred_check
        %p5343 = pneg %p122
      $region42: #{model_forward.1} parent=39 // pred_check_branch
        %5345 = sbr.rel (%p5343) target = $region44
      $region43: #{model_forward.1} parent=39 // pred_region
        %p5346 = scmp.lt.s32.totalorder %s20, 1
        %s5347 = scalar_select %p5346, %s20, 1
        %p5348 = scmp.lt.s32.totalorder %s21, 0
        %s5349 = scalar_select %p5348, %s21, 0
        %s5350 = smul.addr %s5347, 80
        %s5351 = sadd.s32 %s5349, %s5350
        %s5352 = smul.addr %s5351, 8
        %s5353 = scalar_lea.vmem %s3, %s5352
      $region44: #{model_forward.1} parent=39 // pred_fallthru
        _
    $region40: #{model_forward.1} parent=5 // pred_fallthru
      _
  $region6: #{model_forward.1} parent=0 // loop_footer
    %s13 = sadd.s32 1, %s9
  $region7: #{model_forward.1} parent=0 // loop_footer_branch
    %8 = sbr.rel target = $region3
  $region8: #{model_forward.1} parent=0 // loop_exit
    _

</llo_original>
